<compile_context>
chip_gen: v6e
topology: v6e:2x2x1
jax: 0.10.0
libtpu: 0.0.40
codegen_flags: <defaults>
</compile_context>

<pallas_src>
import jax
import jax.numpy as jnp
from jax.experimental import pallas as pl
from jax.experimental.pallas import tpu as pltpu

# ----------------------------------------------------------------------------
# Model hyper-parameters (small, deterministic)
# ----------------------------------------------------------------------------
N_MELS = 32          # preprocess_config['preprocessing']['mel']['n_mel_channels']
CH = 64              # content-encoder hidden channels
Z_DIM = 32           # content (VQ) embedding dim
K_CODES = 64         # VQ codebook size
COMMIT_COST = 0.25

NUM_SPK = 4
SPK_DIM = 32         # spk_embed_dim
NUM_STYLES = 4
STYLE_DIM = 32       # style_embed_dim
STYLE_H = 64

DEC_IN = Z_DIM + SPK_DIM + STYLE_DIM   # 96
DEC_H = 128          # lane-dense decoder hidden width
C_OUT = 64           # model_config['decoder']['c_out']

PD = 64              # postnet hidden channels
PK = 5               # postnet / decoder conv kernel size
CK = 4               # content-encoder strided-conv kernel size (stride 2)

CONTENT_SHIFTS = (-1, 0, 1, 2)       # stride-2, k=4, pad=1 conv taps (full rate)
CONV_SHIFTS = (-2, -1, 0, 1, 2)      # k=5, pad=2 "same" conv taps


# ----------------------------------------------------------------------------
# In-kernel helpers (traced inside the Pallas kernel body)
# ----------------------------------------------------------------------------
def _l2n(x, eps=1e-12):
    """torch.nn.functional.normalize(p=2, dim=-1) on a (1, D) row."""
    n = jnp.sqrt(jnp.sum(x * x, axis=-1, keepdims=True))
    return x / jnp.maximum(n, eps)


def _conv_taps(x_bf, w_ref, b_row, shifts, masks):
    """Zero-padded 1-D conv on a (R, Cin) tile as ONE wide matmul.

    x_bf:  (R, Cin) bf16 activation (cast once by the caller).
    w_ref: (Cin, k*Cout) bf16 weight ref, tap-major along the output lanes.
    b_row: (1, Cout) f32 bias.
    The conv output is assembled from the per-tap output blocks with k rolls
    plus masked adds; `masks[s]` is a hoisted (R, 1) f32 validity mask.
    """
    k = len(shifts)
    rows = x_bf.shape[0]
    cout = w_ref.shape[1] // k
    y = jnp.dot(x_bf, w_ref[...], preferred_element_type=jnp.float32)  # (R, k*Cout)
    acc = jnp.zeros((rows, cout), jnp.float32)
    for j, s in enumerate(shifts):
        blk = y[:, j * cout:(j + 1) * cout]
        if s == 0:
            acc = acc + blk
        else:
            acc = acc + masks[s] * pltpu.roll(blk, shift=(-s) % rows, axis=0)
    return acc + b_row


# ----------------------------------------------------------------------------
# Fused kernel: content encoder + VQ + style encoder + VAE sample + decoder +
#               mel_linear + postnet + residual  (one batch element per step)
# ----------------------------------------------------------------------------
def _speech_decompose_kernel(
        lens_ref,                                        # scalar-prefetch SMEM (B,)
        mel_ref, spk_ref, eps_ref,
        cw_ref, cb_ref, cw1_ref, cb1_ref, cw2_ref, cb2_ref, e_ref, e2_ref,
        sw1_ref, sb1_ref, sw2_ref, sb2_ref,
        dw1c_ref, dw1s_ref, db1_ref, dw2_ref, db2_ref,
        mw_ref, mb_ref,
        pw0_ref, pb0_ref, pw1_ref, pb1_ref, pw2_ref, pb2_ref,
        pw3_ref, pb3_ref, pw4_ref, pb4_ref,
        out_ref, post_ref, stats_ref, vqerr_ref):
    b = pl.program_id(0)
    T = mel_ref.shape[1]
    Td = out_ref.shape[1]

    # ---- hoisted iotas & per-shift validity masks (built once, reused) ------
    tT = jax.lax.broadcasted_iota(jnp.int32, (T, 1), 0)
    tD = jax.lax.broadcasted_iota(jnp.int32, (Td, 1), 0)
    mT = {s: jnp.logical_and(tT + s >= 0, tT + s < T).astype(jnp.float32)
          for s in CONTENT_SHIFTS if s != 0}
    mD = {s: jnp.logical_and(tD + s >= 0, tD + s < Td).astype(jnp.float32)
          for s in CONV_SHIFTS if s != 0}

    # =========================== content encoder ============================
    mel = mel_ref[0]                                   # (T, N_MELS) f32
    mel_bf = mel.astype(jnp.bfloat16)

    # stride-2 / k=4 / pad=1 conv == full-rate conv then exact even-row pick
    # via a one-hot matmul (avoids strided loads; selection of bf16 values is
    # bit-exact under f32 accumulation).
    h_full = jnp.maximum(
        _conv_taps(mel_bf, cw_ref, cb_ref[...], CONTENT_SHIFTS, mT), 0.0)
    rI = jax.lax.broadcasted_iota(jnp.int32, (Td, T), 0)
    cI = jax.lax.broadcasted_iota(jnp.int32, (Td, T), 1)
    even_sel = (cI == 2 * rI).astype(jnp.bfloat16)     # (Td, T) one-hot
    h = jnp.dot(even_sel, h_full.astype(jnp.bfloat16),
                preferred_element_type=jnp.float32)    # (Td, CH)
    h = jnp.maximum(jnp.dot(h.astype(jnp.bfloat16), cw1_ref[...],
                            preferred_element_type=jnp.float32) + cb1_ref[...], 0.0)
    z_e = jnp.dot(h.astype(jnp.bfloat16), cw2_ref[...],
                  preferred_element_type=jnp.float32) + cb2_ref[...]    # (Td, Z_DIM)

    # ---- VQ nearest-code lookup (f32, torch-style first-argmin tie-break) ----
    e = e_ref[...]                                     # (K, Z_DIM) f32 codebook
    ze = jax.lax.dot_general(z_e, e, (((1,), (1,)), ((), ())),
                             preferred_element_type=jnp.float32)        # (Td, K)
    z2 = jnp.sum(z_e * z_e, axis=-1, keepdims=True)
    d = z2 - 2.0 * ze + e2_ref[...]
    kI = jax.lax.broadcasted_iota(jnp.int32, d.shape, 1)
    dmin = jnp.min(d, axis=-1, keepdims=True)
    idx = jnp.min(jnp.where(d == dmin, kI, K_CODES), axis=-1, keepdims=True)
    onehot = (kI == idx).astype(jnp.float32)
    zq = jnp.dot(onehot, e, preferred_element_type=jnp.float32)         # (Td, Z_DIM)
    # TODO(synk): forward value only; no straight-through estimator for grads.
    vqerr_ref[0] = jnp.sum((zq - z_e) ** 2, keepdims=True)

    # ============================ style encoder =============================
    # frame MLP + mel_lens-masked mean pool + stats head
    L = lens_ref[b]
    hb = jnp.maximum(jnp.dot(mel_bf, sw1_ref[...],
                             preferred_element_type=jnp.float32) + sb1_ref[...], 0.0)
    lmask = (tT < L).astype(jnp.float32)                                # (T, 1)
    denom = jnp.maximum(L.astype(jnp.float32), 1.0)
    pooled = jnp.sum(hb * lmask, axis=0, keepdims=True) / denom         # (1, STYLE_H)
    stats = jnp.dot(pooled.astype(jnp.bfloat16), sw2_ref[...],
                    preferred_element_type=jnp.float32) + sb2_ref[...]  # (1, 2*SD)
    stats_ref[0] = stats

    mu = stats[:, :STYLE_DIM]
    log_sigma = stats[:, STYLE_DIM:]
    style = _l2n(mu + jnp.exp(0.5 * log_sigma) * eps_ref[0])            # (1, SD)
    spk = _l2n(spk_ref[0])                                              # (1, SPK_DIM)

    # ====================== decoder layer 1 (k=5 conv) ======================
    # content block: one (Td,32)x(32,5*128) dot; spk/style: one (1,64)x(64,640)
    # dot giving all 5 per-tap rank-1 rows, added with hoisted masks.
    zq_bf = zq.astype(jnp.bfloat16)
    y1 = jnp.dot(zq_bf, dw1c_ref[...], preferred_element_type=jnp.float32)
    rows1 = (jnp.dot(spk.astype(jnp.bfloat16), dw1s_ref[:SPK_DIM, :],
                     preferred_element_type=jnp.float32) +
             jnp.dot(style.astype(jnp.bfloat16), dw1s_ref[SPK_DIM:, :],
                     preferred_element_type=jnp.float32))               # (1, 5*DEC_H)
    h1 = jnp.zeros((Td, DEC_H), jnp.float32)
    for j, s in enumerate(CONV_SHIFTS):
        cblk = y1[:, j * DEC_H:(j + 1) * DEC_H]
        rblk = rows1[:, j * DEC_H:(j + 1) * DEC_H]
        if s == 0:
            h1 = h1 + cblk + rblk
        else:
            h1 = h1 + mD[s] * (pltpu.roll(cblk, shift=(-s) % Td, axis=0) + rblk)
    h1 = jnp.maximum(h1 + db1_ref[...], 0.0)                            # (Td, 128)

    # ==================== decoder layer 2 + mel_linear ======================
    dec = _conv_taps(h1.astype(jnp.bfloat16), dw2_ref, db2_ref[...],
                     CONV_SHIFTS, mD)                                   # (Td, C_OUT)
    mel_out = jnp.dot(dec.astype(jnp.bfloat16), mw_ref[...],
                      preferred_element_type=jnp.float32) + mb_ref[...]  # (Td, N_MELS)
    out_ref[0] = mel_out

    # ======================= postnet (BN folded host-side) ==================
    # TODO(synk): dropout is identity in eval mode.
    pw = (pw0_ref, pw1_ref, pw2_ref, pw3_ref, pw4_ref)
    pb = (pb0_ref, pb1_ref, pb2_ref, pb3_ref, pb4_ref)
    x = mel_out
    for li in range(5):
        x = _conv_taps(x.astype(jnp.bfloat16), pw[li], pb[li][...],
                       CONV_SHIFTS, mD)
        if li < 4:
            x = jnp.tanh(x)
    post_ref[0] = x + mel_out


# ----------------------------------------------------------------------------
# Host-side weight preparation
# ----------------------------------------------------------------------------
def _tap_major(w):
    """(k, Cin, Cout) conv weight -> (Cin, k*Cout) tap-major slab."""
    k, cin, cout = w.shape
    return jnp.transpose(w, (1, 0, 2)).reshape(cin, k * cout)


def _fold_bn(w, bias, bn, eps=1e-5):
    """Fold eval-mode BatchNorm1d into the preceding conv (exact)."""
    scale = bn["gamma"] / jnp.sqrt(bn["var"] + eps)
    return w * scale[None, None, :], (bias - bn["mean"]) * scale + bn["beta"]


# ----------------------------------------------------------------------------
# SpeechDecompose forward (multi_spk=True, use_spk_dvec=False, multi_styles=True,
# styleembs=None -> style VAE path)
# ----------------------------------------------------------------------------
def speech_decompose_forward(params, mel, mel_lens, max_mel_len, spembs, rng):
    del max_mel_len  # only mel/mel_lens are consumed by the kernel
    B, T, _ = mel.shape
    Td = T // 2

    ct, st, dec, pn = (params["content"], params["style"],
                       params["decoder"], params["postnet"])
    bf = lambda a: a.astype(jnp.bfloat16)
    row = lambda a: a.reshape(1, -1).astype(jnp.float32)

    e = ct["codebook"].astype(jnp.float32)
    e2 = jnp.sum(e * e, axis=1)[None, :]                      # (1, K) precompute

    spk_raw = params["spk_embedding"][spembs].reshape(B, 1, SPK_DIM)
    eps = jax.random.normal(rng, (B, 1, STYLE_DIM), dtype=jnp.float32)

    # postnet convs with eval-mode BN folded in
    pws, pbs = [], []
    for li in range(5):
        w, b_ = _fold_bn(pn[f"w{li}"], pn[f"b{li}"], pn[f"bn{li}"])
        pws.append(bf(_tap_major(w)))
        pbs.append(row(b_))

    dw1 = dec["w1"]                                           # (PK, DEC_IN, DEC_H)
    args = (
        mel, spk_raw, eps,
        # content encoder
        bf(_tap_major(ct["conv_w"])), row(ct["conv_b"]),
        bf(ct["w1"]), row(ct["b1"]), bf(ct["w2"]), row(ct["b2"]), e, e2,
        # style encoder
        bf(st["w1"]), row(st["b1"]), bf(st["w2"]), row(st["b2"]),
        # decoder
        bf(_tap_major(dw1[:, :Z_DIM, :])), bf(_tap_major(dw1[:, Z_DIM:, :])),
        row(dec["b1"]), bf(_tap_major(dec["w2"])), row(dec["b2"]),
        # mel_linear
        bf(params["mel_linear_w"]), row(params["mel_linear_b"]),
        # postnet (BN folded)
        pws[0], pbs[0], pws[1], pbs[1], pws[2], pbs[2], pws[3], pbs[3],
        pws[4], pbs[4],
    )

    def wspec(a):
        # whole-array block, constant index -> stays VMEM-resident across steps
        return pl.BlockSpec(a.shape, lambda b, *_, n=a.ndim: (0,) * n)

    in_specs = [
        pl.BlockSpec((1, T, N_MELS), lambda b, *_: (b, 0, 0)),
        pl.BlockSpec((1, 1, SPK_DIM), lambda b, *_: (b, 0, 0)),
        pl.BlockSpec((1, 1, STYLE_DIM), lambda b, *_: (b, 0, 0)),
    ] + [wspec(a) for a in args[3:]]

    out_shape = (jax.ShapeDtypeStruct((B, Td, N_MELS), jnp.float32),
                 jax.ShapeDtypeStruct((B, Td, N_MELS), jnp.float32),
                 jax.ShapeDtypeStruct((B, 1, 2 * STYLE_DIM), jnp.float32),
                 jax.ShapeDtypeStruct((B, 1, 1), jnp.float32))
    out_specs = (pl.BlockSpec((1, Td, N_MELS), lambda b, *_: (b, 0, 0)),
                 pl.BlockSpec((1, Td, N_MELS), lambda b, *_: (b, 0, 0)),
                 pl.BlockSpec((1, 1, 2 * STYLE_DIM), lambda b, *_: (b, 0, 0)),
                 pl.BlockSpec((1, 1, 1), lambda b, *_: (b, 0, 0)))

    output, postnet_output, stats, vqerr = pl.pallas_call(
        _speech_decompose_kernel,
        out_shape=out_shape,
        grid_spec=pltpu.PrefetchScalarGridSpec(
            num_scalar_prefetch=1,
            grid=(B,),
            in_specs=in_specs,
            out_specs=out_specs),
        compiler_params=pltpu.CompilerParams(
            dimension_semantics=("parallel",)),      # 2 TCs on v7x; loop elsewhere
    )(mel_lens.astype(jnp.int32), *args)

    stats = stats[:, 0, :]
    mu = stats[:, :STYLE_DIM]
    log_sigma = stats[:, STYLE_DIM:]
    # codebook + commitment terms (forward value); per-batch errors reduced here
    vq_loss = (1.0 + COMMIT_COST) * jnp.sum(vqerr) / float(B * Td * Z_DIM)
    # TODO(synk): LSTM context `c` / perplexity of ContentEncoder are unused
    # downstream in SpeechDecompose.forward and are omitted.
    return output, postnet_output, mel_lens, vq_loss, mu, log_sigma


# ----------------------------------------------------------------------------
# Deterministic parameter init
# ----------------------------------------------------------------------------
def init_params(key):
    ks = iter(jax.random.split(key, 64))

    def w(shape, scale=0.05):
        return scale * jax.random.normal(next(ks), shape, dtype=jnp.float32)

    def bn(c):
        return {"gamma": jnp.ones((c,), jnp.float32),
                "beta": jnp.zeros((c,), jnp.float32),
                "mean": jnp.zeros((c,), jnp.float32),
                "var": jnp.ones((c,), jnp.float32)}

    return {
        "content": {
            "conv_w": w((CK, N_MELS, CH)),
            "conv_b": jnp.zeros((CH,), jnp.float32),
            "w1": w((CH, CH)), "b1": w((CH,)),
            "w2": w((CH, Z_DIM)), "b2": w((Z_DIM,)),
            "codebook": w((K_CODES, Z_DIM), scale=0.1),
        },
        "spk_embedding": w((NUM_SPK, SPK_DIM), scale=0.5),
        "style_embedding": w((NUM_STYLES, STYLE_DIM), scale=0.5),  # unused (styleembs=None)
        "style": {
            "w1": w((N_MELS, STYLE_H)), "b1": w((STYLE_H,)),
            "w2": w((STYLE_H, 2 * STYLE_DIM)), "b2": w((2 * STYLE_DIM,)),
        },
        "decoder": {
            "w1": w((PK, DEC_IN, DEC_H)), "b1": w((DEC_H,)),
            "w2": w((PK, DEC_H, C_OUT)), "b2": w((C_OUT,)),
        },
        "mel_linear_w": w((C_OUT, N_MELS)),
        "mel_linear_b": w((N_MELS,)),
        "postnet": {
            "w0": w((PK, N_MELS, PD)), "b0": w((PD,)), "bn0": bn(PD),
            "w1": w((PK, PD, PD)), "b1": w((PD,)), "bn1": bn(PD),
            "w2": w((PK, PD, PD)), "b2": w((PD,)), "bn2": bn(PD),
            "w3": w((PK, PD, PD)), "b3": w((PD,)), "bn3": bn(PD),
            "w4": w((PK, PD, N_MELS)), "b4": w((N_MELS,)), "bn4": bn(N_MELS),
        },
    }


# ----------------------------------------------------------------------------
# Main
# ----------------------------------------------------------------------------
if __name__ == "__main__":
    key = jax.random.PRNGKey(0)
    k_param, k_mel, k_eps = jax.random.split(key, 3)

    params = init_params(k_param)

    B, T = 2, 16
    mel = jax.random.normal(k_mel, (B, T, N_MELS), dtype=jnp.float32)
    mel_lens = jnp.array([T, T - 4], dtype=jnp.int32)
    max_mel_len = jnp.int32(T)
    spembs = jnp.array([1, 3], dtype=jnp.int32)   # speaker ids (use_spk_dvec=False)

    fwd = jax.jit(speech_decompose_forward)
    outs = fwd(params, mel, mel_lens, max_mel_len, spembs, k_eps)
    jax.block_until_ready(outs)

    output, postnet_output, mel_lens_o, vq_loss, mu, log_sigma = outs
    assert output.shape == (B, T // 2, N_MELS)
    assert postnet_output.shape == (B, T // 2, N_MELS)
    assert mu.shape == (B, STYLE_DIM) and log_sigma.shape == (B, STYLE_DIM)
    assert vq_loss.shape == ()
    assert bool(jnp.all(jnp.isfinite(output)))
    assert bool(jnp.all(jnp.isfinite(postnet_output)))
    assert bool(jnp.isfinite(vq_loss))
    print("KERNEL_OK")
</pallas_src>

<mosaic_0001>
module attributes {stable_mosaic.version = 11 : i64} {
  func.func @_speech_decompose_kernel(%arg0: i32, %arg1: memref<2xi32, #tpu.memory_space<smem>>, %arg2: memref<1x16x32xf32, #tpu.memory_space<vmem>>, %arg3: memref<1x1x32xf32, #tpu.memory_space<vmem>>, %arg4: memref<1x1x32xf32, #tpu.memory_space<vmem>>, %arg5: memref<32x256xbf16, #tpu.memory_space<vmem>>, %arg6: memref<1x64xf32, #tpu.memory_space<vmem>>, %arg7: memref<64x64xbf16, #tpu.memory_space<vmem>>, %arg8: memref<1x64xf32, #tpu.memory_space<vmem>>, %arg9: memref<64x32xbf16, #tpu.memory_space<vmem>>, %arg10: memref<1x32xf32, #tpu.memory_space<vmem>>, %arg11: memref<64x32xf32, #tpu.memory_space<vmem>>, %arg12: memref<1x64xf32, #tpu.memory_space<vmem>>, %arg13: memref<32x64xbf16, #tpu.memory_space<vmem>>, %arg14: memref<1x64xf32, #tpu.memory_space<vmem>>, %arg15: memref<64x64xbf16, #tpu.memory_space<vmem>>, %arg16: memref<1x64xf32, #tpu.memory_space<vmem>>, %arg17: memref<32x640xbf16, #tpu.memory_space<vmem>>, %arg18: memref<64x640xbf16, #tpu.memory_space<vmem>>, %arg19: memref<1x128xf32, #tpu.memory_space<vmem>>, %arg20: memref<128x320xbf16, #tpu.memory_space<vmem>>, %arg21: memref<1x64xf32, #tpu.memory_space<vmem>>, %arg22: memref<64x32xbf16, #tpu.memory_space<vmem>>, %arg23: memref<1x32xf32, #tpu.memory_space<vmem>>, %arg24: memref<32x320xbf16, #tpu.memory_space<vmem>>, %arg25: memref<1x64xf32, #tpu.memory_space<vmem>>, %arg26: memref<64x320xbf16, #tpu.memory_space<vmem>>, %arg27: memref<1x64xf32, #tpu.memory_space<vmem>>, %arg28: memref<64x320xbf16, #tpu.memory_space<vmem>>, %arg29: memref<1x64xf32, #tpu.memory_space<vmem>>, %arg30: memref<64x320xbf16, #tpu.memory_space<vmem>>, %arg31: memref<1x64xf32, #tpu.memory_space<vmem>>, %arg32: memref<64x160xbf16, #tpu.memory_space<vmem>>, %arg33: memref<1x32xf32, #tpu.memory_space<vmem>>, %arg34: memref<1x8x32xf32, #tpu.memory_space<vmem>>, %arg35: memref<1x8x32xf32, #tpu.memory_space<vmem>>, %arg36: memref<1x1x64xf32, #tpu.memory_space<vmem>>, %arg37: memref<1x1x1xf32, #tpu.memory_space<vmem>>) attributes {dimension_semantics = [#tpu.dimension_semantics<parallel>], iteration_bounds = array<i64: 2>, scalar_prefetch = 1 : i64, scratch_operands = 0 : i64, tpu.core_type = #tpu.core_type<tc>, window_params = [{transform_indices = @transform_0, window_bounds = array<i64: 1, 16, 32>}, {transform_indices = @transform_1, window_bounds = array<i64: 1, 1, 32>}, {transform_indices = @transform_2, window_bounds = array<i64: 1, 1, 32>}, {pipeline_mode = #tpu.pipeline_mode<synchronous>, transform_indices = @transform_3, window_bounds = array<i64: 32, 256>}, {pipeline_mode = #tpu.pipeline_mode<synchronous>, transform_indices = @transform_4, window_bounds = array<i64: 1, 64>}, {pipeline_mode = #tpu.pipeline_mode<synchronous>, transform_indices = @transform_5, window_bounds = array<i64: 64, 64>}, {pipeline_mode = #tpu.pipeline_mode<synchronous>, transform_indices = @transform_6, window_bounds = array<i64: 1, 64>}, {pipeline_mode = #tpu.pipeline_mode<synchronous>, transform_indices = @transform_7, window_bounds = array<i64: 64, 32>}, {pipeline_mode = #tpu.pipeline_mode<synchronous>, transform_indices = @transform_8, window_bounds = array<i64: 1, 32>}, {pipeline_mode = #tpu.pipeline_mode<synchronous>, transform_indices = @transform_9, window_bounds = array<i64: 64, 32>}, {pipeline_mode = #tpu.pipeline_mode<synchronous>, transform_indices = @transform_10, window_bounds = array<i64: 1, 64>}, {pipeline_mode = #tpu.pipeline_mode<synchronous>, transform_indices = @transform_11, window_bounds = array<i64: 32, 64>}, {pipeline_mode = #tpu.pipeline_mode<synchronous>, transform_indices = @transform_12, window_bounds = array<i64: 1, 64>}, {pipeline_mode = #tpu.pipeline_mode<synchronous>, transform_indices = @transform_13, window_bounds = array<i64: 64, 64>}, {pipeline_mode = #tpu.pipeline_mode<synchronous>, transform_indices = @transform_14, window_bounds = array<i64: 1, 64>}, {pipeline_mode = #tpu.pipeline_mode<synchronous>, transform_indices = @transform_15, window_bounds = array<i64: 32, 640>}, {pipeline_mode = #tpu.pipeline_mode<synchronous>, transform_indices = @transform_16, window_bounds = array<i64: 64, 640>}, {pipeline_mode = #tpu.pipeline_mode<synchronous>, transform_indices = @transform_17, window_bounds = array<i64: 1, 128>}, {pipeline_mode = #tpu.pipeline_mode<synchronous>, transform_indices = @transform_18, window_bounds = array<i64: 128, 320>}, {pipeline_mode = #tpu.pipeline_mode<synchronous>, transform_indices = @transform_19, window_bounds = array<i64: 1, 64>}, {pipeline_mode = #tpu.pipeline_mode<synchronous>, transform_indices = @transform_20, window_bounds = array<i64: 64, 32>}, {pipeline_mode = #tpu.pipeline_mode<synchronous>, transform_indices = @transform_21, window_bounds = array<i64: 1, 32>}, {pipeline_mode = #tpu.pipeline_mode<synchronous>, transform_indices = @transform_22, window_bounds = array<i64: 32, 320>}, {pipeline_mode = #tpu.pipeline_mode<synchronous>, transform_indices = @transform_23, window_bounds = array<i64: 1, 64>}, {pipeline_mode = #tpu.pipeline_mode<synchronous>, transform_indices = @transform_24, window_bounds = array<i64: 64, 320>}, {pipeline_mode = #tpu.pipeline_mode<synchronous>, transform_indices = @transform_25, window_bounds = array<i64: 1, 64>}, {pipeline_mode = #tpu.pipeline_mode<synchronous>, transform_indices = @transform_26, window_bounds = array<i64: 64, 320>}, {pipeline_mode = #tpu.pipeline_mode<synchronous>, transform_indices = @transform_27, window_bounds = array<i64: 1, 64>}, {pipeline_mode = #tpu.pipeline_mode<synchronous>, transform_indices = @transform_28, window_bounds = array<i64: 64, 320>}, {pipeline_mode = #tpu.pipeline_mode<synchronous>, transform_indices = @transform_29, window_bounds = array<i64: 1, 64>}, {pipeline_mode = #tpu.pipeline_mode<synchronous>, transform_indices = @transform_30, window_bounds = array<i64: 64, 160>}, {pipeline_mode = #tpu.pipeline_mode<synchronous>, transform_indices = @transform_31, window_bounds = array<i64: 1, 32>}, {transform_indices = @transform_32, window_bounds = array<i64: 1, 8, 32>}, {transform_indices = @transform_33, window_bounds = array<i64: 1, 8, 32>}, {transform_indices = @transform_34, window_bounds = array<i64: 1, 1, 64>}, {transform_indices = @transform_35, window_bounds = array<i64: 1, 1, 1>}]} {
    %0 = tpu.iota {dimensions = array<i32: 0>} : vector<16x1xi32>
    %1 = tpu.iota {dimensions = array<i32: 0>} : vector<8x1xi32>
    %c-1_i32 = arith.constant -1 : i32
    %2 = vector.broadcast %c-1_i32 : i32 to vector<16x1xi32>
    %3 = arith.addi %0, %2 : vector<16x1xi32>
    %c0_i32 = arith.constant 0 : i32
    %4 = vector.broadcast %c0_i32 : i32 to vector<16x1xi32>
    %5 = arith.cmpi sge, %3, %4 : vector<16x1xi32>
    %c-1_i32_0 = arith.constant -1 : i32
    %6 = vector.broadcast %c-1_i32_0 : i32 to vector<16x1xi32>
    %7 = arith.addi %0, %6 : vector<16x1xi32>
    %c16_i32 = arith.constant 16 : i32
    %8 = vector.broadcast %c16_i32 : i32 to vector<16x1xi32>
    %9 = arith.cmpi slt, %7, %8 : vector<16x1xi32>
    %10 = arith.andi %5, %9 : vector<16x1xi1>
    %11 = arith.extui %10 : vector<16x1xi1> to vector<16x1xi32>
    %12 = arith.sitofp %11 : vector<16x1xi32> to vector<16x1xf32>
    %c1_i32 = arith.constant 1 : i32
    %13 = vector.broadcast %c1_i32 : i32 to vector<16x1xi32>
    %14 = arith.addi %0, %13 : vector<16x1xi32>
    %c0_i32_1 = arith.constant 0 : i32
    %15 = vector.broadcast %c0_i32_1 : i32 to vector<16x1xi32>
    %16 = arith.cmpi sge, %14, %15 : vector<16x1xi32>
    %c1_i32_2 = arith.constant 1 : i32
    %17 = vector.broadcast %c1_i32_2 : i32 to vector<16x1xi32>
    %18 = arith.addi %0, %17 : vector<16x1xi32>
    %c16_i32_3 = arith.constant 16 : i32
    %19 = vector.broadcast %c16_i32_3 : i32 to vector<16x1xi32>
    %20 = arith.cmpi slt, %18, %19 : vector<16x1xi32>
    %21 = arith.andi %16, %20 : vector<16x1xi1>
    %22 = arith.extui %21 : vector<16x1xi1> to vector<16x1xi32>
    %23 = arith.sitofp %22 : vector<16x1xi32> to vector<16x1xf32>
    %c2_i32 = arith.constant 2 : i32
    %24 = vector.broadcast %c2_i32 : i32 to vector<16x1xi32>
    %25 = arith.addi %0, %24 : vector<16x1xi32>
    %c0_i32_4 = arith.constant 0 : i32
    %26 = vector.broadcast %c0_i32_4 : i32 to vector<16x1xi32>
    %27 = arith.cmpi sge, %25, %26 : vector<16x1xi32>
    %c2_i32_5 = arith.constant 2 : i32
    %28 = vector.broadcast %c2_i32_5 : i32 to vector<16x1xi32>
    %29 = arith.addi %0, %28 : vector<16x1xi32>
    %c16_i32_6 = arith.constant 16 : i32
    %30 = vector.broadcast %c16_i32_6 : i32 to vector<16x1xi32>
    %31 = arith.cmpi slt, %29, %30 : vector<16x1xi32>
    %32 = arith.andi %27, %31 : vector<16x1xi1>
    %33 = arith.extui %32 : vector<16x1xi1> to vector<16x1xi32>
    %34 = arith.sitofp %33 : vector<16x1xi32> to vector<16x1xf32>
    %c-2_i32 = arith.constant -2 : i32
    %35 = vector.broadcast %c-2_i32 : i32 to vector<8x1xi32>
    %36 = arith.addi %1, %35 : vector<8x1xi32>
    %c0_i32_7 = arith.constant 0 : i32
    %37 = vector.broadcast %c0_i32_7 : i32 to vector<8x1xi32>
    %38 = arith.cmpi sge, %36, %37 : vector<8x1xi32>
    %c-2_i32_8 = arith.constant -2 : i32
    %39 = vector.broadcast %c-2_i32_8 : i32 to vector<8x1xi32>
    %40 = arith.addi %1, %39 : vector<8x1xi32>
    %c8_i32 = arith.constant 8 : i32
    %41 = vector.broadcast %c8_i32 : i32 to vector<8x1xi32>
    %42 = arith.cmpi slt, %40, %41 : vector<8x1xi32>
    %43 = arith.andi %38, %42 : vector<8x1xi1>
    %44 = arith.extui %43 : vector<8x1xi1> to vector<8x1xi32>
    %45 = arith.sitofp %44 : vector<8x1xi32> to vector<8x1xf32>
    %c-1_i32_9 = arith.constant -1 : i32
    %46 = vector.broadcast %c-1_i32_9 : i32 to vector<8x1xi32>
    %47 = arith.addi %1, %46 : vector<8x1xi32>
    %c0_i32_10 = arith.constant 0 : i32
    %48 = vector.broadcast %c0_i32_10 : i32 to vector<8x1xi32>
    %49 = arith.cmpi sge, %47, %48 : vector<8x1xi32>
    %c-1_i32_11 = arith.constant -1 : i32
    %50 = vector.broadcast %c-1_i32_11 : i32 to vector<8x1xi32>
    %51 = arith.addi %1, %50 : vector<8x1xi32>
    %c8_i32_12 = arith.constant 8 : i32
    %52 = vector.broadcast %c8_i32_12 : i32 to vector<8x1xi32>
    %53 = arith.cmpi slt, %51, %52 : vector<8x1xi32>
    %54 = arith.andi %49, %53 : vector<8x1xi1>
    %55 = arith.extui %54 : vector<8x1xi1> to vector<8x1xi32>
    %56 = arith.sitofp %55 : vector<8x1xi32> to vector<8x1xf32>
    %c1_i32_13 = arith.constant 1 : i32
    %57 = vector.broadcast %c1_i32_13 : i32 to vector<8x1xi32>
    %58 = arith.addi %1, %57 : vector<8x1xi32>
    %c0_i32_14 = arith.constant 0 : i32
    %59 = vector.broadcast %c0_i32_14 : i32 to vector<8x1xi32>
    %60 = arith.cmpi sge, %58, %59 : vector<8x1xi32>
    %c1_i32_15 = arith.constant 1 : i32
    %61 = vector.broadcast %c1_i32_15 : i32 to vector<8x1xi32>
    %62 = arith.addi %1, %61 : vector<8x1xi32>
    %c8_i32_16 = arith.constant 8 : i32
    %63 = vector.broadcast %c8_i32_16 : i32 to vector<8x1xi32>
    %64 = arith.cmpi slt, %62, %63 : vector<8x1xi32>
    %65 = arith.andi %60, %64 : vector<8x1xi1>
    %66 = arith.extui %65 : vector<8x1xi1> to vector<8x1xi32>
    %67 = arith.sitofp %66 : vector<8x1xi32> to vector<8x1xf32>
    %c2_i32_17 = arith.constant 2 : i32
    %68 = vector.broadcast %c2_i32_17 : i32 to vector<8x1xi32>
    %69 = arith.addi %1, %68 : vector<8x1xi32>
    %c0_i32_18 = arith.constant 0 : i32
    %70 = vector.broadcast %c0_i32_18 : i32 to vector<8x1xi32>
    %71 = arith.cmpi sge, %69, %70 : vector<8x1xi32>
    %c2_i32_19 = arith.constant 2 : i32
    %72 = vector.broadcast %c2_i32_19 : i32 to vector<8x1xi32>
    %73 = arith.addi %1, %72 : vector<8x1xi32>
    %c8_i32_20 = arith.constant 8 : i32
    %74 = vector.broadcast %c8_i32_20 : i32 to vector<8x1xi32>
    %75 = arith.cmpi slt, %73, %74 : vector<8x1xi32>
    %76 = arith.andi %71, %75 : vector<8x1xi1>
    %77 = arith.extui %76 : vector<8x1xi1> to vector<8x1xi32>
    %78 = arith.sitofp %77 : vector<8x1xi32> to vector<8x1xf32>
    %c0 = arith.constant 0 : index
    %c0_21 = arith.constant 0 : index
    %c0_22 = arith.constant 0 : index
    %79 = vector.load %arg2[%c0, %c0_21, %c0_22] : memref<1x16x32xf32, #tpu.memory_space<vmem>>, vector<1x16x32xf32>
    %80 = vector.shape_cast %79 : vector<1x16x32xf32> to vector<16x32xf32>
    %81 = arith.truncf %80 : vector<16x32xf32> to vector<16x32xbf16>
    %c0_23 = arith.constant 0 : index
    %c0_24 = arith.constant 0 : index
    %82 = vector.load %arg6[%c0_23, %c0_24] : memref<1x64xf32, #tpu.memory_space<vmem>>, vector<1x64xf32>
    %c0_25 = arith.constant 0 : index
    %c0_26 = arith.constant 0 : index
    %83 = vector.load %arg5[%c0_25, %c0_26] : memref<32x256xbf16, #tpu.memory_space<vmem>>, vector<32x256xbf16>
    %cst = arith.constant dense<0.000000e+00> : vector<16x256xf32>
    %84 = tpu.matmul %81, %83, %cst {dimension_numbers = #tpu.dot_dimension_numbers<[1], [0], [0], [1], [0, 0, 1, 1], [], []>} : vector<16x32xbf16>, vector<32x256xbf16>, vector<16x256xf32> -> vector<16x256xf32>
    %cst_27 = arith.constant 0.000000e+00 : f32
    %85 = vector.broadcast %cst_27 : f32 to vector<16x64xf32>
    %86 = vector.extract_strided_slice %84 {offsets = [0, 0], sizes = [16, 64], strides = [1, 1]} : vector<16x256xf32> to vector<16x64xf32>
    %c1_i32_28 = arith.constant 1 : i32
    %87 = tpu.dynamic_rotate %86 by %c1_i32_28 dim 0 : vector<16x64xf32>, i32 -> vector<16x64xf32>
    %88 = vector.broadcast %12 : vector<16x1xf32> to vector<16x64xf32>
    %89 = arith.mulf %88, %87 : vector<16x64xf32>
    %90 = arith.addf %85, %89 : vector<16x64xf32>
    %91 = vector.extract_strided_slice %84 {offsets = [0, 64], sizes = [16, 64], strides = [1, 1]} : vector<16x256xf32> to vector<16x64xf32>
    %92 = arith.addf %90, %91 : vector<16x64xf32>
    %93 = vector.extract_strided_slice %84 {offsets = [0, 128], sizes = [16, 64], strides = [1, 1]} : vector<16x256xf32> to vector<16x64xf32>
    %c15_i32 = arith.constant 15 : i32
    %94 = tpu.dynamic_rotate %93 by %c15_i32 dim 0 : vector<16x64xf32>, i32 -> vector<16x64xf32>
    %95 = vector.broadcast %23 : vector<16x1xf32> to vector<16x64xf32>
    %96 = arith.mulf %95, %94 : vector<16x64xf32>
    %97 = arith.addf %92, %96 : vector<16x64xf32>
    %98 = vector.extract_strided_slice %84 {offsets = [0, 192], sizes = [16, 64], strides = [1, 1]} : vector<16x256xf32> to vector<16x64xf32>
    %c14_i32 = arith.constant 14 : i32
    %99 = tpu.dynamic_rotate %98 by %c14_i32 dim 0 : vector<16x64xf32>, i32 -> vector<16x64xf32>
    %100 = vector.broadcast %34 : vector<16x1xf32> to vector<16x64xf32>
    %101 = arith.mulf %100, %99 : vector<16x64xf32>
    %102 = arith.addf %97, %101 : vector<16x64xf32>
    %103 = vector.broadcast %82 : vector<1x64xf32> to vector<16x64xf32>
    %104 = arith.addf %102, %103 : vector<16x64xf32>
    %cst_29 = arith.constant 0.000000e+00 : f32
    %105 = vector.broadcast %cst_29 : f32 to vector<16x64xf32>
    %106 = arith.maximumf %104, %105 : vector<16x64xf32>
    %107 = tpu.iota {dimensions = array<i32: 0>} : vector<8x16xi32>
    %108 = tpu.iota {dimensions = array<i32: 1>} : vector<8x16xi32>
    %c2_i32_30 = arith.constant 2 : i32
    %109 = vector.broadcast %c2_i32_30 : i32 to vector<8x16xi32>
    %110 = arith.muli %109, %107 : vector<8x16xi32>
    %111 = arith.cmpi eq, %108, %110 : vector<8x16xi32>
    %112 = arith.extui %111 : vector<8x16xi1> to vector<8x16xi32>
    %113 = arith.sitofp %112 : vector<8x16xi32> to vector<8x16xf32>
    %114 = arith.truncf %113 : vector<8x16xf32> to vector<8x16xbf16>
    %115 = arith.truncf %106 : vector<16x64xf32> to vector<16x64xbf16>
    %cst_31 = arith.constant dense<0.000000e+00> : vector<8x64xf32>
    %116 = tpu.matmul %114, %115, %cst_31 {dimension_numbers = #tpu.dot_dimension_numbers<[1], [0], [0], [1], [0, 0, 1, 1], [], []>} : vector<8x16xbf16>, vector<16x64xbf16>, vector<8x64xf32> -> vector<8x64xf32>
    %117 = arith.truncf %116 : vector<8x64xf32> to vector<8x64xbf16>
    %c0_32 = arith.constant 0 : index
    %c0_33 = arith.constant 0 : index
    %118 = vector.load %arg7[%c0_32, %c0_33] : memref<64x64xbf16, #tpu.memory_space<vmem>>, vector<64x64xbf16>
    %cst_34 = arith.constant dense<0.000000e+00> : vector<8x64xf32>
    %119 = tpu.matmul %117, %118, %cst_34 {dimension_numbers = #tpu.dot_dimension_numbers<[1], [0], [0], [1], [0, 0, 1, 1], [], []>} : vector<8x64xbf16>, vector<64x64xbf16>, vector<8x64xf32> -> vector<8x64xf32>
    %c0_35 = arith.constant 0 : index
    %c0_36 = arith.constant 0 : index
    %120 = vector.load %arg8[%c0_35, %c0_36] : memref<1x64xf32, #tpu.memory_space<vmem>>, vector<1x64xf32>
    %121 = vector.broadcast %120 : vector<1x64xf32> to vector<8x64xf32>
    %122 = arith.addf %119, %121 : vector<8x64xf32>
    %cst_37 = arith.constant 0.000000e+00 : f32
    %123 = vector.broadcast %cst_37 : f32 to vector<8x64xf32>
    %124 = arith.maximumf %122, %123 : vector<8x64xf32>
    %125 = arith.truncf %124 : vector<8x64xf32> to vector<8x64xbf16>
    %c0_38 = arith.constant 0 : index
    %c0_39 = arith.constant 0 : index
    %126 = vector.load %arg9[%c0_38, %c0_39] : memref<64x32xbf16, #tpu.memory_space<vmem>>, vector<64x32xbf16>
    %cst_40 = arith.constant dense<0.000000e+00> : vector<8x32xf32>
    %127 = tpu.matmul %125, %126, %cst_40 {dimension_numbers = #tpu.dot_dimension_numbers<[1], [0], [0], [1], [0, 0, 1, 1], [], []>} : vector<8x64xbf16>, vector<64x32xbf16>, vector<8x32xf32> -> vector<8x32xf32>
    %c0_41 = arith.constant 0 : index
    %c0_42 = arith.constant 0 : index
    %128 = vector.load %arg10[%c0_41, %c0_42] : memref<1x32xf32, #tpu.memory_space<vmem>>, vector<1x32xf32>
    %129 = vector.broadcast %128 : vector<1x32xf32> to vector<8x32xf32>
    %130 = arith.addf %127, %129 : vector<8x32xf32>
    %c0_43 = arith.constant 0 : index
    %c0_44 = arith.constant 0 : index
    %131 = vector.load %arg11[%c0_43, %c0_44] : memref<64x32xf32, #tpu.memory_space<vmem>>, vector<64x32xf32>
    %cst_45 = arith.constant dense<0.000000e+00> : vector<8x64xf32>
    %132 = tpu.matmul %130, %131, %cst_45 {dimension_numbers = #tpu.dot_dimension_numbers<[1], [1], [0], [0], [0, 0, 1, 0], [], []>} : vector<8x32xf32>, vector<64x32xf32>, vector<8x64xf32> -> vector<8x64xf32>
    %133 = arith.mulf %130, %130 : vector<8x32xf32>
    %cst_46 = arith.constant dense<0.000000e+00> : vector<8xf32>
    %134 = vector.multi_reduction <add>, %133, %cst_46 [1] : vector<8x32xf32> to vector<8xf32>
    %135 = vector.shape_cast %134 : vector<8xf32> to vector<8x1xf32>
    %cst_47 = arith.constant 2.000000e+00 : f32
    %136 = vector.broadcast %cst_47 : f32 to vector<8x64xf32>
    %137 = arith.mulf %136, %132 : vector<8x64xf32>
    %138 = vector.broadcast %135 : vector<8x1xf32> to vector<8x64xf32>
    %139 = arith.subf %138, %137 : vector<8x64xf32>
    %c0_48 = arith.constant 0 : index
    %c0_49 = arith.constant 0 : index
    %140 = vector.load %arg12[%c0_48, %c0_49] : memref<1x64xf32, #tpu.memory_space<vmem>>, vector<1x64xf32>
    %141 = vector.broadcast %140 : vector<1x64xf32> to vector<8x64xf32>
    %142 = arith.addf %139, %141 : vector<8x64xf32>
    %143 = tpu.iota {dimensions = array<i32: 1>} : vector<8x64xi32>
    %cst_50 = arith.constant dense<0x7F800000> : vector<8xf32>
    %144 = vector.multi_reduction <minimumf>, %142, %cst_50 [1] : vector<8x64xf32> to vector<8xf32>
    %145 = vector.shape_cast %144 : vector<8xf32> to vector<8x1xf32>
    %146 = vector.broadcast %145 : vector<8x1xf32> to vector<8x64xf32>
    %147 = arith.cmpf oeq, %142, %146 : vector<8x64xf32>
    %c64_i32 = arith.constant 64 : i32
    %148 = vector.broadcast %c64_i32 : i32 to vector<8x64xi32>
    %149 = arith.select %147, %143, %148 : vector<8x64xi1>, vector<8x64xi32>
    %cst_51 = arith.constant dense<2147483647> : vector<8xi32>
    %150 = vector.multi_reduction <minsi>, %149, %cst_51 [1] : vector<8x64xi32> to vector<8xi32>
    %151 = vector.shape_cast %150 : vector<8xi32> to vector<8x1xi32>
    %152 = vector.broadcast %151 : vector<8x1xi32> to vector<8x64xi32>
    %153 = arith.cmpi eq, %143, %152 : vector<8x64xi32>
    %154 = arith.extui %153 : vector<8x64xi1> to vector<8x64xi32>
    %155 = arith.sitofp %154 : vector<8x64xi32> to vector<8x64xf32>
    %cst_52 = arith.constant dense<0.000000e+00> : vector<8x32xf32>
    %156 = tpu.matmul %155, %131, %cst_52 {dimension_numbers = #tpu.dot_dimension_numbers<[1], [0], [0], [1], [0, 0, 1, 1], [], []>} : vector<8x64xf32>, vector<64x32xf32>, vector<8x32xf32> -> vector<8x32xf32>
    %157 = arith.subf %156, %130 : vector<8x32xf32>
    %158 = arith.mulf %157, %157 : vector<8x32xf32>
    %159 = vector.shape_cast %158 : vector<8x32xf32> to vector<1x8x32xf32>
    %cst_53 = arith.constant dense<0.000000e+00> : vector<1xf32>
    %160 = vector.multi_reduction <add>, %159, %cst_53 [1, 2] : vector<1x8x32xf32> to vector<1xf32>
    %161 = vector.shape_cast %160 : vector<1xf32> to vector<1x1x1xf32>
    %162 = vector.extract %161[0, 0, 0] : f32 from vector<1x1x1xf32>
    %163 = vector.broadcast %162 : f32 to vector<1x1xf32>
    %c0_54 = arith.constant 0 : index
    %c0_55 = arith.constant 0 : index
    %c0_56 = arith.constant 0 : index
    %164 = vector.load %arg37[%c0_54, %c0_55, %c0_56] : memref<1x1x1xf32, #tpu.memory_space<vmem>>, vector<1x1x1xf32>
    %165 = vector.shape_cast %164 : vector<1x1x1xf32> to vector<1x1xf32>
    %166 = vector.shape_cast %163 : vector<1x1xf32> to vector<1x1x1xf32>
    tpu.vector_store %arg37[%c0_54, %c0_55, %c0_56], %166 {strides = array<i32>} : memref<1x1x1xf32, #tpu.memory_space<vmem>>, vector<1x1x1xf32>,
    %167 = arith.index_cast %arg0 : i32 to index
    %168 = memref.load %arg1[%167] : memref<2xi32, #tpu.memory_space<smem>>
    %c0_57 = arith.constant 0 : index
    %c0_58 = arith.constant 0 : index
    %169 = vector.load %arg13[%c0_57, %c0_58] : memref<32x64xbf16, #tpu.memory_space<vmem>>, vector<32x64xbf16>
    %cst_59 = arith.constant dense<0.000000e+00> : vector<16x64xf32>
    %170 = tpu.matmul %81, %169, %cst_59 {dimension_numbers = #tpu.dot_dimension_numbers<[1], [0], [0], [1], [0, 0, 1, 1], [], []>} : vector<16x32xbf16>, vector<32x64xbf16>, vector<16x64xf32> -> vector<16x64xf32>
    %c0_60 = arith.constant 0 : index
    %c0_61 = arith.constant 0 : index
    %171 = vector.load %arg14[%c0_60, %c0_61] : memref<1x64xf32, #tpu.memory_space<vmem>>, vector<1x64xf32>
    %172 = vector.broadcast %171 : vector<1x64xf32> to vector<16x64xf32>
    %173 = arith.addf %170, %172 : vector<16x64xf32>
    %cst_62 = arith.constant 0.000000e+00 : f32
    %174 = vector.broadcast %cst_62 : f32 to vector<16x64xf32>
    %175 = arith.maximumf %173, %174 : vector<16x64xf32>
    %176 = vector.broadcast %168 : i32 to vector<16x1xi32>
    %177 = arith.cmpi slt, %0, %176 : vector<16x1xi32>
    %178 = arith.extui %177 : vector<16x1xi1> to vector<16x1xi32>
    %179 = arith.sitofp %178 : vector<16x1xi32> to vector<16x1xf32>
    %180 = arith.sitofp %168 : i32 to f32
    %cst_63 = arith.constant 1.000000e+00 : f32
    %181 = arith.maximumf %180, %cst_63 : f32
    %182 = vector.broadcast %179 : vector<16x1xf32> to vector<16x64xf32>
    %183 = arith.mulf %175, %182 : vector<16x64xf32>
    %cst_64 = arith.constant dense<0.000000e+00> : vector<64xf32>
    %184 = vector.multi_reduction <add>, %183, %cst_64 [0] : vector<16x64xf32> to vector<64xf32>
    %185 = vector.shape_cast %184 : vector<64xf32> to vector<1x64xf32>
    %186 = vector.broadcast %181 : f32 to vector<1x64xf32>
    %187 = arith.divf %185, %186 : vector<1x64xf32>
    %188 = arith.truncf %187 : vector<1x64xf32> to vector<1x64xbf16>
    %c0_65 = arith.constant 0 : index
    %c0_66 = arith.constant 0 : index
    %189 = vector.load %arg15[%c0_65, %c0_66] : memref<64x64xbf16, #tpu.memory_space<vmem>>, vector<64x64xbf16>
    %cst_67 = arith.constant dense<0.000000e+00> : vector<1x64xf32>
    %190 = tpu.matmul %188, %189, %cst_67 {dimension_numbers = #tpu.dot_dimension_numbers<[1], [0], [0], [1], [0, 0, 1, 1], [], []>} : vector<1x64xbf16>, vector<64x64xbf16>, vector<1x64xf32> -> vector<1x64xf32>
    %c0_68 = arith.constant 0 : index
    %c0_69 = arith.constant 0 : index
    %191 = vector.load %arg16[%c0_68, %c0_69] : memref<1x64xf32, #tpu.memory_space<vmem>>, vector<1x64xf32>
    %192 = arith.addf %190, %191 : vector<1x64xf32>
    %c0_70 = arith.constant 0 : index
    %c0_71 = arith.constant 0 : index
    %c0_72 = arith.constant 0 : index
    %193 = vector.load %arg36[%c0_70, %c0_71, %c0_72] : memref<1x1x64xf32, #tpu.memory_space<vmem>>, vector<1x1x64xf32>
    %194 = vector.shape_cast %193 : vector<1x1x64xf32> to vector<1x64xf32>
    %195 = vector.shape_cast %192 : vector<1x64xf32> to vector<1x1x64xf32>
    tpu.vector_store %arg36[%c0_70, %c0_71, %c0_72], %195 {strides = array<i32>} : memref<1x1x64xf32, #tpu.memory_space<vmem>>, vector<1x1x64xf32>,
    %196 = vector.extract_strided_slice %192 {offsets = [0, 0], sizes = [1, 32], strides = [1, 1]} : vector<1x64xf32> to vector<1x32xf32>
    %197 = vector.extract_strided_slice %192 {offsets = [0, 32], sizes = [1, 32], strides = [1, 1]} : vector<1x64xf32> to vector<1x32xf32>
    %cst_73 = arith.constant 5.000000e-01 : f32
    %198 = vector.broadcast %cst_73 : f32 to vector<1x32xf32>
    %199 = arith.mulf %198, %197 : vector<1x32xf32>
    %200 = math.exp %199 : vector<1x32xf32>
    %c0_74 = arith.constant 0 : index
    %c0_75 = arith.constant 0 : index
    %c0_76 = arith.constant 0 : index
    %201 = vector.load %arg4[%c0_74, %c0_75, %c0_76] : memref<1x1x32xf32, #tpu.memory_space<vmem>>, vector<1x1x32xf32>
    %202 = vector.shape_cast %201 : vector<1x1x32xf32> to vector<1x32xf32>
    %203 = arith.mulf %200, %202 : vector<1x32xf32>
    %204 = arith.addf %196, %203 : vector<1x32xf32>
    %205 = arith.mulf %204, %204 : vector<1x32xf32>
    %cst_77 = arith.constant dense<0.000000e+00> : vector<1xf32>
    %206 = vector.multi_reduction <add>, %205, %cst_77 [1] : vector<1x32xf32> to vector<1xf32>
    %207 = vector.shape_cast %206 : vector<1xf32> to vector<1x1xf32>
    %208 = math.sqrt %207 : vector<1x1xf32>
    %cst_78 = arith.constant 9.99999996E-13 : f32
    %209 = vector.broadcast %cst_78 : f32 to vector<1x1xf32>
    %210 = arith.maximumf %208, %209 : vector<1x1xf32>
    %211 = vector.broadcast %210 : vector<1x1xf32> to vector<1x32xf32>
    %212 = arith.divf %204, %211 : vector<1x32xf32>
    %c0_79 = arith.constant 0 : index
    %c0_80 = arith.constant 0 : index
    %c0_81 = arith.constant 0 : index
    %213 = vector.load %arg3[%c0_79, %c0_80, %c0_81] : memref<1x1x32xf32, #tpu.memory_space<vmem>>, vector<1x1x32xf32>
    %214 = vector.shape_cast %213 : vector<1x1x32xf32> to vector<1x32xf32>
    %215 = arith.mulf %214, %214 : vector<1x32xf32>
    %cst_82 = arith.constant dense<0.000000e+00> : vector<1xf32>
    %216 = vector.multi_reduction <add>, %215, %cst_82 [1] : vector<1x32xf32> to vector<1xf32>
    %217 = vector.shape_cast %216 : vector<1xf32> to vector<1x1xf32>
    %218 = math.sqrt %217 : vector<1x1xf32>
    %cst_83 = arith.constant 9.99999996E-13 : f32
    %219 = vector.broadcast %cst_83 : f32 to vector<1x1xf32>
    %220 = arith.maximumf %218, %219 : vector<1x1xf32>
    %221 = vector.broadcast %220 : vector<1x1xf32> to vector<1x32xf32>
    %222 = arith.divf %214, %221 : vector<1x32xf32>
    %223 = arith.truncf %156 : vector<8x32xf32> to vector<8x32xbf16>
    %c0_84 = arith.constant 0 : index
    %c0_85 = arith.constant 0 : index
    %224 = vector.load %arg17[%c0_84, %c0_85] : memref<32x640xbf16, #tpu.memory_space<vmem>>, vector<32x640xbf16>
    %cst_86 = arith.constant dense<0.000000e+00> : vector<8x640xf32>
    %225 = tpu.matmul %223, %224, %cst_86 {dimension_numbers = #tpu.dot_dimension_numbers<[1], [0], [0], [1], [0, 0, 1, 1], [], []>} : vector<8x32xbf16>, vector<32x640xbf16>, vector<8x640xf32> -> vector<8x640xf32>
    %226 = arith.truncf %222 : vector<1x32xf32> to vector<1x32xbf16>
    %c0_87 = arith.constant 0 : index
    %c0_88 = arith.constant 0 : index
    %227 = vector.load %arg18[%c0_87, %c0_88] : memref<64x640xbf16, #tpu.memory_space<vmem>>, vector<32x640xbf16>
    %cst_89 = arith.constant dense<0.000000e+00> : vector<1x640xf32>
    %228 = tpu.matmul %226, %227, %cst_89 {dimension_numbers = #tpu.dot_dimension_numbers<[1], [0], [0], [1], [0, 0, 1, 1], [], []>} : vector<1x32xbf16>, vector<32x640xbf16>, vector<1x640xf32> -> vector<1x640xf32>
    %229 = arith.truncf %212 : vector<1x32xf32> to vector<1x32xbf16>
    %c32 = arith.constant 32 : index
    %c0_90 = arith.constant 0 : index
    %230 = vector.load %arg18[%c32, %c0_90] : memref<64x640xbf16, #tpu.memory_space<vmem>>, vector<32x640xbf16>
    %cst_91 = arith.constant dense<0.000000e+00> : vector<1x640xf32>
    %231 = tpu.matmul %229, %230, %cst_91 {dimension_numbers = #tpu.dot_dimension_numbers<[1], [0], [0], [1], [0, 0, 1, 1], [], []>} : vector<1x32xbf16>, vector<32x640xbf16>, vector<1x640xf32> -> vector<1x640xf32>
    %232 = arith.addf %228, %231 : vector<1x640xf32>
    %cst_92 = arith.constant 0.000000e+00 : f32
    %233 = vector.broadcast %cst_92 : f32 to vector<8x128xf32>
    %234 = vector.extract_strided_slice %225 {offsets = [0, 0], sizes = [8, 128], strides = [1, 1]} : vector<8x640xf32> to vector<8x128xf32>
    %235 = vector.extract_strided_slice %232 {offsets = [0, 0], sizes = [1, 128], strides = [1, 1]} : vector<1x640xf32> to vector<1x128xf32>
    %c2_i32_93 = arith.constant 2 : i32
    %236 = tpu.dynamic_rotate %234 by %c2_i32_93 dim 0 : vector<8x128xf32>, i32 -> vector<8x128xf32>
    %237 = vector.broadcast %235 : vector<1x128xf32> to vector<8x128xf32>
    %238 = arith.addf %236, %237 : vector<8x128xf32>
    %239 = vector.broadcast %45 : vector<8x1xf32> to vector<8x128xf32>
    %240 = arith.mulf %239, %238 : vector<8x128xf32>
    %241 = arith.addf %233, %240 : vector<8x128xf32>
    %242 = vector.extract_strided_slice %225 {offsets = [0, 128], sizes = [8, 128], strides = [1, 1]} : vector<8x640xf32> to vector<8x128xf32>
    %243 = vector.extract_strided_slice %232 {offsets = [0, 128], sizes = [1, 128], strides = [1, 1]} : vector<1x640xf32> to vector<1x128xf32>
    %c1_i32_94 = arith.constant 1 : i32
    %244 = tpu.dynamic_rotate %242 by %c1_i32_94 dim 0 : vector<8x128xf32>, i32 -> vector<8x128xf32>
    %245 = vector.broadcast %243 : vector<1x128xf32> to vector<8x128xf32>
    %246 = arith.addf %244, %245 : vector<8x128xf32>
    %247 = vector.broadcast %56 : vector<8x1xf32> to vector<8x128xf32>
    %248 = arith.mulf %247, %246 : vector<8x128xf32>
    %249 = arith.addf %241, %248 : vector<8x128xf32>
    %250 = vector.extract_strided_slice %225 {offsets = [0, 256], sizes = [8, 128], strides = [1, 1]} : vector<8x640xf32> to vector<8x128xf32>
    %251 = vector.extract_strided_slice %232 {offsets = [0, 256], sizes = [1, 128], strides = [1, 1]} : vector<1x640xf32> to vector<1x128xf32>
    %252 = arith.addf %249, %250 : vector<8x128xf32>
    %253 = vector.broadcast %251 : vector<1x128xf32> to vector<8x128xf32>
    %254 = arith.addf %252, %253 : vector<8x128xf32>
    %255 = vector.extract_strided_slice %225 {offsets = [0, 384], sizes = [8, 128], strides = [1, 1]} : vector<8x640xf32> to vector<8x128xf32>
    %256 = vector.extract_strided_slice %232 {offsets = [0, 384], sizes = [1, 128], strides = [1, 1]} : vector<1x640xf32> to vector<1x128xf32>
    %c7_i32 = arith.constant 7 : i32
    %257 = tpu.dynamic_rotate %255 by %c7_i32 dim 0 : vector<8x128xf32>, i32 -> vector<8x128xf32>
    %258 = vector.broadcast %256 : vector<1x128xf32> to vector<8x128xf32>
    %259 = arith.addf %257, %258 : vector<8x128xf32>
    %260 = vector.broadcast %67 : vector<8x1xf32> to vector<8x128xf32>
    %261 = arith.mulf %260, %259 : vector<8x128xf32>
    %262 = arith.addf %254, %261 : vector<8x128xf32>
    %263 = vector.extract_strided_slice %225 {offsets = [0, 512], sizes = [8, 128], strides = [1, 1]} : vector<8x640xf32> to vector<8x128xf32>
    %264 = vector.extract_strided_slice %232 {offsets = [0, 512], sizes = [1, 128], strides = [1, 1]} : vector<1x640xf32> to vector<1x128xf32>
    %c6_i32 = arith.constant 6 : i32
    %265 = tpu.dynamic_rotate %263 by %c6_i32 dim 0 : vector<8x128xf32>, i32 -> vector<8x128xf32>
    %266 = vector.broadcast %264 : vector<1x128xf32> to vector<8x128xf32>
    %267 = arith.addf %265, %266 : vector<8x128xf32>
    %268 = vector.broadcast %78 : vector<8x1xf32> to vector<8x128xf32>
    %269 = arith.mulf %268, %267 : vector<8x128xf32>
    %270 = arith.addf %262, %269 : vector<8x128xf32>
    %c0_95 = arith.constant 0 : index
    %c0_96 = arith.constant 0 : index
    %271 = vector.load %arg19[%c0_95, %c0_96] : memref<1x128xf32, #tpu.memory_space<vmem>>, vector<1x128xf32>
    %272 = vector.broadcast %271 : vector<1x128xf32> to vector<8x128xf32>
    %273 = arith.addf %270, %272 : vector<8x128xf32>
    %cst_97 = arith.constant 0.000000e+00 : f32
    %274 = vector.broadcast %cst_97 : f32 to vector<8x128xf32>
    %275 = arith.maximumf %273, %274 : vector<8x128xf32>
    %276 = arith.truncf %275 : vector<8x128xf32> to vector<8x128xbf16>
    %c0_98 = arith.constant 0 : index
    %c0_99 = arith.constant 0 : index
    %277 = vector.load %arg21[%c0_98, %c0_99] : memref<1x64xf32, #tpu.memory_space<vmem>>, vector<1x64xf32>
    %c0_100 = arith.constant 0 : index
    %c0_101 = arith.constant 0 : index
    %278 = vector.load %arg20[%c0_100, %c0_101] : memref<128x320xbf16, #tpu.memory_space<vmem>>, vector<128x320xbf16>
    %cst_102 = arith.constant dense<0.000000e+00> : vector<8x320xf32>
    %279 = tpu.matmul %276, %278, %cst_102 {dimension_numbers = #tpu.dot_dimension_numbers<[1], [0], [0], [1], [0, 0, 1, 1], [], []>} : vector<8x128xbf16>, vector<128x320xbf16>, vector<8x320xf32> -> vector<8x320xf32>
    %cst_103 = arith.constant 0.000000e+00 : f32
    %280 = vector.broadcast %cst_103 : f32 to vector<8x64xf32>
    %281 = vector.extract_strided_slice %279 {offsets = [0, 0], sizes = [8, 64], strides = [1, 1]} : vector<8x320xf32> to vector<8x64xf32>
    %c2_i32_104 = arith.constant 2 : i32
    %282 = tpu.dynamic_rotate %281 by %c2_i32_104 dim 0 : vector<8x64xf32>, i32 -> vector<8x64xf32>
    %283 = vector.broadcast %45 : vector<8x1xf32> to vector<8x64xf32>
    %284 = arith.mulf %283, %282 : vector<8x64xf32>
    %285 = arith.addf %280, %284 : vector<8x64xf32>
    %286 = vector.extract_strided_slice %279 {offsets = [0, 64], sizes = [8, 64], strides = [1, 1]} : vector<8x320xf32> to vector<8x64xf32>
    %c1_i32_105 = arith.constant 1 : i32
    %287 = tpu.dynamic_rotate %286 by %c1_i32_105 dim 0 : vector<8x64xf32>, i32 -> vector<8x64xf32>
    %288 = vector.broadcast %56 : vector<8x1xf32> to vector<8x64xf32>
    %289 = arith.mulf %288, %287 : vector<8x64xf32>
    %290 = arith.addf %285, %289 : vector<8x64xf32>
    %291 = vector.extract_strided_slice %279 {offsets = [0, 128], sizes = [8, 64], strides = [1, 1]} : vector<8x320xf32> to vector<8x64xf32>
    %292 = arith.addf %290, %291 : vector<8x64xf32>
    %293 = vector.extract_strided_slice %279 {offsets = [0, 192], sizes = [8, 64], strides = [1, 1]} : vector<8x320xf32> to vector<8x64xf32>
    %c7_i32_106 = arith.constant 7 : i32
    %294 = tpu.dynamic_rotate %293 by %c7_i32_106 dim 0 : vector<8x64xf32>, i32 -> vector<8x64xf32>
    %295 = vector.broadcast %67 : vector<8x1xf32> to vector<8x64xf32>
    %296 = arith.mulf %295, %294 : vector<8x64xf32>
    %297 = arith.addf %292, %296 : vector<8x64xf32>
    %298 = vector.extract_strided_slice %279 {offsets = [0, 256], sizes = [8, 64], strides = [1, 1]} : vector<8x320xf32> to vector<8x64xf32>
    %c6_i32_107 = arith.constant 6 : i32
    %299 = tpu.dynamic_rotate %298 by %c6_i32_107 dim 0 : vector<8x64xf32>, i32 -> vector<8x64xf32>
    %300 = vector.broadcast %78 : vector<8x1xf32> to vector<8x64xf32>
    %301 = arith.mulf %300, %299 : vector<8x64xf32>
    %302 = arith.addf %297, %301 : vector<8x64xf32>
    %303 = vector.broadcast %277 : vector<1x64xf32> to vector<8x64xf32>
    %304 = arith.addf %302, %303 : vector<8x64xf32>
    %305 = arith.truncf %304 : vector<8x64xf32> to vector<8x64xbf16>
    %c0_108 = arith.constant 0 : index
    %c0_109 = arith.constant 0 : index
    %306 = vector.load %arg22[%c0_108, %c0_109] : memref<64x32xbf16, #tpu.memory_space<vmem>>, vector<64x32xbf16>
    %cst_110 = arith.constant dense<0.000000e+00> : vector<8x32xf32>
    %307 = tpu.matmul %305, %306, %cst_110 {dimension_numbers = #tpu.dot_dimension_numbers<[1], [0], [0], [1], [0, 0, 1, 1], [], []>} : vector<8x64xbf16>, vector<64x32xbf16>, vector<8x32xf32> -> vector<8x32xf32>
    %c0_111 = arith.constant 0 : index
    %c0_112 = arith.constant 0 : index
    %308 = vector.load %arg23[%c0_111, %c0_112] : memref<1x32xf32, #tpu.memory_space<vmem>>, vector<1x32xf32>
    %309 = vector.broadcast %308 : vector<1x32xf32> to vector<8x32xf32>
    %310 = arith.addf %307, %309 : vector<8x32xf32>
    %c0_113 = arith.constant 0 : index
    %c0_114 = arith.constant 0 : index
    %c0_115 = arith.constant 0 : index
    %311 = vector.load %arg34[%c0_113, %c0_114, %c0_115] : memref<1x8x32xf32, #tpu.memory_space<vmem>>, vector<1x8x32xf32>
    %312 = vector.shape_cast %311 : vector<1x8x32xf32> to vector<8x32xf32>
    %313 = vector.shape_cast %310 : vector<8x32xf32> to vector<1x8x32xf32>
    tpu.vector_store %arg34[%c0_113, %c0_114, %c0_115], %313 {strides = array<i32>} : memref<1x8x32xf32, #tpu.memory_space<vmem>>, vector<1x8x32xf32>,
    %314 = arith.truncf %310 : vector<8x32xf32> to vector<8x32xbf16>
    %c0_116 = arith.constant 0 : index
    %c0_117 = arith.constant 0 : index
    %315 = vector.load %arg25[%c0_116, %c0_117] : memref<1x64xf32, #tpu.memory_space<vmem>>, vector<1x64xf32>
    %c0_118 = arith.constant 0 : index
    %c0_119 = arith.constant 0 : index
    %316 = vector.load %arg24[%c0_118, %c0_119] : memref<32x320xbf16, #tpu.memory_space<vmem>>, vector<32x320xbf16>
    %cst_120 = arith.constant dense<0.000000e+00> : vector<8x320xf32>
    %317 = tpu.matmul %314, %316, %cst_120 {dimension_numbers = #tpu.dot_dimension_numbers<[1], [0], [0], [1], [0, 0, 1, 1], [], []>} : vector<8x32xbf16>, vector<32x320xbf16>, vector<8x320xf32> -> vector<8x320xf32>
    %cst_121 = arith.constant 0.000000e+00 : f32
    %318 = vector.broadcast %cst_121 : f32 to vector<8x64xf32>
    %319 = vector.extract_strided_slice %317 {offsets = [0, 0], sizes = [8, 64], strides = [1, 1]} : vector<8x320xf32> to vector<8x64xf32>
    %c2_i32_122 = arith.constant 2 : i32
    %320 = tpu.dynamic_rotate %319 by %c2_i32_122 dim 0 : vector<8x64xf32>, i32 -> vector<8x64xf32>
    %321 = vector.broadcast %45 : vector<8x1xf32> to vector<8x64xf32>
    %322 = arith.mulf %321, %320 : vector<8x64xf32>
    %323 = arith.addf %318, %322 : vector<8x64xf32>
    %324 = vector.extract_strided_slice %317 {offsets = [0, 64], sizes = [8, 64], strides = [1, 1]} : vector<8x320xf32> to vector<8x64xf32>
    %c1_i32_123 = arith.constant 1 : i32
    %325 = tpu.dynamic_rotate %324 by %c1_i32_123 dim 0 : vector<8x64xf32>, i32 -> vector<8x64xf32>
    %326 = vector.broadcast %56 : vector<8x1xf32> to vector<8x64xf32>
    %327 = arith.mulf %326, %325 : vector<8x64xf32>
    %328 = arith.addf %323, %327 : vector<8x64xf32>
    %329 = vector.extract_strided_slice %317 {offsets = [0, 128], sizes = [8, 64], strides = [1, 1]} : vector<8x320xf32> to vector<8x64xf32>
    %330 = arith.addf %328, %329 : vector<8x64xf32>
    %331 = vector.extract_strided_slice %317 {offsets = [0, 192], sizes = [8, 64], strides = [1, 1]} : vector<8x320xf32> to vector<8x64xf32>
    %c7_i32_124 = arith.constant 7 : i32
    %332 = tpu.dynamic_rotate %331 by %c7_i32_124 dim 0 : vector<8x64xf32>, i32 -> vector<8x64xf32>
    %333 = vector.broadcast %67 : vector<8x1xf32> to vector<8x64xf32>
    %334 = arith.mulf %333, %332 : vector<8x64xf32>
    %335 = arith.addf %330, %334 : vector<8x64xf32>
    %336 = vector.extract_strided_slice %317 {offsets = [0, 256], sizes = [8, 64], strides = [1, 1]} : vector<8x320xf32> to vector<8x64xf32>
    %c6_i32_125 = arith.constant 6 : i32
    %337 = tpu.dynamic_rotate %336 by %c6_i32_125 dim 0 : vector<8x64xf32>, i32 -> vector<8x64xf32>
    %338 = vector.broadcast %78 : vector<8x1xf32> to vector<8x64xf32>
    %339 = arith.mulf %338, %337 : vector<8x64xf32>
    %340 = arith.addf %335, %339 : vector<8x64xf32>
    %341 = vector.broadcast %315 : vector<1x64xf32> to vector<8x64xf32>
    %342 = arith.addf %340, %341 : vector<8x64xf32>
    %343 = math.tanh %342 : vector<8x64xf32>
    %344 = arith.truncf %343 : vector<8x64xf32> to vector<8x64xbf16>
    %c0_126 = arith.constant 0 : index
    %c0_127 = arith.constant 0 : index
    %345 = vector.load %arg27[%c0_126, %c0_127] : memref<1x64xf32, #tpu.memory_space<vmem>>, vector<1x64xf32>
    %c0_128 = arith.constant 0 : index
    %c0_129 = arith.constant 0 : index
    %346 = vector.load %arg26[%c0_128, %c0_129] : memref<64x320xbf16, #tpu.memory_space<vmem>>, vector<64x320xbf16>
    %cst_130 = arith.constant dense<0.000000e+00> : vector<8x320xf32>
    %347 = tpu.matmul %344, %346, %cst_130 {dimension_numbers = #tpu.dot_dimension_numbers<[1], [0], [0], [1], [0, 0, 1, 1], [], []>} : vector<8x64xbf16>, vector<64x320xbf16>, vector<8x320xf32> -> vector<8x320xf32>
    %cst_131 = arith.constant 0.000000e+00 : f32
    %348 = vector.broadcast %cst_131 : f32 to vector<8x64xf32>
    %349 = vector.extract_strided_slice %347 {offsets = [0, 0], sizes = [8, 64], strides = [1, 1]} : vector<8x320xf32> to vector<8x64xf32>
    %c2_i32_132 = arith.constant 2 : i32
    %350 = tpu.dynamic_rotate %349 by %c2_i32_132 dim 0 : vector<8x64xf32>, i32 -> vector<8x64xf32>
    %351 = vector.broadcast %45 : vector<8x1xf32> to vector<8x64xf32>
    %352 = arith.mulf %351, %350 : vector<8x64xf32>
    %353 = arith.addf %348, %352 : vector<8x64xf32>
    %354 = vector.extract_strided_slice %347 {offsets = [0, 64], sizes = [8, 64], strides = [1, 1]} : vector<8x320xf32> to vector<8x64xf32>
    %c1_i32_133 = arith.constant 1 : i32
    %355 = tpu.dynamic_rotate %354 by %c1_i32_133 dim 0 : vector<8x64xf32>, i32 -> vector<8x64xf32>
    %356 = vector.broadcast %56 : vector<8x1xf32> to vector<8x64xf32>
    %357 = arith.mulf %356, %355 : vector<8x64xf32>
    %358 = arith.addf %353, %357 : vector<8x64xf32>
    %359 = vector.extract_strided_slice %347 {offsets = [0, 128], sizes = [8, 64], strides = [1, 1]} : vector<8x320xf32> to vector<8x64xf32>
    %360 = arith.addf %358, %359 : vector<8x64xf32>
    %361 = vector.extract_strided_slice %347 {offsets = [0, 192], sizes = [8, 64], strides = [1, 1]} : vector<8x320xf32> to vector<8x64xf32>
    %c7_i32_134 = arith.constant 7 : i32
    %362 = tpu.dynamic_rotate %361 by %c7_i32_134 dim 0 : vector<8x64xf32>, i32 -> vector<8x64xf32>
    %363 = vector.broadcast %67 : vector<8x1xf32> to vector<8x64xf32>
    %364 = arith.mulf %363, %362 : vector<8x64xf32>
    %365 = arith.addf %360, %364 : vector<8x64xf32>
    %366 = vector.extract_strided_slice %347 {offsets = [0, 256], sizes = [8, 64], strides = [1, 1]} : vector<8x320xf32> to vector<8x64xf32>
    %c6_i32_135 = arith.constant 6 : i32
    %367 = tpu.dynamic_rotate %366 by %c6_i32_135 dim 0 : vector<8x64xf32>, i32 -> vector<8x64xf32>
    %368 = vector.broadcast %78 : vector<8x1xf32> to vector<8x64xf32>
    %369 = arith.mulf %368, %367 : vector<8x64xf32>
    %370 = arith.addf %365, %369 : vector<8x64xf32>
    %371 = vector.broadcast %345 : vector<1x64xf32> to vector<8x64xf32>
    %372 = arith.addf %370, %371 : vector<8x64xf32>
    %373 = math.tanh %372 : vector<8x64xf32>
    %374 = arith.truncf %373 : vector<8x64xf32> to vector<8x64xbf16>
    %c0_136 = arith.constant 0 : index
    %c0_137 = arith.constant 0 : index
    %375 = vector.load %arg29[%c0_136, %c0_137] : memref<1x64xf32, #tpu.memory_space<vmem>>, vector<1x64xf32>
    %c0_138 = arith.constant 0 : index
    %c0_139 = arith.constant 0 : index
    %376 = vector.load %arg28[%c0_138, %c0_139] : memref<64x320xbf16, #tpu.memory_space<vmem>>, vector<64x320xbf16>
    %cst_140 = arith.constant dense<0.000000e+00> : vector<8x320xf32>
    %377 = tpu.matmul %374, %376, %cst_140 {dimension_numbers = #tpu.dot_dimension_numbers<[1], [0], [0], [1], [0, 0, 1, 1], [], []>} : vector<8x64xbf16>, vector<64x320xbf16>, vector<8x320xf32> -> vector<8x320xf32>
    %cst_141 = arith.constant 0.000000e+00 : f32
    %378 = vector.broadcast %cst_141 : f32 to vector<8x64xf32>
    %379 = vector.extract_strided_slice %377 {offsets = [0, 0], sizes = [8, 64], strides = [1, 1]} : vector<8x320xf32> to vector<8x64xf32>
    %c2_i32_142 = arith.constant 2 : i32
    %380 = tpu.dynamic_rotate %379 by %c2_i32_142 dim 0 : vector<8x64xf32>, i32 -> vector<8x64xf32>
    %381 = vector.broadcast %45 : vector<8x1xf32> to vector<8x64xf32>
    %382 = arith.mulf %381, %380 : vector<8x64xf32>
    %383 = arith.addf %378, %382 : vector<8x64xf32>
    %384 = vector.extract_strided_slice %377 {offsets = [0, 64], sizes = [8, 64], strides = [1, 1]} : vector<8x320xf32> to vector<8x64xf32>
    %c1_i32_143 = arith.constant 1 : i32
    %385 = tpu.dynamic_rotate %384 by %c1_i32_143 dim 0 : vector<8x64xf32>, i32 -> vector<8x64xf32>
    %386 = vector.broadcast %56 : vector<8x1xf32> to vector<8x64xf32>
    %387 = arith.mulf %386, %385 : vector<8x64xf32>
    %388 = arith.addf %383, %387 : vector<8x64xf32>
    %389 = vector.extract_strided_slice %377 {offsets = [0, 128], sizes = [8, 64], strides = [1, 1]} : vector<8x320xf32> to vector<8x64xf32>
    %390 = arith.addf %388, %389 : vector<8x64xf32>
    %391 = vector.extract_strided_slice %377 {offsets = [0, 192], sizes = [8, 64], strides = [1, 1]} : vector<8x320xf32> to vector<8x64xf32>
    %c7_i32_144 = arith.constant 7 : i32
    %392 = tpu.dynamic_rotate %391 by %c7_i32_144 dim 0 : vector<8x64xf32>, i32 -> vector<8x64xf32>
    %393 = vector.broadcast %67 : vector<8x1xf32> to vector<8x64xf32>
    %394 = arith.mulf %393, %392 : vector<8x64xf32>
    %395 = arith.addf %390, %394 : vector<8x64xf32>
    %396 = vector.extract_strided_slice %377 {offsets = [0, 256], sizes = [8, 64], strides = [1, 1]} : vector<8x320xf32> to vector<8x64xf32>
    %c6_i32_145 = arith.constant 6 : i32
    %397 = tpu.dynamic_rotate %396 by %c6_i32_145 dim 0 : vector<8x64xf32>, i32 -> vector<8x64xf32>
    %398 = vector.broadcast %78 : vector<8x1xf32> to vector<8x64xf32>
    %399 = arith.mulf %398, %397 : vector<8x64xf32>
    %400 = arith.addf %395, %399 : vector<8x64xf32>
    %401 = vector.broadcast %375 : vector<1x64xf32> to vector<8x64xf32>
    %402 = arith.addf %400, %401 : vector<8x64xf32>
    %403 = math.tanh %402 : vector<8x64xf32>
    %404 = arith.truncf %403 : vector<8x64xf32> to vector<8x64xbf16>
    %c0_146 = arith.constant 0 : index
    %c0_147 = arith.constant 0 : index
    %405 = vector.load %arg31[%c0_146, %c0_147] : memref<1x64xf32, #tpu.memory_space<vmem>>, vector<1x64xf32>
    %c0_148 = arith.constant 0 : index
    %c0_149 = arith.constant 0 : index
    %406 = vector.load %arg30[%c0_148, %c0_149] : memref<64x320xbf16, #tpu.memory_space<vmem>>, vector<64x320xbf16>
    %cst_150 = arith.constant dense<0.000000e+00> : vector<8x320xf32>
    %407 = tpu.matmul %404, %406, %cst_150 {dimension_numbers = #tpu.dot_dimension_numbers<[1], [0], [0], [1], [0, 0, 1, 1], [], []>} : vector<8x64xbf16>, vector<64x320xbf16>, vector<8x320xf32> -> vector<8x320xf32>
    %cst_151 = arith.constant 0.000000e+00 : f32
    %408 = vector.broadcast %cst_151 : f32 to vector<8x64xf32>
    %409 = vector.extract_strided_slice %407 {offsets = [0, 0], sizes = [8, 64], strides = [1, 1]} : vector<8x320xf32> to vector<8x64xf32>
    %c2_i32_152 = arith.constant 2 : i32
    %410 = tpu.dynamic_rotate %409 by %c2_i32_152 dim 0 : vector<8x64xf32>, i32 -> vector<8x64xf32>
    %411 = vector.broadcast %45 : vector<8x1xf32> to vector<8x64xf32>
    %412 = arith.mulf %411, %410 : vector<8x64xf32>
    %413 = arith.addf %408, %412 : vector<8x64xf32>
    %414 = vector.extract_strided_slice %407 {offsets = [0, 64], sizes = [8, 64], strides = [1, 1]} : vector<8x320xf32> to vector<8x64xf32>
    %c1_i32_153 = arith.constant 1 : i32
    %415 = tpu.dynamic_rotate %414 by %c1_i32_153 dim 0 : vector<8x64xf32>, i32 -> vector<8x64xf32>
    %416 = vector.broadcast %56 : vector<8x1xf32> to vector<8x64xf32>
    %417 = arith.mulf %416, %415 : vector<8x64xf32>
    %418 = arith.addf %413, %417 : vector<8x64xf32>
    %419 = vector.extract_strided_slice %407 {offsets = [0, 128], sizes = [8, 64], strides = [1, 1]} : vector<8x320xf32> to vector<8x64xf32>
    %420 = arith.addf %418, %419 : vector<8x64xf32>
    %421 = vector.extract_strided_slice %407 {offsets = [0, 192], sizes = [8, 64], strides = [1, 1]} : vector<8x320xf32> to vector<8x64xf32>
    %c7_i32_154 = arith.constant 7 : i32
    %422 = tpu.dynamic_rotate %421 by %c7_i32_154 dim 0 : vector<8x64xf32>, i32 -> vector<8x64xf32>
    %423 = vector.broadcast %67 : vector<8x1xf32> to vector<8x64xf32>
    %424 = arith.mulf %423, %422 : vector<8x64xf32>
    %425 = arith.addf %420, %424 : vector<8x64xf32>
    %426 = vector.extract_strided_slice %407 {offsets = [0, 256], sizes = [8, 64], strides = [1, 1]} : vector<8x320xf32> to vector<8x64xf32>
    %c6_i32_155 = arith.constant 6 : i32
    %427 = tpu.dynamic_rotate %426 by %c6_i32_155 dim 0 : vector<8x64xf32>, i32 -> vector<8x64xf32>
    %428 = vector.broadcast %78 : vector<8x1xf32> to vector<8x64xf32>
    %429 = arith.mulf %428, %427 : vector<8x64xf32>
    %430 = arith.addf %425, %429 : vector<8x64xf32>
    %431 = vector.broadcast %405 : vector<1x64xf32> to vector<8x64xf32>
    %432 = arith.addf %430, %431 : vector<8x64xf32>
    %433 = math.tanh %432 : vector<8x64xf32>
    %434 = arith.truncf %433 : vector<8x64xf32> to vector<8x64xbf16>
    %c0_156 = arith.constant 0 : index
    %c0_157 = arith.constant 0 : index
    %435 = vector.load %arg33[%c0_156, %c0_157] : memref<1x32xf32, #tpu.memory_space<vmem>>, vector<1x32xf32>
    %c0_158 = arith.constant 0 : index
    %c0_159 = arith.constant 0 : index
    %436 = vector.load %arg32[%c0_158, %c0_159] : memref<64x160xbf16, #tpu.memory_space<vmem>>, vector<64x160xbf16>
    %cst_160 = arith.constant dense<0.000000e+00> : vector<8x160xf32>
    %437 = tpu.matmul %434, %436, %cst_160 {dimension_numbers = #tpu.dot_dimension_numbers<[1], [0], [0], [1], [0, 0, 1, 1], [], []>} : vector<8x64xbf16>, vector<64x160xbf16>, vector<8x160xf32> -> vector<8x160xf32>
    %cst_161 = arith.constant 0.000000e+00 : f32
    %438 = vector.broadcast %cst_161 : f32 to vector<8x32xf32>
    %439 = vector.extract_strided_slice %437 {offsets = [0, 0], sizes = [8, 32], strides = [1, 1]} : vector<8x160xf32> to vector<8x32xf32>
    %c2_i32_162 = arith.constant 2 : i32
    %440 = tpu.dynamic_rotate %439 by %c2_i32_162 dim 0 : vector<8x32xf32>, i32 -> vector<8x32xf32>
    %441 = vector.broadcast %45 : vector<8x1xf32> to vector<8x32xf32>
    %442 = arith.mulf %441, %440 : vector<8x32xf32>
    %443 = arith.addf %438, %442 : vector<8x32xf32>
    %444 = vector.extract_strided_slice %437 {offsets = [0, 32], sizes = [8, 32], strides = [1, 1]} : vector<8x160xf32> to vector<8x32xf32>
    %c1_i32_163 = arith.constant 1 : i32
    %445 = tpu.dynamic_rotate %444 by %c1_i32_163 dim 0 : vector<8x32xf32>, i32 -> vector<8x32xf32>
    %446 = vector.broadcast %56 : vector<8x1xf32> to vector<8x32xf32>
    %447 = arith.mulf %446, %445 : vector<8x32xf32>
    %448 = arith.addf %443, %447 : vector<8x32xf32>
    %449 = vector.extract_strided_slice %437 {offsets = [0, 64], sizes = [8, 32], strides = [1, 1]} : vector<8x160xf32> to vector<8x32xf32>
    %450 = arith.addf %448, %449 : vector<8x32xf32>
    %451 = vector.extract_strided_slice %437 {offsets = [0, 96], sizes = [8, 32], strides = [1, 1]} : vector<8x160xf32> to vector<8x32xf32>
    %c7_i32_164 = arith.constant 7 : i32
    %452 = tpu.dynamic_rotate %451 by %c7_i32_164 dim 0 : vector<8x32xf32>, i32 -> vector<8x32xf32>
    %453 = vector.broadcast %67 : vector<8x1xf32> to vector<8x32xf32>
    %454 = arith.mulf %453, %452 : vector<8x32xf32>
    %455 = arith.addf %450, %454 : vector<8x32xf32>
    %456 = vector.extract_strided_slice %437 {offsets = [0, 128], sizes = [8, 32], strides = [1, 1]} : vector<8x160xf32> to vector<8x32xf32>
    %c6_i32_165 = arith.constant 6 : i32
    %457 = tpu.dynamic_rotate %456 by %c6_i32_165 dim 0 : vector<8x32xf32>, i32 -> vector<8x32xf32>
    %458 = vector.broadcast %78 : vector<8x1xf32> to vector<8x32xf32>
    %459 = arith.mulf %458, %457 : vector<8x32xf32>
    %460 = arith.addf %455, %459 : vector<8x32xf32>
    %461 = vector.broadcast %435 : vector<1x32xf32> to vector<8x32xf32>
    %462 = arith.addf %460, %461 : vector<8x32xf32>
    %463 = arith.addf %462, %310 : vector<8x32xf32>
    %c0_166 = arith.constant 0 : index
    %c0_167 = arith.constant 0 : index
    %c0_168 = arith.constant 0 : index
    %464 = vector.load %arg35[%c0_166, %c0_167, %c0_168] : memref<1x8x32xf32, #tpu.memory_space<vmem>>, vector<1x8x32xf32>
    %465 = vector.shape_cast %464 : vector<1x8x32xf32> to vector<8x32xf32>
    %466 = vector.shape_cast %463 : vector<8x32xf32> to vector<1x8x32xf32>
    tpu.vector_store %arg35[%c0_166, %c0_167, %c0_168], %466 {strides = array<i32>} : memref<1x8x32xf32, #tpu.memory_space<vmem>>, vector<1x8x32xf32>,
    return
  }
  func.func @transform_0(%arg0: i32, %arg1: memref<2xi32, #tpu.memory_space<smem>>) -> (i32, i32, i32) {
    %c0_i32 = arith.constant 0 : i32
    %c0_i32_0 = arith.constant 0 : i32
    %c0_i32_1 = arith.constant 0 : i32
    return %arg0, %c0_i32, %c0_i32_0 : i32, i32, i32
  }
  func.func @transform_1(%arg0: i32, %arg1: memref<2xi32, #tpu.memory_space<smem>>) -> (i32, i32, i32) {
    %c0_i32 = arith.constant 0 : i32
    %c0_i32_0 = arith.constant 0 : i32
    %c0_i32_1 = arith.constant 0 : i32
    return %arg0, %c0_i32, %c0_i32_0 : i32, i32, i32
  }
  func.func @transform_2(%arg0: i32, %arg1: memref<2xi32, #tpu.memory_space<smem>>) -> (i32, i32, i32) {
    %c0_i32 = arith.constant 0 : i32
    %c0_i32_0 = arith.constant 0 : i32
    %c0_i32_1 = arith.constant 0 : i32
    return %arg0, %c0_i32, %c0_i32_0 : i32, i32, i32
  }
  func.func @transform_3(%arg0: i32, %arg1: memref<2xi32, #tpu.memory_space<smem>>) -> (i32, i32) {
    %c0_i32 = arith.constant 0 : i32
    %c0_i32_0 = arith.constant 0 : i32
    %c0_i32_1 = arith.constant 0 : i32
    return %c0_i32, %c0_i32_0 : i32, i32
  }
  func.func @transform_4(%arg0: i32, %arg1: memref<2xi32, #tpu.memory_space<smem>>) -> (i32, i32) {
    %c0_i32 = arith.constant 0 : i32
    %c0_i32_0 = arith.constant 0 : i32
    %c0_i32_1 = arith.constant 0 : i32
    return %c0_i32, %c0_i32_0 : i32, i32
  }
  func.func @transform_5(%arg0: i32, %arg1: memref<2xi32, #tpu.memory_space<smem>>) -> (i32, i32) {
    %c0_i32 = arith.constant 0 : i32
    %c0_i32_0 = arith.constant 0 : i32
    %c0_i32_1 = arith.constant 0 : i32
    return %c0_i32, %c0_i32_0 : i32, i32
  }
  func.func @transform_6(%arg0: i32, %arg1: memref<2xi32, #tpu.memory_space<smem>>) -> (i32, i32) {
    %c0_i32 = arith.constant 0 : i32
    %c0_i32_0 = arith.constant 0 : i32
    %c0_i32_1 = arith.constant 0 : i32
    return %c0_i32, %c0_i32_0 : i32, i32
  }
  func.func @transform_7(%arg0: i32, %arg1: memref<2xi32, #tpu.memory_space<smem>>) -> (i32, i32) {
    %c0_i32 = arith.constant 0 : i32
    %c0_i32_0 = arith.constant 0 : i32
    %c0_i32_1 = arith.constant 0 : i32
    return %c0_i32, %c0_i32_0 : i32, i32
  }
  func.func @transform_8(%arg0: i32, %arg1: memref<2xi32, #tpu.memory_space<smem>>) -> (i32, i32) {
    %c0_i32 = arith.constant 0 : i32
    %c0_i32_0 = arith.constant 0 : i32
    %c0_i32_1 = arith.constant 0 : i32
    return %c0_i32, %c0_i32_0 : i32, i32
  }
  func.func @transform_9(%arg0: i32, %arg1: memref<2xi32, #tpu.memory_space<smem>>) -> (i32, i32) {
    %c0_i32 = arith.constant 0 : i32
    %c0_i32_0 = arith.constant 0 : i32
    %c0_i32_1 = arith.constant 0 : i32
    return %c0_i32, %c0_i32_0 : i32, i32
  }
  func.func @transform_10(%arg0: i32, %arg1: memref<2xi32, #tpu.memory_space<smem>>) -> (i32, i32) {
    %c0_i32 = arith.constant 0 : i32
    %c0_i32_0 = arith.constant 0 : i32
    %c0_i32_1 = arith.constant 0 : i32
    return %c0_i32, %c0_i32_0 : i32, i32
  }
  func.func @transform_11(%arg0: i32, %arg1: memref<2xi32, #tpu.memory_space<smem>>) -> (i32, i32) {
    %c0_i32 = arith.constant 0 : i32
    %c0_i32_0 = arith.constant 0 : i32
    %c0_i32_1 = arith.constant 0 : i32
    return %c0_i32, %c0_i32_0 : i32, i32
  }
  func.func @transform_12(%arg0: i32, %arg1: memref<2xi32, #tpu.memory_space<smem>>) -> (i32, i32) {
    %c0_i32 = arith.constant 0 : i32
    %c0_i32_0 = arith.constant 0 : i32
    %c0_i32_1 = arith.constant 0 : i32
    return %c0_i32, %c0_i32_0 : i32, i32
  }
  func.func @transform_13(%arg0: i32, %arg1: memref<2xi32, #tpu.memory_space<smem>>) -> (i32, i32) {
    %c0_i32 = arith.constant 0 : i32
    %c0_i32_0 = arith.constant 0 : i32
    %c0_i32_1 = arith.constant 0 : i32
    return %c0_i32, %c0_i32_0 : i32, i32
  }
  func.func @transform_14(%arg0: i32, %arg1: memref<2xi32, #tpu.memory_space<smem>>) -> (i32, i32) {
    %c0_i32 = arith.constant 0 : i32
    %c0_i32_0 = arith.constant 0 : i32
    %c0_i32_1 = arith.constant 0 : i32
    return %c0_i32, %c0_i32_0 : i32, i32
  }
  func.func @transform_15(%arg0: i32, %arg1: memref<2xi32, #tpu.memory_space<smem>>) -> (i32, i32) {
    %c0_i32 = arith.constant 0 : i32
    %c0_i32_0 = arith.constant 0 : i32
    %c0_i32_1 = arith.constant 0 : i32
    return %c0_i32, %c0_i32_0 : i32, i32
  }
  func.func @transform_16(%arg0: i32, %arg1: memref<2xi32, #tpu.memory_space<smem>>) -> (i32, i32) {
    %c0_i32 = arith.constant 0 : i32
    %c0_i32_0 = arith.constant 0 : i32
    %c0_i32_1 = arith.constant 0 : i32
    return %c0_i32, %c0_i32_0 : i32, i32
  }
  func.func @transform_17(%arg0: i32, %arg1: memref<2xi32, #tpu.memory_space<smem>>) -> (i32, i32) {
    %c0_i32 = arith.constant 0 : i32
    %c0_i32_0 = arith.constant 0 : i32
    %c0_i32_1 = arith.constant 0 : i32
    return %c0_i32, %c0_i32_0 : i32, i32
  }
  func.func @transform_18(%arg0: i32, %arg1: memref<2xi32, #tpu.memory_space<smem>>) -> (i32, i32) {
    %c0_i32 = arith.constant 0 : i32
    %c0_i32_0 = arith.constant 0 : i32
    %c0_i32_1 = arith.constant 0 : i32
    return %c0_i32, %c0_i32_0 : i32, i32
  }
  func.func @transform_19(%arg0: i32, %arg1: memref<2xi32, #tpu.memory_space<smem>>) -> (i32, i32) {
    %c0_i32 = arith.constant 0 : i32
    %c0_i32_0 = arith.constant 0 : i32
    %c0_i32_1 = arith.constant 0 : i32
    return %c0_i32, %c0_i32_0 : i32, i32
  }
  func.func @transform_20(%arg0: i32, %arg1: memref<2xi32, #tpu.memory_space<smem>>) -> (i32, i32) {
    %c0_i32 = arith.constant 0 : i32
    %c0_i32_0 = arith.constant 0 : i32
    %c0_i32_1 = arith.constant 0 : i32
    return %c0_i32, %c0_i32_0 : i32, i32
  }
  func.func @transform_21(%arg0: i32, %arg1: memref<2xi32, #tpu.memory_space<smem>>) -> (i32, i32) {
    %c0_i32 = arith.constant 0 : i32
    %c0_i32_0 = arith.constant 0 : i32
    %c0_i32_1 = arith.constant 0 : i32
    return %c0_i32, %c0_i32_0 : i32, i32
  }
  func.func @transform_22(%arg0: i32, %arg1: memref<2xi32, #tpu.memory_space<smem>>) -> (i32, i32) {
    %c0_i32 = arith.constant 0 : i32
    %c0_i32_0 = arith.constant 0 : i32
    %c0_i32_1 = arith.constant 0 : i32
    return %c0_i32, %c0_i32_0 : i32, i32
  }
  func.func @transform_23(%arg0: i32, %arg1: memref<2xi32, #tpu.memory_space<smem>>) -> (i32, i32) {
    %c0_i32 = arith.constant 0 : i32
    %c0_i32_0 = arith.constant 0 : i32
    %c0_i32_1 = arith.constant 0 : i32
    return %c0_i32, %c0_i32_0 : i32, i32
  }
  func.func @transform_24(%arg0: i32, %arg1: memref<2xi32, #tpu.memory_space<smem>>) -> (i32, i32) {
    %c0_i32 = arith.constant 0 : i32
    %c0_i32_0 = arith.constant 0 : i32
    %c0_i32_1 = arith.constant 0 : i32
    return %c0_i32, %c0_i32_0 : i32, i32
  }
  func.func @transform_25(%arg0: i32, %arg1: memref<2xi32, #tpu.memory_space<smem>>) -> (i32, i32) {
    %c0_i32 = arith.constant 0 : i32
    %c0_i32_0 = arith.constant 0 : i32
    %c0_i32_1 = arith.constant 0 : i32
    return %c0_i32, %c0_i32_0 : i32, i32
  }
  func.func @transform_26(%arg0: i32, %arg1: memref<2xi32, #tpu.memory_space<smem>>) -> (i32, i32) {
    %c0_i32 = arith.constant 0 : i32
    %c0_i32_0 = arith.constant 0 : i32
    %c0_i32_1 = arith.constant 0 : i32
    return %c0_i32, %c0_i32_0 : i32, i32
  }
  func.func @transform_27(%arg0: i32, %arg1: memref<2xi32, #tpu.memory_space<smem>>) -> (i32, i32) {
    %c0_i32 = arith.constant 0 : i32
    %c0_i32_0 = arith.constant 0 : i32
    %c0_i32_1 = arith.constant 0 : i32
    return %c0_i32, %c0_i32_0 : i32, i32
  }
  func.func @transform_28(%arg0: i32, %arg1: memref<2xi32, #tpu.memory_space<smem>>) -> (i32, i32) {
    %c0_i32 = arith.constant 0 : i32
    %c0_i32_0 = arith.constant 0 : i32
    %c0_i32_1 = arith.constant 0 : i32
    return %c0_i32, %c0_i32_0 : i32, i32
  }
  func.func @transform_29(%arg0: i32, %arg1: memref<2xi32, #tpu.memory_space<smem>>) -> (i32, i32) {
    %c0_i32 = arith.constant 0 : i32
    %c0_i32_0 = arith.constant 0 : i32
    %c0_i32_1 = arith.constant 0 : i32
    return %c0_i32, %c0_i32_0 : i32, i32
  }
  func.func @transform_30(%arg0: i32, %arg1: memref<2xi32, #tpu.memory_space<smem>>) -> (i32, i32) {
    %c0_i32 = arith.constant 0 : i32
    %c0_i32_0 = arith.constant 0 : i32
    %c0_i32_1 = arith.constant 0 : i32
    return %c0_i32, %c0_i32_0 : i32, i32
  }
  func.func @transform_31(%arg0: i32, %arg1: memref<2xi32, #tpu.memory_space<smem>>) -> (i32, i32) {
    %c0_i32 = arith.constant 0 : i32
    %c0_i32_0 = arith.constant 0 : i32
    %c0_i32_1 = arith.constant 0 : i32
    return %c0_i32, %c0_i32_0 : i32, i32
  }
  func.func @transform_32(%arg0: i32, %arg1: memref<2xi32, #tpu.memory_space<smem>>) -> (i32, i32, i32) {
    %c0_i32 = arith.constant 0 : i32
    %c0_i32_0 = arith.constant 0 : i32
    %c0_i32_1 = arith.constant 0 : i32
    return %arg0, %c0_i32, %c0_i32_0 : i32, i32, i32
  }
  func.func @transform_33(%arg0: i32, %arg1: memref<2xi32, #tpu.memory_space<smem>>) -> (i32, i32, i32) {
    %c0_i32 = arith.constant 0 : i32
    %c0_i32_0 = arith.constant 0 : i32
    %c0_i32_1 = arith.constant 0 : i32
    return %arg0, %c0_i32, %c0_i32_0 : i32, i32, i32
  }
  func.func @transform_34(%arg0: i32, %arg1: memref<2xi32, #tpu.memory_space<smem>>) -> (i32, i32, i32) {
    %c0_i32 = arith.constant 0 : i32
    %c0_i32_0 = arith.constant 0 : i32
    %c0_i32_1 = arith.constant 0 : i32
    return %arg0, %c0_i32, %c0_i32_0 : i32, i32, i32
  }
  func.func @transform_35(%arg0: i32, %arg1: memref<2xi32, #tpu.memory_space<smem>>) -> (i32, i32, i32) {
    %c0_i32 = arith.constant 0 : i32
    %c0_i32_0 = arith.constant 0 : i32
    %c0_i32_1 = arith.constant 0 : i32
    return %arg0, %c0_i32, %c0_i32_0 : i32, i32, i32
  }
}

</mosaic_0001>

<llo_original>
// kernel: speech_decompose_forward.1
$region0: #{speech_decompose_forward.1}
  #allocation0 [shape = 'u32[]', space=smem, size = 0x4, offset = 0x4, fixed_abs, tag = 'smem constant byte address 0x4 - core index']
  #allocation1 [shape = 'u32[144,128]{1,0:T(1,128)}', space=vmem, size = 0x12000, scoped, tag = 'internal scratch']
  #allocation2 [shape = 's32[1]{0}', space=sflag, size = 0x4, scoped, tag = 'scoped memory for speech_decompose_forward.1']
  #allocation3 [shape = 'u8[512]{0}', space=smem, size = 0x200, scoped, tag = 'prefetched SMEM operand 0']
  %s0 = inlined_call_operand.smem [shape: u32[37], index: -1, kind: input, shape index: {}]
  %s1 = sld [smem:[%s0]]
  %s2 = scalar_lea.smem %s0, 1
  %s3 = sld [smem:[%s2]]
  %s4 = scalar_lea.smem %s0, 2
  %s5 = sld [smem:[%s4]]
  %s6 = scalar_lea.smem %s0, 3
  %s7 = sld [smem:[%s6]]
  %s8 = scalar_lea.smem %s0, 4
  %s9 = sld [smem:[%s8]]
  %s10 = scalar_lea.smem %s0, 5
  %s11 = sld [smem:[%s10]]
  %s12 = scalar_lea.smem %s0, 6
  %s13 = sld [smem:[%s12]]
  %s14 = scalar_lea.smem %s0, 7
  %s15 = sld [smem:[%s14]]
  %s16 = scalar_lea.smem %s0, 8
  %s17 = sld [smem:[%s16]]
  %s18 = scalar_lea.smem %s0, 9
  %s19 = sld [smem:[%s18]]
  %s20 = scalar_lea.smem %s0, 10
  %s21 = sld [smem:[%s20]]
  %s22 = scalar_lea.smem %s0, 11
  %s23 = sld [smem:[%s22]]
  %s24 = scalar_lea.smem %s0, 12
  %s25 = sld [smem:[%s24]]
  %s26 = scalar_lea.smem %s0, 13
  %s27 = sld [smem:[%s26]]
  %s28 = scalar_lea.smem %s0, 14
  %s29 = sld [smem:[%s28]]
  %s30 = scalar_lea.smem %s0, 15
  %s31 = sld [smem:[%s30]]
  %s32 = scalar_lea.smem %s0, 16
  %s33 = sld [smem:[%s32]]
  %s34 = scalar_lea.smem %s0, 17
  %s35 = sld [smem:[%s34]]
  %s36 = scalar_lea.smem %s0, 18
  %s37 = sld [smem:[%s36]]
  %s38 = scalar_lea.smem %s0, 19
  %s39 = sld [smem:[%s38]]
  %s40 = scalar_lea.smem %s0, 20
  %s41 = sld [smem:[%s40]]
  %s42 = scalar_lea.smem %s0, 21
  %s43 = sld [smem:[%s42]]
  %s44 = scalar_lea.smem %s0, 22
  %s45 = sld [smem:[%s44]]
  %s46 = scalar_lea.smem %s0, 23
  %s47 = sld [smem:[%s46]]
  %s48 = scalar_lea.smem %s0, 24
  %s49 = sld [smem:[%s48]]
  %s50 = scalar_lea.smem %s0, 25
  %s51 = sld [smem:[%s50]]
  %s52 = scalar_lea.smem %s0, 26
  %s53 = sld [smem:[%s52]]
  %s54 = scalar_lea.smem %s0, 27
  %s55 = sld [smem:[%s54]]
  %s56 = scalar_lea.smem %s0, 28
  %s57 = sld [smem:[%s56]]
  %s58 = scalar_lea.smem %s0, 29
  %s59 = sld [smem:[%s58]]
  %s60 = scalar_lea.smem %s0, 30
  %s61 = sld [smem:[%s60]]
  %s62 = scalar_lea.smem %s0, 31
  %s63 = sld [smem:[%s62]]
  %s64 = scalar_lea.smem %s0, 32
  %s65 = sld [smem:[%s64]]
  %s66 = scalar_lea.smem %s0, 33
  %s67 = sld [smem:[%s66]]
  %s68 = scalar_lea.smem %s0, 34
  %s69 = sld [smem:[%s68]]
  %s70 = scalar_lea.smem %s0, 35
  %s71 = sld [smem:[%s70]]
  %s72 = scalar_lea.smem %s0, 36
  %s73 = sld [smem:[%s72]]
  %74 = xla_tuple %s67, %s69, %s71, %s73
  %s75 = sld [smem:[#allocation0]]
  $region185: #{speech_decompose_forward.1} parent=0
    _
  %s77 = ssub.s32 1, %s75
  %s78 = scalar_select 0, %s77, %s75
  %s79 = sshll.u32 %s1, 4
  %s80 = int_to_ptr.vmem [resolvable:$true] %s79
  %82 = dma.vmem_to_smem %s80, 16, [#allocation3], [#allocation2]
  %83 = dma.done [#allocation2], 16
  %84 = sfence
  $region1: #{speech_decompose_forward.1} parent=0
    #allocation4 [shape = 'u8[8192]{0}', space=vmem, size = 0x2000, scoped, tag = 'output window, operand 0']
    #allocation5 [shape = 's32[2]{0}', space=sflag, size = 0x8, scoped, tag = 'scoped memory for speech_decompose_forward.1']
    #allocation6 [shape = 'u8[8192]{0}', space=vmem, size = 0x2000, scoped, tag = 'output window, operand 1']
    #allocation7 [shape = 's32[2]{0}', space=sflag, size = 0x8, scoped, tag = 'scoped memory for speech_decompose_forward.1']
    %85 = vsyncpa [#allocation5], 0
    %s86 = scalar_lea.sflag [#allocation5], 1
    %87 = vsyncpa %s86, 0
    %88 = vsyncpa [#allocation7], 0
    %s89 = scalar_lea.sflag [#allocation7], 1
    %90 = vsyncpa %s89, 0
    loop: start=0, step=1, limit=4
    $region2: #{speech_decompose_forward.1} parent=1 // loop_pre_header
      _
    $region3: #{speech_decompose_forward.1} parent=1 // loop_header
      %s92 = sphi 0, %s96
      %p93 = scmp.ge.s32.totalorder %s92, 4
      %s102 = sphi 0, %s104
      %s105 = sphi 0, %s102
      %s106 = sphi 0, %s105
      %s122 = sphi 0, %s106
      %s128 = sphi 0, %s130
      %s131 = sphi 0, %s128
      %s132 = sphi 0, %s131
      %s148 = sphi 0, %s132
      %s154 = sphi 0, %s156
      %s157 = sphi 0, %s154
      %s158 = sphi 0, %s157
      %s174 = sphi 0, %s158
      %s178 = sphi 0, %s178
      %s180 = sphi 0, %s178
      %s181 = sphi 0, %s180
      %s195 = sphi 0, %s181
      %s199 = sphi 0, %s199
      %s201 = sphi 0, %s199
      %s202 = sphi 0, %s201
      %s216 = sphi 0, %s202
      %s220 = sphi 0, %s220
      %s222 = sphi 0, %s220
      %s223 = sphi 0, %s222
      %s237 = sphi 0, %s223
      %s241 = sphi 0, %s241
      %s243 = sphi 0, %s241
      %s244 = sphi 0, %s243
      %s258 = sphi 0, %s244
      %s262 = sphi 0, %s262
      %s264 = sphi 0, %s262
      %s265 = sphi 0, %s264
      %s279 = sphi 0, %s265
      %s283 = sphi 0, %s283
      %s285 = sphi 0, %s283
      %s286 = sphi 0, %s285
      %s300 = sphi 0, %s286
      %s304 = sphi 0, %s304
      %s306 = sphi 0, %s304
      %s307 = sphi 0, %s306
      %s321 = sphi 0, %s307
      %s325 = sphi 0, %s325
      %s327 = sphi 0, %s325
      %s328 = sphi 0, %s327
      %s342 = sphi 0, %s328
      %s346 = sphi 0, %s346
      %s348 = sphi 0, %s346
      %s349 = sphi 0, %s348
      %s363 = sphi 0, %s349
      %s367 = sphi 0, %s367
      %s369 = sphi 0, %s367
      %s370 = sphi 0, %s369
      %s384 = sphi 0, %s370
      %s388 = sphi 0, %s388
      %s390 = sphi 0, %s388
      %s391 = sphi 0, %s390
      %s405 = sphi 0, %s391
      %s409 = sphi 0, %s409
      %s411 = sphi 0, %s409
      %s412 = sphi 0, %s411
      %s426 = sphi 0, %s412
      %s430 = sphi 0, %s430
      %s432 = sphi 0, %s430
      %s433 = sphi 0, %s432
      %s447 = sphi 0, %s433
      %s451 = sphi 0, %s451
      %s453 = sphi 0, %s451
      %s454 = sphi 0, %s453
      %s468 = sphi 0, %s454
      %s472 = sphi 0, %s472
      %s474 = sphi 0, %s472
      %s475 = sphi 0, %s474
      %s489 = sphi 0, %s475
      %s493 = sphi 0, %s493
      %s495 = sphi 0, %s493
      %s496 = sphi 0, %s495
      %s510 = sphi 0, %s496
      %s514 = sphi 0, %s514
      %s516 = sphi 0, %s514
      %s517 = sphi 0, %s516
      %s531 = sphi 0, %s517
      %s535 = sphi 0, %s535
      %s537 = sphi 0, %s535
      %s538 = sphi 0, %s537
      %s552 = sphi 0, %s538
      %s556 = sphi 0, %s556
      %s558 = sphi 0, %s556
      %s559 = sphi 0, %s558
      %s573 = sphi 0, %s559
      %s577 = sphi 0, %s577
      %s579 = sphi 0, %s577
      %s580 = sphi 0, %s579
      %s594 = sphi 0, %s580
      %s598 = sphi 0, %s598
      %s600 = sphi 0, %s598
      %s601 = sphi 0, %s600
      %s615 = sphi 0, %s601
      %s619 = sphi 0, %s619
      %s621 = sphi 0, %s619
      %s622 = sphi 0, %s621
      %s636 = sphi 0, %s622
      %s640 = sphi 0, %s640
      %s642 = sphi 0, %s640
      %s643 = sphi 0, %s642
      %s657 = sphi 0, %s643
      %s661 = sphi 0, %s661
      %s663 = sphi 0, %s661
      %s664 = sphi 0, %s663
      %s678 = sphi 0, %s664
      %s682 = sphi 0, %s682
      %s684 = sphi 0, %s682
      %s685 = sphi 0, %s684
      %s699 = sphi 0, %s685
      %s703 = sphi 0, %s703
      %s705 = sphi 0, %s703
      %s706 = sphi 0, %s705
      %s720 = sphi 0, %s706
      %s724 = sphi 0, %s724
      %s726 = sphi 0, %s724
      %s727 = sphi 0, %s726
      %s741 = sphi 0, %s727
      %s745 = sphi 0, %s745
      %s747 = sphi 0, %s745
      %s748 = sphi 0, %s747
      %s762 = sphi 0, %s748
      %s766 = sphi 0, %s766
      %s768 = sphi 0, %s766
      %s769 = sphi 0, %s768
      %s783 = sphi 0, %s769
      %s789 = sphi 0, %s791
      %s792 = sphi 0, %s789
      %s793 = sphi 0, %s792
      %s809 = sphi 0, %s793
      %s815 = sphi 0, %s817
      %s818 = sphi 0, %s815
      %s819 = sphi 0, %s818
      %s835 = sphi 0, %s819
      %s841 = sphi 0, %s843
      %s844 = sphi 0, %s841
      %s845 = sphi 0, %s844
      %s861 = sphi 0, %s845
      %s867 = sphi 0, %s869
      %s870 = sphi 0, %s867
      %s871 = sphi 0, %s870
      %s887 = sphi 0, %s871
    $region4: #{speech_decompose_forward.1} parent=1 // loop_header_branch
      %95 = sbr.rel (%p93) target = $region8
    $region5: #{speech_decompose_forward.1} parent=1 // loop_body
      %s97 = ssub.s32 %s92, 1
      %s98 = ssub.s32 %s92, 2
      %s99 = sadd.s32 %s92, 1
      %s100 = ssub.s32 %s92, %s99
      %p101 = scmp.eq.s32.totalorder %s100, 0
      %s103 = sadd.s32 %s102, 1
      %s104 = scalar_select %p101, %s102, %s103
      %p107 = pneg %p101
      %p108 = scmp.eq.s32.totalorder %s92, 1
      %p109 = por %p107, %p108
      %p110 = scmp.ne.s32.totalorder %s102, %s105
      %p111 = scmp.eq.s32.totalorder %s92, 0
      %p112 = por %p110, %p111
      %p113 = scmp.ne.s32.totalorder %s102, %s105
      %p114 = scmp.eq.s32.totalorder %s97, 1
      %p115 = por %p113, %p114
      %p116 = scmp.ne.s32.totalorder %s105, %s106
      %p117 = scmp.eq.s32.totalorder %s97, 0
      %p118 = por %p116, %p117
      %p119 = scmp.ne.s32.totalorder %s105, %s106
      %p120 = scmp.eq.s32.totalorder %s98, 1
      %p121 = por %p119, %p120
      %p123 = scmp.ne.s32.totalorder %s106, %s122
      %p124 = scmp.eq.s32.totalorder %s98, 0
      %p125 = por %p123, %p124
      %s126 = ssub.s32 %s92, %s99
      %p127 = scmp.eq.s32.totalorder %s126, 0
      %s129 = sadd.s32 %s128, 1
      %s130 = scalar_select %p127, %s128, %s129
      %p133 = pneg %p127
      %p134 = scmp.eq.s32.totalorder %s92, 1
      %p135 = por %p133, %p134
      %p136 = scmp.ne.s32.totalorder %s128, %s131
      %p137 = scmp.eq.s32.totalorder %s92, 0
      %p138 = por %p136, %p137
      %p139 = scmp.ne.s32.totalorder %s128, %s131
      %p140 = scmp.eq.s32.totalorder %s97, 1
      %p141 = por %p139, %p140
      %p142 = scmp.ne.s32.totalorder %s131, %s132
      %p143 = scmp.eq.s32.totalorder %s97, 0
      %p144 = por %p142, %p143
      %p145 = scmp.ne.s32.totalorder %s131, %s132
      %p146 = scmp.eq.s32.totalorder %s98, 1
      %p147 = por %p145, %p146
      %p149 = scmp.ne.s32.totalorder %s132, %s148
      %p150 = scmp.eq.s32.totalorder %s98, 0
      %p151 = por %p149, %p150
      %s152 = ssub.s32 %s92, %s99
      %p153 = scmp.eq.s32.totalorder %s152, 0
      %s155 = sadd.s32 %s154, 1
      %s156 = scalar_select %p153, %s154, %s155
      %p159 = pneg %p153
      %p160 = scmp.eq.s32.totalorder %s92, 1
      %p161 = por %p159, %p160
      %p162 = scmp.ne.s32.totalorder %s154, %s157
      %p163 = scmp.eq.s32.totalorder %s92, 0
      %p164 = por %p162, %p163
      %p165 = scmp.ne.s32.totalorder %s154, %s157
      %p166 = scmp.eq.s32.totalorder %s97, 1
      %p167 = por %p165, %p166
      %p168 = scmp.ne.s32.totalorder %s157, %s158
      %p169 = scmp.eq.s32.totalorder %s97, 0
      %p170 = por %p168, %p169
      %p171 = scmp.ne.s32.totalorder %s157, %s158
      %p172 = scmp.eq.s32.totalorder %s98, 1
      %p173 = por %p171, %p172
      %p175 = scmp.ne.s32.totalorder %s158, %s174
      %p176 = scmp.eq.s32.totalorder %s98, 0
      %p177 = por %p175, %p176
      %s179 = sadd.s32 %s178, 1
      %p182 = scmp.eq.s32.totalorder %s92, 1
      %p183 = scmp.ne.s32.totalorder %s178, %s180
      %p184 = scmp.eq.s32.totalorder %s92, 0
      %p185 = por %p183, %p184
      %p186 = scmp.ne.s32.totalorder %s178, %s180
      %p187 = scmp.eq.s32.totalorder %s97, 1
      %p188 = por %p186, %p187
      %p189 = scmp.ne.s32.totalorder %s180, %s181
      %p190 = scmp.eq.s32.totalorder %s97, 0
      %p191 = por %p189, %p190
      %p192 = scmp.ne.s32.totalorder %s180, %s181
      %p193 = scmp.eq.s32.totalorder %s98, 1
      %p194 = por %p192, %p193
      %p196 = scmp.ne.s32.totalorder %s181, %s195
      %p197 = scmp.eq.s32.totalorder %s98, 0
      %p198 = por %p196, %p197
      %s200 = sadd.s32 %s199, 1
      %p203 = scmp.eq.s32.totalorder %s92, 1
      %p204 = scmp.ne.s32.totalorder %s199, %s201
      %p205 = scmp.eq.s32.totalorder %s92, 0
      %p206 = por %p204, %p205
      %p207 = scmp.ne.s32.totalorder %s199, %s201
      %p208 = scmp.eq.s32.totalorder %s97, 1
      %p209 = por %p207, %p208
      %p210 = scmp.ne.s32.totalorder %s201, %s202
      %p211 = scmp.eq.s32.totalorder %s97, 0
      %p212 = por %p210, %p211
      %p213 = scmp.ne.s32.totalorder %s201, %s202
      %p214 = scmp.eq.s32.totalorder %s98, 1
      %p215 = por %p213, %p214
      %p217 = scmp.ne.s32.totalorder %s202, %s216
      %p218 = scmp.eq.s32.totalorder %s98, 0
      %p219 = por %p217, %p218
      %s221 = sadd.s32 %s220, 1
      %p224 = scmp.eq.s32.totalorder %s92, 1
      %p225 = scmp.ne.s32.totalorder %s220, %s222
      %p226 = scmp.eq.s32.totalorder %s92, 0
      %p227 = por %p225, %p226
      %p228 = scmp.ne.s32.totalorder %s220, %s222
      %p229 = scmp.eq.s32.totalorder %s97, 1
      %p230 = por %p228, %p229
      %p231 = scmp.ne.s32.totalorder %s222, %s223
      %p232 = scmp.eq.s32.totalorder %s97, 0
      %p233 = por %p231, %p232
      %p234 = scmp.ne.s32.totalorder %s222, %s223
      %p235 = scmp.eq.s32.totalorder %s98, 1
      %p236 = por %p234, %p235
      %p238 = scmp.ne.s32.totalorder %s223, %s237
      %p239 = scmp.eq.s32.totalorder %s98, 0
      %p240 = por %p238, %p239
      %s242 = sadd.s32 %s241, 1
      %p245 = scmp.eq.s32.totalorder %s92, 1
      %p246 = scmp.ne.s32.totalorder %s241, %s243
      %p247 = scmp.eq.s32.totalorder %s92, 0
      %p248 = por %p246, %p247
      %p249 = scmp.ne.s32.totalorder %s241, %s243
      %p250 = scmp.eq.s32.totalorder %s97, 1
      %p251 = por %p249, %p250
      %p252 = scmp.ne.s32.totalorder %s243, %s244
      %p253 = scmp.eq.s32.totalorder %s97, 0
      %p254 = por %p252, %p253
      %p255 = scmp.ne.s32.totalorder %s243, %s244
      %p256 = scmp.eq.s32.totalorder %s98, 1
      %p257 = por %p255, %p256
      %p259 = scmp.ne.s32.totalorder %s244, %s258
      %p260 = scmp.eq.s32.totalorder %s98, 0
      %p261 = por %p259, %p260
      %s263 = sadd.s32 %s262, 1
      %p266 = scmp.eq.s32.totalorder %s92, 1
      %p267 = scmp.ne.s32.totalorder %s262, %s264
      %p268 = scmp.eq.s32.totalorder %s92, 0
      %p269 = por %p267, %p268
      %p270 = scmp.ne.s32.totalorder %s262, %s264
      %p271 = scmp.eq.s32.totalorder %s97, 1
      %p272 = por %p270, %p271
      %p273 = scmp.ne.s32.totalorder %s264, %s265
      %p274 = scmp.eq.s32.totalorder %s97, 0
      %p275 = por %p273, %p274
      %p276 = scmp.ne.s32.totalorder %s264, %s265
      %p277 = scmp.eq.s32.totalorder %s98, 1
      %p278 = por %p276, %p277
      %p280 = scmp.ne.s32.totalorder %s265, %s279
      %p281 = scmp.eq.s32.totalorder %s98, 0
      %p282 = por %p280, %p281
      %s284 = sadd.s32 %s283, 1
      %p287 = scmp.eq.s32.totalorder %s92, 1
      %p288 = scmp.ne.s32.totalorder %s283, %s285
      %p289 = scmp.eq.s32.totalorder %s92, 0
      %p290 = por %p288, %p289
      %p291 = scmp.ne.s32.totalorder %s283, %s285
      %p292 = scmp.eq.s32.totalorder %s97, 1
      %p293 = por %p291, %p292
      %p294 = scmp.ne.s32.totalorder %s285, %s286
      %p295 = scmp.eq.s32.totalorder %s97, 0
      %p296 = por %p294, %p295
      %p297 = scmp.ne.s32.totalorder %s285, %s286
      %p298 = scmp.eq.s32.totalorder %s98, 1
      %p299 = por %p297, %p298
      %p301 = scmp.ne.s32.totalorder %s286, %s300
      %p302 = scmp.eq.s32.totalorder %s98, 0
      %p303 = por %p301, %p302
      %s305 = sadd.s32 %s304, 1
      %p308 = scmp.eq.s32.totalorder %s92, 1
      %p309 = scmp.ne.s32.totalorder %s304, %s306
      %p310 = scmp.eq.s32.totalorder %s92, 0
      %p311 = por %p309, %p310
      %p312 = scmp.ne.s32.totalorder %s304, %s306
      %p313 = scmp.eq.s32.totalorder %s97, 1
      %p314 = por %p312, %p313
      %p315 = scmp.ne.s32.totalorder %s306, %s307
      %p316 = scmp.eq.s32.totalorder %s97, 0
      %p317 = por %p315, %p316
      %p318 = scmp.ne.s32.totalorder %s306, %s307
      %p319 = scmp.eq.s32.totalorder %s98, 1
      %p320 = por %p318, %p319
      %p322 = scmp.ne.s32.totalorder %s307, %s321
      %p323 = scmp.eq.s32.totalorder %s98, 0
      %p324 = por %p322, %p323
      %s326 = sadd.s32 %s325, 1
      %p329 = scmp.eq.s32.totalorder %s92, 1
      %p330 = scmp.ne.s32.totalorder %s325, %s327
      %p331 = scmp.eq.s32.totalorder %s92, 0
      %p332 = por %p330, %p331
      %p333 = scmp.ne.s32.totalorder %s325, %s327
      %p334 = scmp.eq.s32.totalorder %s97, 1
      %p335 = por %p333, %p334
      %p336 = scmp.ne.s32.totalorder %s327, %s328
      %p337 = scmp.eq.s32.totalorder %s97, 0
      %p338 = por %p336, %p337
      %p339 = scmp.ne.s32.totalorder %s327, %s328
      %p340 = scmp.eq.s32.totalorder %s98, 1
      %p341 = por %p339, %p340
      %p343 = scmp.ne.s32.totalorder %s328, %s342
      %p344 = scmp.eq.s32.totalorder %s98, 0
      %p345 = por %p343, %p344
      %s347 = sadd.s32 %s346, 1
      %p350 = scmp.eq.s32.totalorder %s92, 1
      %p351 = scmp.ne.s32.totalorder %s346, %s348
      %p352 = scmp.eq.s32.totalorder %s92, 0
      %p353 = por %p351, %p352
      %p354 = scmp.ne.s32.totalorder %s346, %s348
      %p355 = scmp.eq.s32.totalorder %s97, 1
      %p356 = por %p354, %p355
      %p357 = scmp.ne.s32.totalorder %s348, %s349
      %p358 = scmp.eq.s32.totalorder %s97, 0
      %p359 = por %p357, %p358
      %p360 = scmp.ne.s32.totalorder %s348, %s349
      %p361 = scmp.eq.s32.totalorder %s98, 1
      %p362 = por %p360, %p361
      %p364 = scmp.ne.s32.totalorder %s349, %s363
      %p365 = scmp.eq.s32.totalorder %s98, 0
      %p366 = por %p364, %p365
      %s368 = sadd.s32 %s367, 1
      %p371 = scmp.eq.s32.totalorder %s92, 1
      %p372 = scmp.ne.s32.totalorder %s367, %s369
      %p373 = scmp.eq.s32.totalorder %s92, 0
      %p374 = por %p372, %p373
      %p375 = scmp.ne.s32.totalorder %s367, %s369
      %p376 = scmp.eq.s32.totalorder %s97, 1
      %p377 = por %p375, %p376
      %p378 = scmp.ne.s32.totalorder %s369, %s370
      %p379 = scmp.eq.s32.totalorder %s97, 0
      %p380 = por %p378, %p379
      %p381 = scmp.ne.s32.totalorder %s369, %s370
      %p382 = scmp.eq.s32.totalorder %s98, 1
      %p383 = por %p381, %p382
      %p385 = scmp.ne.s32.totalorder %s370, %s384
      %p386 = scmp.eq.s32.totalorder %s98, 0
      %p387 = por %p385, %p386
      %s389 = sadd.s32 %s388, 1
      %p392 = scmp.eq.s32.totalorder %s92, 1
      %p393 = scmp.ne.s32.totalorder %s388, %s390
      %p394 = scmp.eq.s32.totalorder %s92, 0
      %p395 = por %p393, %p394
      %p396 = scmp.ne.s32.totalorder %s388, %s390
      %p397 = scmp.eq.s32.totalorder %s97, 1
      %p398 = por %p396, %p397
      %p399 = scmp.ne.s32.totalorder %s390, %s391
      %p400 = scmp.eq.s32.totalorder %s97, 0
      %p401 = por %p399, %p400
      %p402 = scmp.ne.s32.totalorder %s390, %s391
      %p403 = scmp.eq.s32.totalorder %s98, 1
      %p404 = por %p402, %p403
      %p406 = scmp.ne.s32.totalorder %s391, %s405
      %p407 = scmp.eq.s32.totalorder %s98, 0
      %p408 = por %p406, %p407
      %s410 = sadd.s32 %s409, 1
      %p413 = scmp.eq.s32.totalorder %s92, 1
      %p414 = scmp.ne.s32.totalorder %s409, %s411
      %p415 = scmp.eq.s32.totalorder %s92, 0
      %p416 = por %p414, %p415
      %p417 = scmp.ne.s32.totalorder %s409, %s411
      %p418 = scmp.eq.s32.totalorder %s97, 1
      %p419 = por %p417, %p418
      %p420 = scmp.ne.s32.totalorder %s411, %s412
      %p421 = scmp.eq.s32.totalorder %s97, 0
      %p422 = por %p420, %p421
      %p423 = scmp.ne.s32.totalorder %s411, %s412
      %p424 = scmp.eq.s32.totalorder %s98, 1
      %p425 = por %p423, %p424
      %p427 = scmp.ne.s32.totalorder %s412, %s426
      %p428 = scmp.eq.s32.totalorder %s98, 0
      %p429 = por %p427, %p428
      %s431 = sadd.s32 %s430, 1
      %p434 = scmp.eq.s32.totalorder %s92, 1
      %p435 = scmp.ne.s32.totalorder %s430, %s432
      %p436 = scmp.eq.s32.totalorder %s92, 0
      %p437 = por %p435, %p436
      %p438 = scmp.ne.s32.totalorder %s430, %s432
      %p439 = scmp.eq.s32.totalorder %s97, 1
      %p440 = por %p438, %p439
      %p441 = scmp.ne.s32.totalorder %s432, %s433
      %p442 = scmp.eq.s32.totalorder %s97, 0
      %p443 = por %p441, %p442
      %p444 = scmp.ne.s32.totalorder %s432, %s433
      %p445 = scmp.eq.s32.totalorder %s98, 1
      %p446 = por %p444, %p445
      %p448 = scmp.ne.s32.totalorder %s433, %s447
      %p449 = scmp.eq.s32.totalorder %s98, 0
      %p450 = por %p448, %p449
      %s452 = sadd.s32 %s451, 1
      %p455 = scmp.eq.s32.totalorder %s92, 1
      %p456 = scmp.ne.s32.totalorder %s451, %s453
      %p457 = scmp.eq.s32.totalorder %s92, 0
      %p458 = por %p456, %p457
      %p459 = scmp.ne.s32.totalorder %s451, %s453
      %p460 = scmp.eq.s32.totalorder %s97, 1
      %p461 = por %p459, %p460
      %p462 = scmp.ne.s32.totalorder %s453, %s454
      %p463 = scmp.eq.s32.totalorder %s97, 0
      %p464 = por %p462, %p463
      %p465 = scmp.ne.s32.totalorder %s453, %s454
      %p466 = scmp.eq.s32.totalorder %s98, 1
      %p467 = por %p465, %p466
      %p469 = scmp.ne.s32.totalorder %s454, %s468
      %p470 = scmp.eq.s32.totalorder %s98, 0
      %p471 = por %p469, %p470
      %s473 = sadd.s32 %s472, 1
      %p476 = scmp.eq.s32.totalorder %s92, 1
      %p477 = scmp.ne.s32.totalorder %s472, %s474
      %p478 = scmp.eq.s32.totalorder %s92, 0
      %p479 = por %p477, %p478
      %p480 = scmp.ne.s32.totalorder %s472, %s474
      %p481 = scmp.eq.s32.totalorder %s97, 1
      %p482 = por %p480, %p481
      %p483 = scmp.ne.s32.totalorder %s474, %s475
      %p484 = scmp.eq.s32.totalorder %s97, 0
      %p485 = por %p483, %p484
      %p486 = scmp.ne.s32.totalorder %s474, %s475
      %p487 = scmp.eq.s32.totalorder %s98, 1
      %p488 = por %p486, %p487
      %p490 = scmp.ne.s32.totalorder %s475, %s489
      %p491 = scmp.eq.s32.totalorder %s98, 0
      %p492 = por %p490, %p491
      %s494 = sadd.s32 %s493, 1
      %p497 = scmp.eq.s32.totalorder %s92, 1
      %p498 = scmp.ne.s32.totalorder %s493, %s495
      %p499 = scmp.eq.s32.totalorder %s92, 0
      %p500 = por %p498, %p499
      %p501 = scmp.ne.s32.totalorder %s493, %s495
      %p502 = scmp.eq.s32.totalorder %s97, 1
      %p503 = por %p501, %p502
      %p504 = scmp.ne.s32.totalorder %s495, %s496
      %p505 = scmp.eq.s32.totalorder %s97, 0
      %p506 = por %p504, %p505
      %p507 = scmp.ne.s32.totalorder %s495, %s496
      %p508 = scmp.eq.s32.totalorder %s98, 1
      %p509 = por %p507, %p508
      %p511 = scmp.ne.s32.totalorder %s496, %s510
      %p512 = scmp.eq.s32.totalorder %s98, 0
      %p513 = por %p511, %p512
      %s515 = sadd.s32 %s514, 1
      %p518 = scmp.eq.s32.totalorder %s92, 1
      %p519 = scmp.ne.s32.totalorder %s514, %s516
      %p520 = scmp.eq.s32.totalorder %s92, 0
      %p521 = por %p519, %p520
      %p522 = scmp.ne.s32.totalorder %s514, %s516
      %p523 = scmp.eq.s32.totalorder %s97, 1
      %p524 = por %p522, %p523
      %p525 = scmp.ne.s32.totalorder %s516, %s517
      %p526 = scmp.eq.s32.totalorder %s97, 0
      %p527 = por %p525, %p526
      %p528 = scmp.ne.s32.totalorder %s516, %s517
      %p529 = scmp.eq.s32.totalorder %s98, 1
      %p530 = por %p528, %p529
      %p532 = scmp.ne.s32.totalorder %s517, %s531
      %p533 = scmp.eq.s32.totalorder %s98, 0
      %p534 = por %p532, %p533
      %s536 = sadd.s32 %s535, 1
      %p539 = scmp.eq.s32.totalorder %s92, 1
      %p540 = scmp.ne.s32.totalorder %s535, %s537
      %p541 = scmp.eq.s32.totalorder %s92, 0
      %p542 = por %p540, %p541
      %p543 = scmp.ne.s32.totalorder %s535, %s537
      %p544 = scmp.eq.s32.totalorder %s97, 1
      %p545 = por %p543, %p544
      %p546 = scmp.ne.s32.totalorder %s537, %s538
      %p547 = scmp.eq.s32.totalorder %s97, 0
      %p548 = por %p546, %p547
      %p549 = scmp.ne.s32.totalorder %s537, %s538
      %p550 = scmp.eq.s32.totalorder %s98, 1
      %p551 = por %p549, %p550
      %p553 = scmp.ne.s32.totalorder %s538, %s552
      %p554 = scmp.eq.s32.totalorder %s98, 0
      %p555 = por %p553, %p554
      %s557 = sadd.s32 %s556, 1
      %p560 = scmp.eq.s32.totalorder %s92, 1
      %p561 = scmp.ne.s32.totalorder %s556, %s558
      %p562 = scmp.eq.s32.totalorder %s92, 0
      %p563 = por %p561, %p562
      %p564 = scmp.ne.s32.totalorder %s556, %s558
      %p565 = scmp.eq.s32.totalorder %s97, 1
      %p566 = por %p564, %p565
      %p567 = scmp.ne.s32.totalorder %s558, %s559
      %p568 = scmp.eq.s32.totalorder %s97, 0
      %p569 = por %p567, %p568
      %p570 = scmp.ne.s32.totalorder %s558, %s559
      %p571 = scmp.eq.s32.totalorder %s98, 1
      %p572 = por %p570, %p571
      %p574 = scmp.ne.s32.totalorder %s559, %s573
      %p575 = scmp.eq.s32.totalorder %s98, 0
      %p576 = por %p574, %p575
      %s578 = sadd.s32 %s577, 1
      %p581 = scmp.eq.s32.totalorder %s92, 1
      %p582 = scmp.ne.s32.totalorder %s577, %s579
      %p583 = scmp.eq.s32.totalorder %s92, 0
      %p584 = por %p582, %p583
      %p585 = scmp.ne.s32.totalorder %s577, %s579
      %p586 = scmp.eq.s32.totalorder %s97, 1
      %p587 = por %p585, %p586
      %p588 = scmp.ne.s32.totalorder %s579, %s580
      %p589 = scmp.eq.s32.totalorder %s97, 0
      %p590 = por %p588, %p589
      %p591 = scmp.ne.s32.totalorder %s579, %s580
      %p592 = scmp.eq.s32.totalorder %s98, 1
      %p593 = por %p591, %p592
      %p595 = scmp.ne.s32.totalorder %s580, %s594
      %p596 = scmp.eq.s32.totalorder %s98, 0
      %p597 = por %p595, %p596
      %s599 = sadd.s32 %s598, 1
      %p602 = scmp.eq.s32.totalorder %s92, 1
      %p603 = scmp.ne.s32.totalorder %s598, %s600
      %p604 = scmp.eq.s32.totalorder %s92, 0
      %p605 = por %p603, %p604
      %p606 = scmp.ne.s32.totalorder %s598, %s600
      %p607 = scmp.eq.s32.totalorder %s97, 1
      %p608 = por %p606, %p607
      %p609 = scmp.ne.s32.totalorder %s600, %s601
      %p610 = scmp.eq.s32.totalorder %s97, 0
      %p611 = por %p609, %p610
      %p612 = scmp.ne.s32.totalorder %s600, %s601
      %p613 = scmp.eq.s32.totalorder %s98, 1
      %p614 = por %p612, %p613
      %p616 = scmp.ne.s32.totalorder %s601, %s615
      %p617 = scmp.eq.s32.totalorder %s98, 0
      %p618 = por %p616, %p617
      %s620 = sadd.s32 %s619, 1
      %p623 = scmp.eq.s32.totalorder %s92, 1
      %p624 = scmp.ne.s32.totalorder %s619, %s621
      %p625 = scmp.eq.s32.totalorder %s92, 0
      %p626 = por %p624, %p625
      %p627 = scmp.ne.s32.totalorder %s619, %s621
      %p628 = scmp.eq.s32.totalorder %s97, 1
      %p629 = por %p627, %p628
      %p630 = scmp.ne.s32.totalorder %s621, %s622
      %p631 = scmp.eq.s32.totalorder %s97, 0
      %p632 = por %p630, %p631
      %p633 = scmp.ne.s32.totalorder %s621, %s622
      %p634 = scmp.eq.s32.totalorder %s98, 1
      %p635 = por %p633, %p634
      %p637 = scmp.ne.s32.totalorder %s622, %s636
      %p638 = scmp.eq.s32.totalorder %s98, 0
      %p639 = por %p637, %p638
      %s641 = sadd.s32 %s640, 1
      %p644 = scmp.eq.s32.totalorder %s92, 1
      %p645 = scmp.ne.s32.totalorder %s640, %s642
      %p646 = scmp.eq.s32.totalorder %s92, 0
      %p647 = por %p645, %p646
      %p648 = scmp.ne.s32.totalorder %s640, %s642
      %p649 = scmp.eq.s32.totalorder %s97, 1
      %p650 = por %p648, %p649
      %p651 = scmp.ne.s32.totalorder %s642, %s643
      %p652 = scmp.eq.s32.totalorder %s97, 0
      %p653 = por %p651, %p652
      %p654 = scmp.ne.s32.totalorder %s642, %s643
      %p655 = scmp.eq.s32.totalorder %s98, 1
      %p656 = por %p654, %p655
      %p658 = scmp.ne.s32.totalorder %s643, %s657
      %p659 = scmp.eq.s32.totalorder %s98, 0
      %p660 = por %p658, %p659
      %s662 = sadd.s32 %s661, 1
      %p665 = scmp.eq.s32.totalorder %s92, 1
      %p666 = scmp.ne.s32.totalorder %s661, %s663
      %p667 = scmp.eq.s32.totalorder %s92, 0
      %p668 = por %p666, %p667
      %p669 = scmp.ne.s32.totalorder %s661, %s663
      %p670 = scmp.eq.s32.totalorder %s97, 1
      %p671 = por %p669, %p670
      %p672 = scmp.ne.s32.totalorder %s663, %s664
      %p673 = scmp.eq.s32.totalorder %s97, 0
      %p674 = por %p672, %p673
      %p675 = scmp.ne.s32.totalorder %s663, %s664
      %p676 = scmp.eq.s32.totalorder %s98, 1
      %p677 = por %p675, %p676
      %p679 = scmp.ne.s32.totalorder %s664, %s678
      %p680 = scmp.eq.s32.totalorder %s98, 0
      %p681 = por %p679, %p680
      %s683 = sadd.s32 %s682, 1
      %p686 = scmp.eq.s32.totalorder %s92, 1
      %p687 = scmp.ne.s32.totalorder %s682, %s684
      %p688 = scmp.eq.s32.totalorder %s92, 0
      %p689 = por %p687, %p688
      %p690 = scmp.ne.s32.totalorder %s682, %s684
      %p691 = scmp.eq.s32.totalorder %s97, 1
      %p692 = por %p690, %p691
      %p693 = scmp.ne.s32.totalorder %s684, %s685
      %p694 = scmp.eq.s32.totalorder %s97, 0
      %p695 = por %p693, %p694
      %p696 = scmp.ne.s32.totalorder %s684, %s685
      %p697 = scmp.eq.s32.totalorder %s98, 1
      %p698 = por %p696, %p697
      %p700 = scmp.ne.s32.totalorder %s685, %s699
      %p701 = scmp.eq.s32.totalorder %s98, 0
      %p702 = por %p700, %p701
      %s704 = sadd.s32 %s703, 1
      %p707 = scmp.eq.s32.totalorder %s92, 1
      %p708 = scmp.ne.s32.totalorder %s703, %s705
      %p709 = scmp.eq.s32.totalorder %s92, 0
      %p710 = por %p708, %p709
      %p711 = scmp.ne.s32.totalorder %s703, %s705
      %p712 = scmp.eq.s32.totalorder %s97, 1
      %p713 = por %p711, %p712
      %p714 = scmp.ne.s32.totalorder %s705, %s706
      %p715 = scmp.eq.s32.totalorder %s97, 0
      %p716 = por %p714, %p715
      %p717 = scmp.ne.s32.totalorder %s705, %s706
      %p718 = scmp.eq.s32.totalorder %s98, 1
      %p719 = por %p717, %p718
      %p721 = scmp.ne.s32.totalorder %s706, %s720
      %p722 = scmp.eq.s32.totalorder %s98, 0
      %p723 = por %p721, %p722
      %s725 = sadd.s32 %s724, 1
      %p728 = scmp.eq.s32.totalorder %s92, 1
      %p729 = scmp.ne.s32.totalorder %s724, %s726
      %p730 = scmp.eq.s32.totalorder %s92, 0
      %p731 = por %p729, %p730
      %p732 = scmp.ne.s32.totalorder %s724, %s726
      %p733 = scmp.eq.s32.totalorder %s97, 1
      %p734 = por %p732, %p733
      %p735 = scmp.ne.s32.totalorder %s726, %s727
      %p736 = scmp.eq.s32.totalorder %s97, 0
      %p737 = por %p735, %p736
      %p738 = scmp.ne.s32.totalorder %s726, %s727
      %p739 = scmp.eq.s32.totalorder %s98, 1
      %p740 = por %p738, %p739
      %p742 = scmp.ne.s32.totalorder %s727, %s741
      %p743 = scmp.eq.s32.totalorder %s98, 0
      %p744 = por %p742, %p743
      %s746 = sadd.s32 %s745, 1
      %p749 = scmp.eq.s32.totalorder %s92, 1
      %p750 = scmp.ne.s32.totalorder %s745, %s747
      %p751 = scmp.eq.s32.totalorder %s92, 0
      %p752 = por %p750, %p751
      %p753 = scmp.ne.s32.totalorder %s745, %s747
      %p754 = scmp.eq.s32.totalorder %s97, 1
      %p755 = por %p753, %p754
      %p756 = scmp.ne.s32.totalorder %s747, %s748
      %p757 = scmp.eq.s32.totalorder %s97, 0
      %p758 = por %p756, %p757
      %p759 = scmp.ne.s32.totalorder %s747, %s748
      %p760 = scmp.eq.s32.totalorder %s98, 1
      %p761 = por %p759, %p760
      %p763 = scmp.ne.s32.totalorder %s748, %s762
      %p764 = scmp.eq.s32.totalorder %s98, 0
      %p765 = por %p763, %p764
      %s767 = sadd.s32 %s766, 1
      %p770 = scmp.eq.s32.totalorder %s92, 1
      %p771 = scmp.ne.s32.totalorder %s766, %s768
      %p772 = scmp.eq.s32.totalorder %s92, 0
      %p773 = por %p771, %p772
      %p774 = scmp.ne.s32.totalorder %s766, %s768
      %p775 = scmp.eq.s32.totalorder %s97, 1
      %p776 = por %p774, %p775
      %p777 = scmp.ne.s32.totalorder %s768, %s769
      %p778 = scmp.eq.s32.totalorder %s97, 0
      %p779 = por %p777, %p778
      %p780 = scmp.ne.s32.totalorder %s768, %s769
      %p781 = scmp.eq.s32.totalorder %s98, 1
      %p782 = por %p780, %p781
      %p784 = scmp.ne.s32.totalorder %s769, %s783
      %p785 = scmp.eq.s32.totalorder %s98, 0
      %p786 = por %p784, %p785
      %s787 = ssub.s32 %s92, %s99
      %p788 = scmp.eq.s32.totalorder %s787, 0
      %s790 = sadd.s32 %s789, 1
      %s791 = scalar_select %p788, %s789, %s790
      %p794 = pneg %p788
      %p795 = scmp.eq.s32.totalorder %s92, 1
      %p796 = por %p794, %p795
      %p797 = scmp.ne.s32.totalorder %s789, %s792
      %p798 = scmp.eq.s32.totalorder %s92, 0
      %p799 = por %p797, %p798
      %p800 = scmp.ne.s32.totalorder %s789, %s792
      %p801 = scmp.eq.s32.totalorder %s97, 1
      %p802 = por %p800, %p801
      %p803 = scmp.ne.s32.totalorder %s792, %s793
      %p804 = scmp.eq.s32.totalorder %s97, 0
      %p805 = por %p803, %p804
      %p806 = scmp.ne.s32.totalorder %s792, %s793
      %p807 = scmp.eq.s32.totalorder %s98, 1
      %p808 = por %p806, %p807
      %p810 = scmp.ne.s32.totalorder %s793, %s809
      %p811 = scmp.eq.s32.totalorder %s98, 0
      %p812 = por %p810, %p811
      %s813 = ssub.s32 %s92, %s99
      %p814 = scmp.eq.s32.totalorder %s813, 0
      %s816 = sadd.s32 %s815, 1
      %s817 = scalar_select %p814, %s815, %s816
      %p820 = pneg %p814
      %p821 = scmp.eq.s32.totalorder %s92, 1
      %p822 = por %p820, %p821
      %p823 = scmp.ne.s32.totalorder %s815, %s818
      %p824 = scmp.eq.s32.totalorder %s92, 0
      %p825 = por %p823, %p824
      %p826 = scmp.ne.s32.totalorder %s815, %s818
      %p827 = scmp.eq.s32.totalorder %s97, 1
      %p828 = por %p826, %p827
      %p829 = scmp.ne.s32.totalorder %s818, %s819
      %p830 = scmp.eq.s32.totalorder %s97, 0
      %p831 = por %p829, %p830
      %p832 = scmp.ne.s32.totalorder %s818, %s819
      %p833 = scmp.eq.s32.totalorder %s98, 1
      %p834 = por %p832, %p833
      %p836 = scmp.ne.s32.totalorder %s819, %s835
      %p837 = scmp.eq.s32.totalorder %s98, 0
      %p838 = por %p836, %p837
      %s839 = ssub.s32 %s92, %s99
      %p840 = scmp.eq.s32.totalorder %s839, 0
      %s842 = sadd.s32 %s841, 1
      %s843 = scalar_select %p840, %s841, %s842
      %p846 = pneg %p840
      %p847 = scmp.eq.s32.totalorder %s92, 1
      %p848 = por %p846, %p847
      %p849 = scmp.ne.s32.totalorder %s841, %s844
      %p850 = scmp.eq.s32.totalorder %s92, 0
      %p851 = por %p849, %p850
      %p852 = scmp.ne.s32.totalorder %s841, %s844
      %p853 = scmp.eq.s32.totalorder %s97, 1
      %p854 = por %p852, %p853
      %p855 = scmp.ne.s32.totalorder %s844, %s845
      %p856 = scmp.eq.s32.totalorder %s97, 0
      %p857 = por %p855, %p856
      %p858 = scmp.ne.s32.totalorder %s844, %s845
      %p859 = scmp.eq.s32.totalorder %s98, 1
      %p860 = por %p858, %p859
      %p862 = scmp.ne.s32.totalorder %s845, %s861
      %p863 = scmp.eq.s32.totalorder %s98, 0
      %p864 = por %p862, %p863
      %s865 = ssub.s32 %s92, %s99
      %p866 = scmp.eq.s32.totalorder %s865, 0
      %s868 = sadd.s32 %s867, 1
      %s869 = scalar_select %p866, %s867, %s868
      %p872 = pneg %p866
      %p873 = scmp.eq.s32.totalorder %s92, 1
      %p874 = por %p872, %p873
      %p875 = scmp.ne.s32.totalorder %s867, %s870
      %p876 = scmp.eq.s32.totalorder %s92, 0
      %p877 = por %p875, %p876
      %p878 = scmp.ne.s32.totalorder %s867, %s870
      %p879 = scmp.eq.s32.totalorder %s97, 1
      %p880 = por %p878, %p879
      %p881 = scmp.ne.s32.totalorder %s870, %s871
      %p882 = scmp.eq.s32.totalorder %s97, 0
      %p883 = por %p881, %p882
      %p884 = scmp.ne.s32.totalorder %s870, %s871
      %p885 = scmp.eq.s32.totalorder %s98, 1
      %p886 = por %p884, %p885
      %p888 = scmp.ne.s32.totalorder %s871, %s887
      %p889 = scmp.eq.s32.totalorder %s98, 0
      %p890 = por %p888, %p889
      %p891 = scmp.le.s32.totalorder 1, %s92
      %p892 = scmp.lt.s32.totalorder %s92, 3
      %p893 = pnand %p891, %p892
      %p894 = pneg %p893
      // Predicated region
      $region9: #{speech_decompose_forward.1} parent=5 // pred_check
        _
      $region10: #{speech_decompose_forward.1} parent=5 // pred_check_branch
        %896 = sbr.rel (%p893) target = $region12
      $region11: #{speech_decompose_forward.1} parent=5 // pred_region
        %s897 = ssub.s32 %s92, 1
        // Predicated region
        $region13: #{speech_decompose_forward.1} parent=11 // pred_check
          %p898 = pneg %p191
        $region14: #{speech_decompose_forward.1} parent=11 // pred_check_branch
          %900 = sbr.rel (%p898) target = $region16
        $region15: #{speech_decompose_forward.1} parent=11 // pred_region
          _
        $region16: #{speech_decompose_forward.1} parent=11 // pred_fallthru
          _
        // Predicated region
        $region17: #{speech_decompose_forward.1} parent=11 // pred_check
          %p901 = pneg %p212
        $region18: #{speech_decompose_forward.1} parent=11 // pred_check_branch
          %903 = sbr.rel (%p901) target = $region20
        $region19: #{speech_decompose_forward.1} parent=11 // pred_region
          _
        $region20: #{speech_decompose_forward.1} parent=11 // pred_fallthru
          _
        // Predicated region
        $region21: #{speech_decompose_forward.1} parent=11 // pred_check
          %p904 = pneg %p233
        $region22: #{speech_decompose_forward.1} parent=11 // pred_check_branch
          %906 = sbr.rel (%p904) target = $region24
        $region23: #{speech_decompose_forward.1} parent=11 // pred_region
          _
        $region24: #{speech_decompose_forward.1} parent=11 // pred_fallthru
          _
        // Predicated region
        $region25: #{speech_decompose_forward.1} parent=11 // pred_check
          %p907 = pneg %p254
        $region26: #{speech_decompose_forward.1} parent=11 // pred_check_branch
          %909 = sbr.rel (%p907) target = $region28
        $region27: #{speech_decompose_forward.1} parent=11 // pred_region
          _
        $region28: #{speech_decompose_forward.1} parent=11 // pred_fallthru
          _
        // Predicated region
        $region29: #{speech_decompose_forward.1} parent=11 // pred_check
          %p910 = pneg %p275
        $region30: #{speech_decompose_forward.1} parent=11 // pred_check_branch
          %912 = sbr.rel (%p910) target = $region32
        $region31: #{speech_decompose_forward.1} parent=11 // pred_region
          _
        $region32: #{speech_decompose_forward.1} parent=11 // pred_fallthru
          _
        // Predicated region
        $region33: #{speech_decompose_forward.1} parent=11 // pred_check
          %p913 = pneg %p296
        $region34: #{speech_decompose_forward.1} parent=11 // pred_check_branch
          %915 = sbr.rel (%p913) target = $region36
        $region35: #{speech_decompose_forward.1} parent=11 // pred_region
          _
        $region36: #{speech_decompose_forward.1} parent=11 // pred_fallthru
          _
        // Predicated region
        $region37: #{speech_decompose_forward.1} parent=11 // pred_check
          %p916 = pneg %p317
        $region38: #{speech_decompose_forward.1} parent=11 // pred_check_branch
          %918 = sbr.rel (%p916) target = $region40
        $region39: #{speech_decompose_forward.1} parent=11 // pred_region
          _
        $region40: #{speech_decompose_forward.1} parent=11 // pred_fallthru
          _
        // Predicated region
        $region41: #{speech_decompose_forward.1} parent=11 // pred_check
          %p919 = pneg %p338
        $region42: #{speech_decompose_forward.1} parent=11 // pred_check_branch
          %921 = sbr.rel (%p919) target = $region44
        $region43: #{speech_decompose_forward.1} parent=11 // pred_region
          _
        $region44: #{speech_decompose_forward.1} parent=11 // pred_fallthru
          _
        // Predicated region
        $region45: #{speech_decompose_forward.1} parent=11 // pred_check
          %p922 = pneg %p359
        $region46: #{speech_decompose_forward.1} parent=11 // pred_check_branch
          %924 = sbr.rel (%p922) target = $region48
        $region47: #{speech_decompose_forward.1} parent=11 // pred_region
          _
        $region48: #{speech_decompose_forward.1} parent=11 // pred_fallthru
          _
        // Predicated region
        $region49: #{speech_decompose_forward.1} parent=11 // pred_check
          %p925 = pneg %p380
        $region50: #{speech_decompose_forward.1} parent=11 // pred_check_branch
          %927 = sbr.rel (%p925) target = $region52
        $region51: #{speech_decompose_forward.1} parent=11 // pred_region
          _
        $region52: #{speech_decompose_forward.1} parent=11 // pred_fallthru
          _
        // Predicated region
        $region53: #{speech_decompose_forward.1} parent=11 // pred_check
          %p928 = pneg %p401
        $region54: #{speech_decompose_forward.1} parent=11 // pred_check_branch
          %930 = sbr.rel (%p928) target = $region56
        $region55: #{speech_decompose_forward.1} parent=11 // pred_region
          _
        $region56: #{speech_decompose_forward.1} parent=11 // pred_fallthru
          _
        // Predicated region
        $region57: #{speech_decompose_forward.1} parent=11 // pred_check
          %p931 = pneg %p422
        $region58: #{speech_decompose_forward.1} parent=11 // pred_check_branch
          %933 = sbr.rel (%p931) target = $region60
        $region59: #{speech_decompose_forward.1} parent=11 // pred_region
          _
        $region60: #{speech_decompose_forward.1} parent=11 // pred_fallthru
          _
        // Predicated region
        $region61: #{speech_decompose_forward.1} parent=11 // pred_check
          %p934 = pneg %p443
        $region62: #{speech_decompose_forward.1} parent=11 // pred_check_branch
          %936 = sbr.rel (%p934) target = $region64
        $region63: #{speech_decompose_forward.1} parent=11 // pred_region
          _
        $region64: #{speech_decompose_forward.1} parent=11 // pred_fallthru
          _
        // Predicated region
        $region65: #{speech_decompose_forward.1} parent=11 // pred_check
          %p937 = pneg %p464
        $region66: #{speech_decompose_forward.1} parent=11 // pred_check_branch
          %939 = sbr.rel (%p937) target = $region68
        $region67: #{speech_decompose_forward.1} parent=11 // pred_region
          _
        $region68: #{speech_decompose_forward.1} parent=11 // pred_fallthru
          _
        // Predicated region
        $region69: #{speech_decompose_forward.1} parent=11 // pred_check
          %p940 = pneg %p485
        $region70: #{speech_decompose_forward.1} parent=11 // pred_check_branch
          %942 = sbr.rel (%p940) target = $region72
        $region71: #{speech_decompose_forward.1} parent=11 // pred_region
          _
        $region72: #{speech_decompose_forward.1} parent=11 // pred_fallthru
          _
        // Predicated region
        $region73: #{speech_decompose_forward.1} parent=11 // pred_check
          %p943 = pneg %p506
        $region74: #{speech_decompose_forward.1} parent=11 // pred_check_branch
          %945 = sbr.rel (%p943) target = $region76
        $region75: #{speech_decompose_forward.1} parent=11 // pred_region
          _
        $region76: #{speech_decompose_forward.1} parent=11 // pred_fallthru
          _
        // Predicated region
        $region77: #{speech_decompose_forward.1} parent=11 // pred_check
          %p946 = pneg %p527
        $region78: #{speech_decompose_forward.1} parent=11 // pred_check_branch
          %948 = sbr.rel (%p946) target = $region80
        $region79: #{speech_decompose_forward.1} parent=11 // pred_region
          _
        $region80: #{speech_decompose_forward.1} parent=11 // pred_fallthru
          _
        // Predicated region
        $region81: #{speech_decompose_forward.1} parent=11 // pred_check
          %p949 = pneg %p548
        $region82: #{speech_decompose_forward.1} parent=11 // pred_check_branch
          %951 = sbr.rel (%p949) target = $region84
        $region83: #{speech_decompose_forward.1} parent=11 // pred_region
          _
        $region84: #{speech_decompose_forward.1} parent=11 // pred_fallthru
          _
        // Predicated region
        $region85: #{speech_decompose_forward.1} parent=11 // pred_check
          %p952 = pneg %p569
        $region86: #{speech_decompose_forward.1} parent=11 // pred_check_branch
          %954 = sbr.rel (%p952) target = $region88
        $region87: #{speech_decompose_forward.1} parent=11 // pred_region
          _
        $region88: #{speech_decompose_forward.1} parent=11 // pred_fallthru
          _
        // Predicated region
        $region89: #{speech_decompose_forward.1} parent=11 // pred_check
          %p955 = pneg %p590
        $region90: #{speech_decompose_forward.1} parent=11 // pred_check_branch
          %957 = sbr.rel (%p955) target = $region92
        $region91: #{speech_decompose_forward.1} parent=11 // pred_region
          _
        $region92: #{speech_decompose_forward.1} parent=11 // pred_fallthru
          _
        // Predicated region
        $region93: #{speech_decompose_forward.1} parent=11 // pred_check
          %p958 = pneg %p611
        $region94: #{speech_decompose_forward.1} parent=11 // pred_check_branch
          %960 = sbr.rel (%p958) target = $region96
        $region95: #{speech_decompose_forward.1} parent=11 // pred_region
          _
        $region96: #{speech_decompose_forward.1} parent=11 // pred_fallthru
          _
        // Predicated region
        $region97: #{speech_decompose_forward.1} parent=11 // pred_check
          %p961 = pneg %p632
        $region98: #{speech_decompose_forward.1} parent=11 // pred_check_branch
          %963 = sbr.rel (%p961) target = $region100
        $region99: #{speech_decompose_forward.1} parent=11 // pred_region
          _
        $region100: #{speech_decompose_forward.1} parent=11 // pred_fallthru
          _
        // Predicated region
        $region101: #{speech_decompose_forward.1} parent=11 // pred_check
          %p964 = pneg %p653
        $region102: #{speech_decompose_forward.1} parent=11 // pred_check_branch
          %966 = sbr.rel (%p964) target = $region104
        $region103: #{speech_decompose_forward.1} parent=11 // pred_region
          _
        $region104: #{speech_decompose_forward.1} parent=11 // pred_fallthru
          _
        // Predicated region
        $region105: #{speech_decompose_forward.1} parent=11 // pred_check
          %p967 = pneg %p674
        $region106: #{speech_decompose_forward.1} parent=11 // pred_check_branch
          %969 = sbr.rel (%p967) target = $region108
        $region107: #{speech_decompose_forward.1} parent=11 // pred_region
          _
        $region108: #{speech_decompose_forward.1} parent=11 // pred_fallthru
          _
        // Predicated region
        $region109: #{speech_decompose_forward.1} parent=11 // pred_check
          %p970 = pneg %p695
        $region110: #{speech_decompose_forward.1} parent=11 // pred_check_branch
          %972 = sbr.rel (%p970) target = $region112
        $region111: #{speech_decompose_forward.1} parent=11 // pred_region
          _
        $region112: #{speech_decompose_forward.1} parent=11 // pred_fallthru
          _
        // Predicated region
        $region113: #{speech_decompose_forward.1} parent=11 // pred_check
          %p973 = pneg %p716
        $region114: #{speech_decompose_forward.1} parent=11 // pred_check_branch
          %975 = sbr.rel (%p973) target = $region116
        $region115: #{speech_decompose_forward.1} parent=11 // pred_region
          _
        $region116: #{speech_decompose_forward.1} parent=11 // pred_fallthru
          _
        // Predicated region
        $region117: #{speech_decompose_forward.1} parent=11 // pred_check
          %p976 = pneg %p737
        $region118: #{speech_decompose_forward.1} parent=11 // pred_check_branch
          %978 = sbr.rel (%p976) target = $region120
        $region119: #{speech_decompose_forward.1} parent=11 // pred_region
          _
        $region120: #{speech_decompose_forward.1} parent=11 // pred_fallthru
          _
        // Predicated region
        $region121: #{speech_decompose_forward.1} parent=11 // pred_check
          %p979 = pneg %p758
        $region122: #{speech_decompose_forward.1} parent=11 // pred_check_branch
          %981 = sbr.rel (%p979) target = $region124
        $region123: #{speech_decompose_forward.1} parent=11 // pred_region
          _
        $region124: #{speech_decompose_forward.1} parent=11 // pred_fallthru
          _
        // Predicated region
        $region125: #{speech_decompose_forward.1} parent=11 // pred_check
          %p982 = pneg %p779
        $region126: #{speech_decompose_forward.1} parent=11 // pred_check_branch
          %984 = sbr.rel (%p982) target = $region128
        $region127: #{speech_decompose_forward.1} parent=11 // pred_region
          _
        $region128: #{speech_decompose_forward.1} parent=11 // pred_fallthru
          _
      $region12: #{speech_decompose_forward.1} parent=5 // pred_fallthru
        _
      %p985 = scmp.lt.s32.totalorder %s92, 2
      // Predicated region
      $region129: #{speech_decompose_forward.1} parent=5 // pred_check
        %p986 = pneg %p985
      $region130: #{speech_decompose_forward.1} parent=5 // pred_check_branch
        %988 = sbr.rel (%p986) target = $region132
      $region131: #{speech_decompose_forward.1} parent=5 // pred_region
        // Predicated region
        $region133: #{speech_decompose_forward.1} parent=131 // pred_check
          %p989 = pneg %p112
        $region134: #{speech_decompose_forward.1} parent=131 // pred_check_branch
          %991 = sbr.rel (%p989) target = $region136
        $region135: #{speech_decompose_forward.1} parent=131 // pred_region
          %p992 = scmp.lt.s32.totalorder %s92, 1
          %s993 = scalar_select %p992, %s92, 1
          %s994 = smul.addr %s993, 2
          %s995 = smul.addr %s994, 8
          %s996 = scalar_lea.vmem %s3, %s995
        $region136: #{speech_decompose_forward.1} parent=131 // pred_fallthru
          _
        // Predicated region
        $region137: #{speech_decompose_forward.1} parent=131 // pred_check
          %p997 = pneg %p138
        $region138: #{speech_decompose_forward.1} parent=131 // pred_check_branch
          %999 = sbr.rel (%p997) target = $region140
        $region139: #{speech_decompose_forward.1} parent=131 // pred_region
          %p1000 = scmp.lt.s32.totalorder %s92, 1
          %s1001 = scalar_select %p1000, %s92, 1
          %s1002 = scalar_lea.vmem %s5, %s1001
        $region140: #{speech_decompose_forward.1} parent=131 // pred_fallthru
          _
        // Predicated region
        $region141: #{speech_decompose_forward.1} parent=131 // pred_check
          %p1003 = pneg %p164
        $region142: #{speech_decompose_forward.1} parent=131 // pred_check_branch
          %1005 = sbr.rel (%p1003) target = $region144
        $region143: #{speech_decompose_forward.1} parent=131 // pred_region
          %p1006 = scmp.lt.s32.totalorder %s92, 1
          %s1007 = scalar_select %p1006, %s92, 1
          %s1008 = scalar_lea.vmem %s7, %s1007
        $region144: #{speech_decompose_forward.1} parent=131 // pred_fallthru
          _
      $region132: #{speech_decompose_forward.1} parent=5 // pred_fallthru
        _
      %p1009 = scmp.le.s32.totalorder 1, %s92
      %p1010 = scmp.lt.s32.totalorder %s92, 3
      %p1011 = pnand %p1009, %p1010
      %p1012 = pneg %p1011
      // Predicated region
      $region145: #{speech_decompose_forward.1} parent=5 // pred_check
        _
      $region146: #{speech_decompose_forward.1} parent=5 // pred_check_branch
        %1014 = sbr.rel (%p1011) target = $region148
      $region147: #{speech_decompose_forward.1} parent=5 // pred_region
        %s1015 = ssub.s32 %s92, 1
        %p1016 = scmp.lt.s32.totalorder %s97, 1
        %s1017 = scalar_select %p1016, %s97, 1
        %s1018 = smul.addr %s1017, 2
        %s1019 = smul.addr %s1018, 8
        %s1020 = scalar_lea.vmem %s3, %s1019
        %p1021 = pneg %p118
        %p1022 = pneg %p115
        %p1023 = scmp.lt.s32.totalorder %s97, 1
        %s1024 = scalar_select %p1023, %s97, 1
        %s1025 = scalar_lea.vmem %s5, %s1024
        %p1026 = pneg %p144
        %p1027 = pneg %p141
        %p1028 = scmp.lt.s32.totalorder %s97, 1
        %s1029 = scalar_select %p1028, %s97, 1
        %s1030 = scalar_lea.vmem %s7, %s1029
        %p1031 = pneg %p170
        %p1032 = pneg %p167
        %p1033 = pneg %p191
        %p1034 = pneg %p188
        %p1035 = pneg %p212
        %p1036 = pneg %p209
        %p1037 = pneg %p233
        %p1038 = pneg %p230
        %p1039 = pneg %p254
        %p1040 = pneg %p251
        %p1041 = pneg %p275
        %p1042 = pneg %p272
        %p1043 = pneg %p296
        %p1044 = pneg %p293
        %p1045 = pneg %p317
        %p1046 = pneg %p314
        %p1047 = pneg %p338
        %p1048 = pneg %p335
        %p1049 = pneg %p359
        %p1050 = pneg %p356
        %p1051 = pneg %p380
        %p1052 = pneg %p377
        %p1053 = pneg %p401
        %p1054 = pneg %p398
        %p1055 = pneg %p422
        %p1056 = pneg %p419
        %p1057 = pneg %p443
        %p1058 = pneg %p440
        %p1059 = pneg %p464
        %p1060 = pneg %p461
        %p1061 = pneg %p485
        %p1062 = pneg %p482
        %p1063 = pneg %p506
        %p1064 = pneg %p503
        %p1065 = pneg %p527
        %p1066 = pneg %p524
        %p1067 = pneg %p548
        %p1068 = pneg %p545
        %p1069 = pneg %p569
        %p1070 = pneg %p566
        %p1071 = pneg %p590
        %p1072 = pneg %p587
        %p1073 = pneg %p611
        %p1074 = pneg %p608
        %p1075 = pneg %p632
        %p1076 = pneg %p629
        %p1077 = pneg %p653
        %p1078 = pneg %p650
        %p1079 = pneg %p674
        %p1080 = pneg %p671
        %p1081 = pneg %p695
        %p1082 = pneg %p692
        %p1083 = pneg %p716
        %p1084 = pneg %p713
        %p1085 = pneg %p737
        %p1086 = pneg %p734
        %p1087 = pneg %p758
        %p1088 = pneg %p755
        %p1089 = pneg %p779
        %p1090 = pneg %p776
        %p1091 = pneg %p805
        %p1092 = pneg %p802
        %s1093 = sand.u32 %s792, 1
        %s1094 = scalar_lea.sflag [#allocation5], %s1093
        %s1095 = sand.u32 %s792, 1
        %s1096 = smul.addr %s1095, 8
        %s1097 = scalar_lea.vmem [#allocation4], %s1096
        %p1098 = pneg %p831
        %p1099 = pneg %p828
        %s1100 = sand.u32 %s818, 1
        %s1101 = scalar_lea.sflag [#allocation7], %s1100
        %s1102 = sand.u32 %s818, 1
        %s1103 = smul.addr %s1102, 8
        %s1104 = scalar_lea.vmem [#allocation6], %s1103
        %p1105 = pneg %p857
        %p1106 = pneg %p854
        %p1107 = scmp.lt.s32.totalorder %s97, 1
        %s1108 = scalar_select %p1107, %s97, 1
        %s1109 = scalar_lea.vmem %s71, %s1108
        %p1110 = pneg %p883
        %p1111 = pneg %p880
        %p1112 = scmp.lt.s32.totalorder %s97, 1
        %s1113 = scalar_select %p1112, %s97, 1
        %s1114 = scalar_lea.vmem %s73, %s1113
        %p1115 = scmp.lt.s32.totalorder %s97, 1
        %s1116 = scalar_select %p1115, %s97, 1
        %s1117 = smul.addr %s1116, 2
        %s1118 = smul.addr %s1117, 8
        %s1119 = scalar_lea.vmem %s3, %s1118
        %p1120 = scmp.lt.s32.totalorder %s97, 1
        %s1121 = scalar_select %p1120, %s97, 1
        %s1122 = scalar_lea.vmem %s5, %s1121
        %p1123 = scmp.lt.s32.totalorder %s97, 1
        %s1124 = scalar_select %p1123, %s97, 1
        %s1125 = scalar_lea.vmem %s7, %s1124
        %p1126 = scmp.lt.s32.totalorder %s97, 1
        %s1127 = scalar_select %p1126, %s97, 1
        %s1128 = scalar_lea.vmem %s71, %s1127
        %p1129 = scmp.lt.s32.totalorder %s97, 1
        %s1130 = scalar_select %p1129, %s97, 1
        %s1131 = scalar_lea.vmem %s73, %s1130
        %v1133 = vlaneseq
        %v1134 = vshrl.u32 %v1133, 7
        %v1135 = vadd.s32 %v1134, 8
        %v1136 = vadd.s32 %v1134, 4294967295
        %v1137 = vadd.s32 %v1135, 4294967295
        %vm1138 = vcmp.ge.s32.totalorder %v1136, 0
        %vm1139 = vcmp.ge.s32.totalorder %v1137, 0
        %vm1140 = vcmp.lt.s32.totalorder %v1136, 16
        %vm1141 = vcmp.lt.s32.totalorder %v1137, 16
        %vm1142 = vmand %vm1138, %vm1140
        %vm1143 = vmand %vm1139, %vm1141
        %v1144 = vsel %vm1142, 1, 0
        %v1145 = vsel %vm1143, 1, 0
        %v1146 = vcvt.s32.f32 %v1144
        %v1147 = vcvt.s32.f32 %v1145
        %v1148 = vadd.s32 %v1134, 1
        %v1149 = vadd.s32 %v1135, 1
        %vm1150 = vcmp.ge.s32.totalorder %v1148, 0
        %vm1151 = vcmp.ge.s32.totalorder %v1149, 0
        %vm1152 = vcmp.lt.s32.totalorder %v1148, 16
        %vm1153 = vcmp.lt.s32.totalorder %v1149, 16
        %vm1154 = vmand %vm1150, %vm1152
        %vm1155 = vmand %vm1151, %vm1153
        %v1156 = vsel %vm1154, 1, 0
        %v1157 = vsel %vm1155, 1, 0
        %v1158 = vcvt.s32.f32 %v1156
        %v1159 = vcvt.s32.f32 %v1157
        %v1160 = vadd.s32 %v1134, 2
        %v1161 = vadd.s32 %v1135, 2
        %vm1162 = vcmp.ge.s32.totalorder %v1160, 0
        %vm1163 = vcmp.ge.s32.totalorder %v1161, 0
        %vm1164 = vcmp.lt.s32.totalorder %v1160, 16
        %vm1165 = vcmp.lt.s32.totalorder %v1161, 16
        %vm1166 = vmand %vm1162, %vm1164
        %vm1167 = vmand %vm1163, %vm1165
        %v1168 = vsel %vm1166, 1, 0
        %v1169 = vsel %vm1167, 1, 0
        %v1170 = vcvt.s32.f32 %v1168
        %v1171 = vcvt.s32.f32 %v1169
        %v1172 = vadd.s32 %v1134, 4294967294
        %vm1173 = vcmp.ge.s32.totalorder %v1172, 0
        %vm1174 = vcmp.lt.s32.totalorder %v1172, 8
        %vm1175 = vmand %vm1173, %vm1174
        %v1176 = vsel %vm1175, 1, 0
        %v1177 = vcvt.s32.f32 %v1176
        %vm1178 = vcmp.lt.s32.totalorder %v1136, 8
        %vm1179 = vmand %vm1138, %vm1178
        %v1180 = vsel %vm1179, 1, 0
        %v1181 = vcvt.s32.f32 %v1180
        %vm1182 = vcmp.lt.s32.totalorder %v1148, 8
        %vm1183 = vmand %vm1150, %vm1182
        %v1184 = vsel %vm1183, 1, 0
        %v1185 = vcvt.s32.f32 %v1184
        %vm1186 = vcmp.lt.s32.totalorder %v1160, 8
        %vm1187 = vmand %vm1162, %vm1186
        %v1188 = vsel %vm1187, 1, 0
        %v1189 = vcvt.s32.f32 %v1188
        %v1190 = vld [vmem:[%s1119] sm:$0xff]
        %v1191 = vld [vmem:[%s1119 + $0x8] sm:$0xff]
        %v1192 = vpack.c.bf16 %v1191, %v1190
        %v1193 = vld [vmem:[%s11] sm:$0x1]
        %v1194 = vld [vmem:[%s9] sm:$0xff]
        %v1195 = vld [vmem:[%s9 + $0x8] sm:$0xff]
        %v1196 = vld [vmem:[%s9 + $0x10] sm:$0xff]
        %v1197 = vld [vmem:[%s9 + $0x18] sm:$0xff]
        %v1202 = vunpack.c.l.b16 %v1194
        %v1203 = vunpack.c.h.b16 %v1194
        %v1204 = vunpack.c.l.b16 %v1195
        %v1205 = vunpack.c.h.b16 %v1195
        %v1206 = vunpack.c.l.b16 %v1196
        %v1207 = vunpack.c.h.b16 %v1196
        %v1208 = vunpack.c.l.b16 %v1197
        %v1209 = vunpack.c.h.b16 %v1197
        %v1210 = vpack.c.b16 %v1204, %v1202
        %v1211 = vpack.c.b16 %v1205, %v1203
        %v1212 = vpack.c.b16 %v1208, %v1206
        %v1213 = vpack.c.b16 %v1209, %v1207
        %vm1218 = vcmask 261120
        %v1220 = vsel %vm1218, %v1192, 0
        %1222 = vmatprep.subr.bf16.mxu0 0
        %1223 = vmatpush1.bf16.msra.mxu0 0
        %1224 = vmatprep.subr.bf16.mxu0 0
        %1225 = vmatpush1.bf16.msra.mxu0 0
        %1226 = vmatprep.subr.bf16.mxu0 0
        %1227 = vmatpush1.bf16.msra.mxu0 0
        %1228 = vmatprep.subr.bf16.mxu0 0
        %1229 = vmatpush1.bf16.msra.mxu0 0
        %1230 = vmatprep.subr.bf16.mxu0 0
        %1231 = vmatpush1.bf16.msra.mxu0 0
        %1232 = vmatprep.subr.bf16.mxu0 0
        %1233 = vmatpush1.bf16.msra.mxu0 0
        %1234 = vmatprep.subr.bf16.mxu0 %v1213
        %1235 = vmatpush1.bf16.msra.mxu0 %v1212
        %1236 = vmatprep.subr.bf16.mxu0 %v1211
        %1237 = vmatpush1.bf16.msra.mxu0 %v1210
        %1238 = vmatprep.subr.bf16.mxu0 0
        %1239 = vmatpush2.bf16.msra.mxu0 0
        %1240 = vmatprep.subr.bf16.mxu0 0
        %1241 = vmatpush2.bf16.msra.mxu0 0
        %1242 = vmatprep.subr.bf16.mxu0 0
        %1243 = vmatpush2.bf16.msra.mxu0 0
        %1244 = vmatprep.subr.bf16.mxu0 0
        %1245 = vmatpush2.bf16.msra.mxu0 0
        %1246 = vmatprep.subr.bf16.mxu0 0
        %1247 = vmatpush2.bf16.msra.mxu0 0
        %1248 = vmatprep.subr.bf16.mxu0 0
        %1249 = vmatpush2.bf16.msra.mxu0 0
        %1250 = vmatprep.subr.bf16.mxu0 0
        %1251 = vmatpush2.bf16.msra.mxu0 0
        %1252 = vmatprep.subr.bf16.mxu0 0
        %1253 = vmatpush2.bf16.msra.mxu0 0
        %1254 = vmatprep.mubr.bf16.mxu0 0
        %1255 = vmatmul.mubr.bf16.gmra.mxu0 %v1220
        %v1256 = vpop.f32.mrf.mxu0
        %v1257 = vadd.f32 0.0, %v1256
        %v1258 = vpop.f32.mrf.mxu0
        %v1259 = vadd.f32 0.0, %v1258
        %v1260 = vpop.f32.mrf.mxu0
        %v1261 = vadd.f32 0.0, %v1260
        %v1262 = vpop.f32.mrf.mxu0
        %v1263 = vadd.f32 0.0, %v1262
        %1264 = vdwg.mxu0
        %v1265 = vrot.slane %v1257, 7
        %v1266 = vrot.slane %v1261, 7
        %vm1267 = vcmp.lt.s32.totalorder %v1134, 1
        %v1268 = vsel %vm1267, %v1265, %v1266
        %v1269 = vsel %vm1267, %v1266, %v1265
        %v1270 = vmul.f32 %v1146, %v1269
        %v1271 = vmul.f32 %v1147, %v1268
        %v1272 = vadd.f32 %v1270, 0.0
        %v1273 = vadd.f32 %v1271, 0.0
        %1276 = vrot.lane.b32.xlu0 %v1257, 64
        %v1277 = vpop.permute.xlu0 %1276
        %1278 = vrot.lane.b32.xlu0 %v1261, 64
        %v1279 = vpop.permute.xlu0 %1278
        %v1282 = vadd.f32 %v1272, %v1277
        %v1283 = vadd.f32 %v1273, %v1279
        %v1284 = vrot.slane %v1259, 1
        %v1285 = vrot.slane %v1263, 1
        %vm1286 = vcmp.lt.s32.totalorder %v1134, 7
        %v1287 = vsel %vm1286, %v1284, %v1285
        %v1288 = vsel %vm1286, %v1285, %v1284
        %v1289 = vmul.f32 %v1158, %v1287
        %v1290 = vmul.f32 %v1159, %v1288
        %v1291 = vadd.f32 %v1282, %v1289
        %v1292 = vadd.f32 %v1283, %v1290
        %1295 = vrot.lane.b32.xlu0 %v1259, 64
        %v1296 = vpop.permute.xlu0 %1295
        %1297 = vrot.lane.b32.xlu0 %v1263, 64
        %v1298 = vpop.permute.xlu0 %1297
        %v1301 = vrot.slane %v1296, 2
        %v1302 = vrot.slane %v1298, 2
        %vm1303 = vcmp.lt.s32.totalorder %v1134, 6
        %v1304 = vsel %vm1303, %v1301, %v1302
        %v1305 = vsel %vm1303, %v1302, %v1301
        %v1306 = vmul.f32 %v1170, %v1304
        %v1307 = vmul.f32 %v1171, %v1305
        %v1308 = vadd.f32 %v1291, %v1306
        %v1309 = vadd.f32 %v1292, %v1307
        %v1311 = vlaneseq
        %v1312 = vshrl.u32 %v1311, 7
        %v1313 = vsub.s32 0, %v1312
        %v1314 = vrot.slane %v1193, %v1313
        %v1316 = vadd.f32 %v1308, %v1314
        %v1317 = vadd.f32 %v1309, %v1314
        %v1318 = vmax.f32 %v1316, 0.0
        %v1319 = vmax.f32 %v1317, 0.0
        %v1320 = vlaneseq
        %v1321 = vand.u32 %v1320, 127
        %v1322 = vmul.u32 %v1134, 2
        %vm1323 = vcmp.eq.s32.totalorder %v1321, %v1322
        %v1324 = vsel %vm1323, 1, 0
        %v1325 = vcvt.s32.f32 %v1324
        %v1326 = vpack.c.bf16 %v1325, %v1325
        %v1327 = vpack.c.bf16 %v1319, %v1318
        %vm1328 = vcmask 130048
        %v1330 = vsel %vm1328, %v1326, 0
        %1332 = vmatprep.subr.bf16.mxu0 0
        %1333 = vmatpush1.bf16.msra.mxu0 0
        %1334 = vmatprep.subr.bf16.mxu0 0
        %1335 = vmatpush1.bf16.msra.mxu0 0
        %1336 = vmatprep.subr.bf16.mxu0 0
        %1337 = vmatpush1.bf16.msra.mxu0 0
        %1338 = vmatprep.subr.bf16.mxu0 0
        %1339 = vmatpush1.bf16.msra.mxu0 0
        %1340 = vmatprep.subr.bf16.mxu0 0
        %1341 = vmatpush1.bf16.msra.mxu0 0
        %1342 = vmatprep.subr.bf16.mxu0 0
        %1343 = vmatpush1.bf16.msra.mxu0 0
        %1344 = vmatprep.subr.bf16.mxu0 0
        %1345 = vmatpush1.bf16.msra.mxu0 0
        %1346 = vmatprep.subr.bf16.mxu0 0
        %1347 = vmatpush1.bf16.msra.mxu0 %v1327
        %1348 = vmatprep.subr.bf16.mxu0 0
        %1349 = vmatpush2.bf16.msra.mxu0 0
        %1350 = vmatprep.subr.bf16.mxu0 0
        %1351 = vmatpush2.bf16.msra.mxu0 0
        %1352 = vmatprep.subr.bf16.mxu0 0
        %1353 = vmatpush2.bf16.msra.mxu0 0
        %1354 = vmatprep.subr.bf16.mxu0 0
        %1355 = vmatpush2.bf16.msra.mxu0 0
        %1356 = vmatprep.subr.bf16.mxu0 0
        %1357 = vmatpush2.bf16.msra.mxu0 0
        %1358 = vmatprep.subr.bf16.mxu0 0
        %1359 = vmatpush2.bf16.msra.mxu0 0
        %1360 = vmatprep.subr.bf16.mxu0 0
        %1361 = vmatpush2.bf16.msra.mxu0 0
        %1362 = vmatprep.subr.bf16.mxu0 0
        %1363 = vmatpush2.bf16.msra.mxu0 0
        %1364 = vmatprep.mubr.bf16.mxu0 0
        %1365 = vmatmul.mubr.bf16.gmra.mxu0 %v1330
        %v1366 = vpop.f32.mrf.mxu0
        %v1367 = vadd.f32 0.0, %v1366
        %v1368 = vpop.f32.mrf.mxu0
        %v1369 = vpop.f32.mrf.mxu0
        %v1370 = vpop.f32.mrf.mxu0
        %1371 = vdwg.mxu0
        %v1372 = vpack.c.bf16 %v1367, %v1367
        %v1373 = vld [vmem:[%s13] sm:$0xf]
        %v1374 = vld [vmem:[%s13 + $0x4] sm:$0xf]
        %v1375 = vld [vmem:[%s13 + $0x8] sm:$0xf]
        %v1376 = vld [vmem:[%s13 + $0xc] sm:$0xf]
        %v1377 = vld [vmem:[%s13 + $0x10] sm:$0xf]
        %v1378 = vld [vmem:[%s13 + $0x14] sm:$0xf]
        %v1379 = vld [vmem:[%s13 + $0x18] sm:$0xf]
        %v1380 = vld [vmem:[%s13 + $0x1c] sm:$0xf]
        %v1381 = vld [vmem:[%s15] sm:$0x1]
        %v1383 = vlaneseq
        %v1384 = vshrl.u32 %v1383, 7
        %v1385 = vsub.s32 0, %v1384
        %v1386 = vrot.slane %v1381, %v1385
        %v1396 = vunpack.c.l.b16 %v1373
        %v1397 = vunpack.c.l.b16 %v1374
        %v1398 = vunpack.c.l.b16 %v1375
        %v1399 = vunpack.c.l.b16 %v1376
        %v1400 = vunpack.c.l.b16 %v1377
        %v1401 = vunpack.c.l.b16 %v1378
        %v1402 = vunpack.c.l.b16 %v1379
        %v1403 = vunpack.c.l.b16 %v1380
        %v1404 = vpack.c.b16 %v1397, %v1396
        %v1405 = vpack.c.b16 %v1399, %v1398
        %v1406 = vpack.c.b16 %v1401, %v1400
        %v1407 = vpack.c.b16 %v1403, %v1402
        %vm1412 = vcmask 523264
        %v1414 = vsel %vm1412, %v1372, 0
        %1416 = vmatprep.subr.bf16.mxu0 0
        %1417 = vmatpush1.bf16.msra.mxu0 0
        %1418 = vmatprep.subr.bf16.mxu0 0
        %1419 = vmatpush1.bf16.msra.mxu0 0
        %1420 = vmatprep.subr.bf16.mxu0 0
        %1421 = vmatpush1.bf16.msra.mxu0 0
        %1422 = vmatprep.subr.bf16.mxu0 0
        %1423 = vmatpush1.bf16.msra.mxu0 0
        %1424 = vmatprep.subr.bf16.mxu0 0
        %1425 = vmatpush1.bf16.msra.mxu0 %v1407
        %1426 = vmatprep.subr.bf16.mxu0 0
        %1427 = vmatpush1.bf16.msra.mxu0 %v1406
        %1428 = vmatprep.subr.bf16.mxu0 0
        %1429 = vmatpush1.bf16.msra.mxu0 %v1405
        %1430 = vmatprep.subr.bf16.mxu0 0
        %1431 = vmatpush1.bf16.msra.mxu0 %v1404
        %1432 = vmatprep.subr.bf16.mxu0 0
        %1433 = vmatpush2.bf16.msra.mxu0 0
        %1434 = vmatprep.subr.bf16.mxu0 0
        %1435 = vmatpush2.bf16.msra.mxu0 0
        %1436 = vmatprep.subr.bf16.mxu0 0
        %1437 = vmatpush2.bf16.msra.mxu0 0
        %1438 = vmatprep.subr.bf16.mxu0 0
        %1439 = vmatpush2.bf16.msra.mxu0 0
        %1440 = vmatprep.subr.bf16.mxu0 0
        %1441 = vmatpush2.bf16.msra.mxu0 0
        %1442 = vmatprep.subr.bf16.mxu0 0
        %1443 = vmatpush2.bf16.msra.mxu0 0
        %1444 = vmatprep.subr.bf16.mxu0 0
        %1445 = vmatpush2.bf16.msra.mxu0 0
        %1446 = vmatprep.subr.bf16.mxu0 0
        %1447 = vmatpush2.bf16.msra.mxu0 0
        %1448 = vmatprep.mubr.bf16.mxu0 0
        %1449 = vmatmul.mubr.bf16.gmra.mxu0 %v1414
        %v1450 = vpop.f32.mrf.mxu0
        %v1451 = vadd.f32 %v1386, %v1450
        %v1452 = vpop.f32.mrf.mxu0
        %v1453 = vpop.f32.mrf.mxu0
        %v1454 = vpop.f32.mrf.mxu0
        %1455 = vdwg.mxu0
        %v1456 = vmax.f32 %v1451, 0.0
        %v1457 = vpack.c.bf16 %v1456, %v1456
        %v1458 = vld [vmem:[%s17] sm:$0xf]
        %v1459 = vld [vmem:[%s17 + $0x4] sm:$0xf]
        %v1460 = vld [vmem:[%s17 + $0x8] sm:$0xf]
        %v1461 = vld [vmem:[%s17 + $0xc] sm:$0xf]
        %v1462 = vld [vmem:[%s17 + $0x10] sm:$0xf]
        %v1463 = vld [vmem:[%s17 + $0x14] sm:$0xf]
        %v1464 = vld [vmem:[%s17 + $0x18] sm:$0xf]
        %v1465 = vld [vmem:[%s17 + $0x1c] sm:$0xf]
        %v1466 = vld [vmem:[%s19] sm:$0x1]
        %v1468 = vlaneseq
        %v1469 = vshrl.u32 %v1468, 7
        %v1470 = vsub.s32 0, %v1469
        %v1471 = vrot.slane %v1466, %v1470
        %v1481 = vunpack.c.l.b16 %v1458
        %v1482 = vunpack.c.l.b16 %v1459
        %v1483 = vunpack.c.l.b16 %v1460
        %v1484 = vunpack.c.l.b16 %v1461
        %v1485 = vunpack.c.l.b16 %v1462
        %v1486 = vunpack.c.l.b16 %v1463
        %v1487 = vunpack.c.l.b16 %v1464
        %v1488 = vunpack.c.l.b16 %v1465
        %v1489 = vpack.c.b16 %v1482, %v1481
        %v1490 = vpack.c.b16 %v1484, %v1483
        %v1491 = vpack.c.b16 %v1486, %v1485
        %v1492 = vpack.c.b16 %v1488, %v1487
        %v1498 = vsel %vm1412, %v1457, 0
        %1500 = vmatprep.subr.bf16.mxu0 0
        %1501 = vmatpush1.bf16.msra.mxu0 0
        %1502 = vmatprep.subr.bf16.mxu0 0
        %1503 = vmatpush1.bf16.msra.mxu0 0
        %1504 = vmatprep.subr.bf16.mxu0 0
        %1505 = vmatpush1.bf16.msra.mxu0 0
        %1506 = vmatprep.subr.bf16.mxu0 0
        %1507 = vmatpush1.bf16.msra.mxu0 0
        %1508 = vmatprep.subr.bf16.mxu0 0
        %1509 = vmatpush1.bf16.msra.mxu0 %v1492
        %1510 = vmatprep.subr.bf16.mxu0 0
        %1511 = vmatpush1.bf16.msra.mxu0 %v1491
        %1512 = vmatprep.subr.bf16.mxu0 0
        %1513 = vmatpush1.bf16.msra.mxu0 %v1490
        %1514 = vmatprep.subr.bf16.mxu0 0
        %1515 = vmatpush1.bf16.msra.mxu0 %v1489
        %1516 = vmatprep.subr.bf16.mxu0 0
        %1517 = vmatpush2.bf16.msra.mxu0 0
        %1518 = vmatprep.subr.bf16.mxu0 0
        %1519 = vmatpush2.bf16.msra.mxu0 0
        %1520 = vmatprep.subr.bf16.mxu0 0
        %1521 = vmatpush2.bf16.msra.mxu0 0
        %1522 = vmatprep.subr.bf16.mxu0 0
        %1523 = vmatpush2.bf16.msra.mxu0 0
        %1524 = vmatprep.subr.bf16.mxu0 0
        %1525 = vmatpush2.bf16.msra.mxu0 0
        %1526 = vmatprep.subr.bf16.mxu0 0
        %1527 = vmatpush2.bf16.msra.mxu0 0
        %1528 = vmatprep.subr.bf16.mxu0 0
        %1529 = vmatpush2.bf16.msra.mxu0 0
        %1530 = vmatprep.subr.bf16.mxu0 0
        %1531 = vmatpush2.bf16.msra.mxu0 0
        %1532 = vmatprep.mubr.bf16.mxu0 0
        %1533 = vmatmul.mubr.bf16.gmra.mxu0 %v1498
        %v1534 = vpop.f32.mrf.mxu0
        %v1535 = vadd.f32 %v1471, %v1534
        %v1536 = vpop.f32.mrf.mxu0
        %v1537 = vpop.f32.mrf.mxu0
        %v1538 = vpop.f32.mrf.mxu0
        %1539 = vdwg.mxu0
        %v1540 = vld [vmem:[%s21] sm:$0xff]
        %v1541 = vld [vmem:[%s21 + $0x8] sm:$0xff]
        %v1542 = vld [vmem:[%s21 + $0x10] sm:$0xff]
        %v1543 = vld [vmem:[%s21 + $0x18] sm:$0xff]
        %v1544 = vld [vmem:[%s21 + $0x20] sm:$0xff]
        %v1545 = vld [vmem:[%s21 + $0x28] sm:$0xff]
        %v1546 = vld [vmem:[%s21 + $0x30] sm:$0xff]
        %v1547 = vld [vmem:[%s21 + $0x38] sm:$0xff]
        %v1549 = vsel %vm1218, %v1535, 0
        %v1552 = vsel %vm1218, %v1540, 0
        %v1555 = vsel %vm1218, %v1541, 0
        %v1558 = vsel %vm1218, %v1542, 0
        %v1561 = vsel %vm1218, %v1543, 0
        %v1564 = vsel %vm1218, %v1544, 0
        %v1567 = vsel %vm1218, %v1545, 0
        %v1570 = vsel %vm1218, %v1546, 0
        %v1573 = vsel %vm1218, %v1547, 0
        %1575 = vmatprep.subr.mxu0 0.0
        %1576 = vmatpush1.xpose.msra.mxu0 0.0
        %1577 = vmatprep.subr.mxu0 0.0
        %1578 = vmatpush1.xpose.msra.mxu0 0.0
        %1579 = vmatprep.subr.mxu0 0.0
        %1580 = vmatpush1.xpose.msra.mxu0 0.0
        %1581 = vmatprep.subr.mxu0 0.0
        %1582 = vmatpush1.xpose.msra.mxu0 0.0
        %1583 = vmatprep.subr.mxu0 0.0
        %1584 = vmatpush1.xpose.msra.mxu0 0.0
        %1585 = vmatprep.subr.mxu0 0.0
        %1586 = vmatpush1.xpose.msra.mxu0 0.0
        %1587 = vmatprep.subr.mxu0 0.0
        %1588 = vmatpush1.xpose.msra.mxu0 0.0
        %1589 = vmatprep.subr.mxu0 0.0
        %1590 = vmatpush1.xpose.msra.mxu0 0.0
        %1591 = vmatprep.subr.mxu0 0.0
        %1592 = vmatpush1.xpose.msra.mxu0 %v1573
        %1593 = vmatprep.subr.mxu0 0.0
        %1594 = vmatpush1.xpose.msra.mxu0 %v1570
        %1595 = vmatprep.subr.mxu0 0.0
        %1596 = vmatpush1.xpose.msra.mxu0 %v1567
        %1597 = vmatprep.subr.mxu0 0.0
        %1598 = vmatpush1.xpose.msra.mxu0 %v1564
        %1599 = vmatprep.subr.mxu0 0.0
        %1600 = vmatpush1.xpose.msra.mxu0 %v1561
        %1601 = vmatprep.subr.mxu0 0.0
        %1602 = vmatpush1.xpose.msra.mxu0 %v1558
        %1603 = vmatprep.subr.mxu0 0.0
        %1604 = vmatpush1.xpose.msra.mxu0 %v1555
        %1605 = vmatprep.subr.mxu0 0.0
        %1606 = vmatpush1.xpose.msra.mxu0 %v1552
        %1607 = vmatprep.subr.mxu0 0.0
        %1608 = vmatpush2.xpose.msra.mxu0 0.0
        %1609 = vmatprep.subr.mxu0 0.0
        %1610 = vmatpush2.xpose.msra.mxu0 0.0
        %1611 = vmatprep.subr.mxu0 0.0
        %1612 = vmatpush2.xpose.msra.mxu0 0.0
        %1613 = vmatprep.subr.mxu0 0.0
        %1614 = vmatpush2.xpose.msra.mxu0 0.0
        %1615 = vmatprep.subr.mxu0 0.0
        %1616 = vmatpush2.xpose.msra.mxu0 0.0
        %1617 = vmatprep.subr.mxu0 0.0
        %1618 = vmatpush2.xpose.msra.mxu0 0.0
        %1619 = vmatprep.subr.mxu0 0.0
        %1620 = vmatpush2.xpose.msra.mxu0 0.0
        %1621 = vmatprep.subr.mxu0 0.0
        %1622 = vmatpush2.xpose.msra.mxu0 0.0
        %1623 = vmatprep.subr.mxu0 0.0
        %1624 = vmatpush2.xpose.msra.mxu0 0.0
        %1625 = vmatprep.subr.mxu0 0.0
        %1626 = vmatpush2.xpose.msra.mxu0 0.0
        %1627 = vmatprep.subr.mxu0 0.0
        %1628 = vmatpush2.xpose.msra.mxu0 0.0
        %1629 = vmatprep.subr.mxu0 0.0
        %1630 = vmatpush2.xpose.msra.mxu0 0.0
        %1631 = vmatprep.subr.mxu0 0.0
        %1632 = vmatpush2.xpose.msra.mxu0 0.0
        %1633 = vmatprep.subr.mxu0 0.0
        %1634 = vmatpush2.xpose.msra.mxu0 0.0
        %1635 = vmatprep.subr.mxu0 0.0
        %1636 = vmatpush2.xpose.msra.mxu0 0.0
        %1637 = vmatprep.subr.mxu0 0.0
        %1638 = vmatpush2.xpose.msra.mxu0 0.0
        %1639 = vmatprep.mubr.f32.mxu0 0.0
        %1640 = vmatmul.mubr.f32.gmra.mxu0 %v1549
        %v1641 = vpop.f32.mrf.mxu0
        %v1642 = vadd.f32 0.0, %v1641
        %v1643 = vpop.f32.mrf.mxu0
        %1644 = vdwg.mxu0
        %v1645 = vmul.f32 %v1535, %v1535
        %v1646 = vsel %vm1218, %v1645, 0.0
        %1647 = vadd.xlane.f32.xlu0 %v1646
        %v1648 = vpop.xlane.xlu0 %1647
        %v1649 = vmul.f32 %v1642, 2.0
        %v1650 = vsub.f32 %v1648, %v1649
        %v1651 = vld [vmem:[%s23] sm:$0x1]
        %v1653 = vlaneseq
        %v1654 = vshrl.u32 %v1653, 7
        %v1655 = vsub.s32 0, %v1654
        %v1656 = vrot.slane %v1651, %v1655
        %v1658 = vadd.f32 %v1650, %v1656
        %v1659 = vsel %vm1412, %v1658, inf
        %1660 = vmin.xlane.f32.xlu0 %v1659
        %v1661 = vpop.xlane.xlu0 %1660
        %vm1662 = vcmp.eq.f32.partialorder %v1658, %v1661
        %v1663 = vsel %vm1662, %v1321, 64
        %v1664 = vsel %vm1412, %v1663, 2147483647
        %v1665 = vand.u32 %v1664, 65535
        %v1666 = vshra.s32 %v1664, 16
        %v1667 = vcvt.s32.f32 %v1665
        %v1668 = vcvt.s32.f32 %v1666
        %1669 = vmin.xlane.f32.xlu0 %v1668
        %v1670 = vpop.xlane.xlu0 %1669
        %vm1671 = vcmp.eq.f32.partialorder %v1668, %v1670
        %v1672 = vsel %vm1671, %v1667, inf
        %1673 = vmin.xlane.f32.xlu0 %v1672
        %v1674 = vpop.xlane.xlu0 %1673
        %v1675 = vcvt.f32.s32 %v1674
        %v1676 = vcvt.f32.s32 %v1670
        %v1677 = vshll.u32 %v1676, 16
        %v1678 = vadd.s32 %v1677, %v1675
        %vm1679 = vcmp.eq.s32.totalorder %v1321, %v1678
        %v1680 = vsel %vm1679, 1, 0
        %v1681 = vcvt.s32.f32 %v1680
        %v1683 = vsel %vm1412, %v1681, 0
        %1685 = vmatprep.subr.mxu0 0.0
        %1686 = vmatpush1.msra.mxu0 0.0
        %1687 = vmatprep.subr.mxu0 0.0
        %1688 = vmatpush1.msra.mxu0 0.0
        %1689 = vmatprep.subr.mxu0 0.0
        %1690 = vmatpush1.msra.mxu0 0.0
        %1691 = vmatprep.subr.mxu0 0.0
        %1692 = vmatpush1.msra.mxu0 0.0
        %1693 = vmatprep.subr.mxu0 0.0
        %1694 = vmatpush1.msra.mxu0 0.0
        %1695 = vmatprep.subr.mxu0 0.0
        %1696 = vmatpush1.msra.mxu0 0.0
        %1697 = vmatprep.subr.mxu0 0.0
        %1698 = vmatpush1.msra.mxu0 0.0
        %1699 = vmatprep.subr.mxu0 0.0
        %1700 = vmatpush1.msra.mxu0 0.0
        %1701 = vmatprep.subr.mxu0 0.0
        %1702 = vmatpush1.msra.mxu0 %v1547
        %1703 = vmatprep.subr.mxu0 0.0
        %1704 = vmatpush1.msra.mxu0 %v1546
        %1705 = vmatprep.subr.mxu0 0.0
        %1706 = vmatpush1.msra.mxu0 %v1545
        %1707 = vmatprep.subr.mxu0 0.0
        %1708 = vmatpush1.msra.mxu0 %v1544
        %1709 = vmatprep.subr.mxu0 0.0
        %1710 = vmatpush1.msra.mxu0 %v1543
        %1711 = vmatprep.subr.mxu0 0.0
        %1712 = vmatpush1.msra.mxu0 %v1542
        %1713 = vmatprep.subr.mxu0 0.0
        %1714 = vmatpush1.msra.mxu0 %v1541
        %1715 = vmatprep.subr.mxu0 0.0
        %1716 = vmatpush1.msra.mxu0 %v1540
        %1717 = vmatprep.subr.mxu0 0.0
        %1718 = vmatpush2.msra.mxu0 0.0
        %1719 = vmatprep.subr.mxu0 0.0
        %1720 = vmatpush2.msra.mxu0 0.0
        %1721 = vmatprep.subr.mxu0 0.0
        %1722 = vmatpush2.msra.mxu0 0.0
        %1723 = vmatprep.subr.mxu0 0.0
        %1724 = vmatpush2.msra.mxu0 0.0
        %1725 = vmatprep.subr.mxu0 0.0
        %1726 = vmatpush2.msra.mxu0 0.0
        %1727 = vmatprep.subr.mxu0 0.0
        %1728 = vmatpush2.msra.mxu0 0.0
        %1729 = vmatprep.subr.mxu0 0.0
        %1730 = vmatpush2.msra.mxu0 0.0
        %1731 = vmatprep.subr.mxu0 0.0
        %1732 = vmatpush2.msra.mxu0 0.0
        %1733 = vmatprep.subr.mxu0 0.0
        %1734 = vmatpush2.msra.mxu0 0.0
        %1735 = vmatprep.subr.mxu0 0.0
        %1736 = vmatpush2.msra.mxu0 0.0
        %1737 = vmatprep.subr.mxu0 0.0
        %1738 = vmatpush2.msra.mxu0 0.0
        %1739 = vmatprep.subr.mxu0 0.0
        %1740 = vmatpush2.msra.mxu0 0.0
        %1741 = vmatprep.subr.mxu0 0.0
        %1742 = vmatpush2.msra.mxu0 0.0
        %1743 = vmatprep.subr.mxu0 0.0
        %1744 = vmatpush2.msra.mxu0 0.0
        %1745 = vmatprep.subr.mxu0 0.0
        %1746 = vmatpush2.msra.mxu0 0.0
        %1747 = vmatprep.subr.mxu0 0.0
        %1748 = vmatpush2.msra.mxu0 0.0
        %1749 = vmatprep.mubr.f32.mxu0 0.0
        %1750 = vmatmul.mubr.f32.gmra.mxu0 %v1683
        %v1751 = vpop.f32.mrf.mxu0
        %v1752 = vadd.f32 0.0, %v1751
        %v1753 = vpop.f32.mrf.mxu0
        %1754 = vdwg.mxu0
        %v1755 = vsub.f32 %v1752, %v1535
        %v1756 = vmul.f32 %v1755, %v1755
        %v1757 = vsel %vm1218, %v1756, 0.0
        %1758 = vadd.xlane.f32.xlu0 %v1757
        %v1759 = vpop.xlane.xlu0 %1758
        %v1760 = vrot.slane %v1759, 4
        %v1761 = vadd.f32 %v1759, %v1760
        %v1762 = vrot.slane %v1761, 2
        %v1763 = vadd.f32 %v1761, %v1762
        %v1764 = vrot.slane %v1763, 1
        %v1765 = vadd.f32 %v1763, %v1764
        %s1766 = vtos %v1765
        %v1767 = vstv %s1766
        %vm1768 = vcmask 0
        %1769 = vst.msk [vmem:[%s1131] sm:$0x1] %vm1768, %v1767
        %s1770 = sld [smem:[#allocation3 + %s97]]
        %v1771 = vld [vmem:[%s25] sm:$0xf]
        %v1772 = vld [vmem:[%s25 + $0x4] sm:$0xf]
        %v1773 = vld [vmem:[%s25 + $0x8] sm:$0xf]
        %v1774 = vld [vmem:[%s25 + $0xc] sm:$0xf]
        %v1775 = vld [vmem:[%s27] sm:$0x1]
        %v1777 = vlaneseq
        %v1778 = vshrl.u32 %v1777, 7
        %v1779 = vsub.s32 0, %v1778
        %v1780 = vrot.slane %v1775, %v1779
        %v1786 = vunpack.c.l.b16 %v1771
        %v1787 = vunpack.c.l.b16 %v1772
        %v1788 = vunpack.c.l.b16 %v1773
        %v1789 = vunpack.c.l.b16 %v1774
        %v1790 = vpack.c.b16 %v1787, %v1786
        %v1791 = vpack.c.b16 %v1789, %v1788
        %1794 = vmatprep.subr.bf16.mxu0 0
        %1795 = vmatpush1.bf16.msra.mxu0 0
        %1796 = vmatprep.subr.bf16.mxu0 0
        %1797 = vmatpush1.bf16.msra.mxu0 0
        %1798 = vmatprep.subr.bf16.mxu0 0
        %1799 = vmatpush1.bf16.msra.mxu0 0
        %1800 = vmatprep.subr.bf16.mxu0 0
        %1801 = vmatpush1.bf16.msra.mxu0 0
        %1802 = vmatprep.subr.bf16.mxu0 0
        %1803 = vmatpush1.bf16.msra.mxu0 0
        %1804 = vmatprep.subr.bf16.mxu0 0
        %1805 = vmatpush1.bf16.msra.mxu0 0
        %1806 = vmatprep.subr.bf16.mxu0 0
        %1807 = vmatpush1.bf16.msra.mxu0 %v1791
        %1808 = vmatprep.subr.bf16.mxu0 0
        %1809 = vmatpush1.bf16.msra.mxu0 %v1790
        %1810 = vmatprep.subr.bf16.mxu0 0
        %1811 = vmatpush2.bf16.msra.mxu0 0
        %1812 = vmatprep.subr.bf16.mxu0 0
        %1813 = vmatpush2.bf16.msra.mxu0 0
        %1814 = vmatprep.subr.bf16.mxu0 0
        %1815 = vmatpush2.bf16.msra.mxu0 0
        %1816 = vmatprep.subr.bf16.mxu0 0
        %1817 = vmatpush2.bf16.msra.mxu0 0
        %1818 = vmatprep.subr.bf16.mxu0 0
        %1819 = vmatpush2.bf16.msra.mxu0 0
        %1820 = vmatprep.subr.bf16.mxu0 0
        %1821 = vmatpush2.bf16.msra.mxu0 0
        %1822 = vmatprep.subr.bf16.mxu0 0
        %1823 = vmatpush2.bf16.msra.mxu0 0
        %1824 = vmatprep.subr.bf16.mxu0 0
        %1825 = vmatpush2.bf16.msra.mxu0 0
        %1826 = vmatprep.mubr.bf16.mxu0 0
        %1827 = vmatmul.mubr.bf16.gmra.mxu0 %v1220
        %v1828 = vpop.f32.mrf.mxu0
        %v1829 = vadd.f32 %v1780, %v1828
        %v1830 = vpop.f32.mrf.mxu0
        %v1831 = vpop.f32.mrf.mxu0
        %v1832 = vadd.f32 %v1780, %v1831
        %v1833 = vpop.f32.mrf.mxu0
        %1834 = vdwg.mxu0
        %v1835 = vmax.f32 %v1829, 0.0
        %v1836 = vmax.f32 %v1832, 0.0
        %v1837 = vstv %s1770
        %vm1838 = vcmp.lt.s32.totalorder %v1134, %v1837
        %vm1839 = vcmp.lt.s32.totalorder %v1135, %v1837
        %v1840 = vsel %vm1838, 1, 0
        %v1841 = vsel %vm1839, 1, 0
        %v1842 = vcvt.s32.f32 %v1840
        %v1843 = vcvt.s32.f32 %v1841
        %s1844 = scvt.s32.f32 %s1770
        %s1845 = smax.f32 %s1844, 1.0
        %v1846 = vmul.f32 %v1835, %v1842
        %v1847 = vmul.f32 %v1836, %v1843
        %v1848 = vsel %vm1412, %v1846, 0.0
        %v1849 = vsel %vm1412, %v1847, 0.0
        %v1850 = vadd.f32 %v1848, %v1849
        %v1851 = vrot.slane %v1850, 4
        %v1852 = vadd.f32 %v1850, %v1851
        %v1853 = vrot.slane %v1852, 2
        %v1854 = vadd.f32 %v1852, %v1853
        %v1855 = vrot.slane %v1854, 1
        %v1856 = vadd.f32 %v1854, %v1855
        %v1857 = vstv %s1845
        %v1858 = vrcp.pop %v1857
        %v1859 = vmul.f32 %v1856, %v1858
        %v1860 = vpack.c.bf16 %v1859, %v1859
        %v1861 = vld [vmem:[%s29] sm:$0xf]
        %v1862 = vld [vmem:[%s29 + $0x4] sm:$0xf]
        %v1863 = vld [vmem:[%s29 + $0x8] sm:$0xf]
        %v1864 = vld [vmem:[%s29 + $0xc] sm:$0xf]
        %v1865 = vld [vmem:[%s29 + $0x10] sm:$0xf]
        %v1866 = vld [vmem:[%s29 + $0x14] sm:$0xf]
        %v1867 = vld [vmem:[%s29 + $0x18] sm:$0xf]
        %v1868 = vld [vmem:[%s29 + $0x1c] sm:$0xf]
        %v1869 = vld [vmem:[%s31] sm:$0x1]
        %v1878 = vunpack.c.l.b16 %v1861
        %v1879 = vunpack.c.l.b16 %v1862
        %v1880 = vunpack.c.l.b16 %v1863
        %v1881 = vunpack.c.l.b16 %v1864
        %v1882 = vunpack.c.l.b16 %v1865
        %v1883 = vunpack.c.l.b16 %v1866
        %v1884 = vunpack.c.l.b16 %v1867
        %v1885 = vunpack.c.l.b16 %v1868
        %v1886 = vpack.c.b16 %v1879, %v1878
        %v1887 = vpack.c.b16 %v1881, %v1880
        %v1888 = vpack.c.b16 %v1883, %v1882
        %v1889 = vpack.c.b16 %v1885, %v1884
        %v1895 = vsel %vm1412, %v1860, 0
        %1897 = vmatprep.subr.bf16.mxu0 0
        %1898 = vmatpush1.bf16.msra.mxu0 0
        %1899 = vmatprep.subr.bf16.mxu0 0
        %1900 = vmatpush1.bf16.msra.mxu0 0
        %1901 = vmatprep.subr.bf16.mxu0 0
        %1902 = vmatpush1.bf16.msra.mxu0 0
        %1903 = vmatprep.subr.bf16.mxu0 0
        %1904 = vmatpush1.bf16.msra.mxu0 0
        %1905 = vmatprep.subr.bf16.mxu0 0
        %1906 = vmatpush1.bf16.msra.mxu0 %v1889
        %1907 = vmatprep.subr.bf16.mxu0 0
        %1908 = vmatpush1.bf16.msra.mxu0 %v1888
        %1909 = vmatprep.subr.bf16.mxu0 0
        %1910 = vmatpush1.bf16.msra.mxu0 %v1887
        %1911 = vmatprep.subr.bf16.mxu0 0
        %1912 = vmatpush1.bf16.msra.mxu0 %v1886
        %1913 = vmatprep.subr.bf16.mxu0 0
        %1914 = vmatpush2.bf16.msra.mxu0 0
        %1915 = vmatprep.subr.bf16.mxu0 0
        %1916 = vmatpush2.bf16.msra.mxu0 0
        %1917 = vmatprep.subr.bf16.mxu0 0
        %1918 = vmatpush2.bf16.msra.mxu0 0
        %1919 = vmatprep.subr.bf16.mxu0 0
        %1920 = vmatpush2.bf16.msra.mxu0 0
        %1921 = vmatprep.subr.bf16.mxu0 0
        %1922 = vmatpush2.bf16.msra.mxu0 0
        %1923 = vmatprep.subr.bf16.mxu0 0
        %1924 = vmatpush2.bf16.msra.mxu0 0
        %1925 = vmatprep.subr.bf16.mxu0 0
        %1926 = vmatpush2.bf16.msra.mxu0 0
        %1927 = vmatprep.subr.bf16.mxu0 0
        %1928 = vmatpush2.bf16.msra.mxu0 0
        %1929 = vmatprep.mubr.bf16.mxu0 0
        %1930 = vmatmul.mubr.bf16.gmra.mxu0 %v1895
        %v1931 = vpop.f32.mrf.mxu0
        %v1932 = vadd.f32 %v1869, %v1931
        %v1933 = vpop.f32.mrf.mxu0
        %v1934 = vpop.f32.mrf.mxu0
        %v1935 = vpop.f32.mrf.mxu0
        %1936 = vdwg.mxu0
        %vm1937 = vcmask 516096
        %1938 = vst.msk [vmem:[%s1128] sm:$0x1] %vm1937, %v1932
        %v1939 = vmul.f32 %v1932, 0.5
        %v1940 = vmul.f32 %v1939, 1.442695
        %v1941 = vpow.pop %v1940
        %v1942 = vld [vmem:[%s1125] sm:$0x1]
        %v1944 = vlaneseq
        %v1945 = vshrl.u32 %v1944, 7
        %v1946 = vsub.s32 0, %v1945
        %v1947 = vrot.slane %v1942, %v1946
        %1948 = vrot.lane.b32.xlu0 %v1947, 32
        %v1949 = vpop.permute.xlu0 %1948
        %v1951 = vmul.f32 %v1941, %v1949
        %1953 = vrot.lane.b32.xlu0 %v1951, 96
        %v1954 = vpop.permute.xlu0 %1953
        %v1956 = vadd.f32 %v1932, %v1954
        %v1957 = vmul.f32 %v1956, %v1956
        %vm1958 = vcmask 253952
        %v1959 = vsel %vm1958, %v1957, 0.0
        %1960 = vadd.xlane.f32.xlu0 %v1959
        %v1961 = vpop.xlane.xlu0 %1960
        %v1962 = vrsqrt.pop %v1961
        %v1963 = vmul.f32 %v1961, %v1962
        %vm1964 = vcmp.eq.f32.partialorder %v1961, inf
        %v1965 = vsel %vm1964, %v1961, %v1963
        %vm1966 = vcmp.eq.f32.partialorder %v1961, 0.0
        %v1967 = vand.u32 %v1961, 2147483648
        %v1968 = vsel %vm1966, %v1967, %v1965
        %v1969 = vmax.f32 %v1968, 1e-12
        %v1970 = vrcp.pop %v1969
        %v1971 = vmul.f32 %v1956, %v1970
        %v1972 = vld [vmem:[%s1122] sm:$0x1]
        %v1973 = vmul.f32 %v1972, %v1972
        %v1974 = vsel %vm1958, %v1973, 0.0
        %1975 = vadd.xlane.f32.xlu0 %v1974
        %v1976 = vpop.xlane.xlu0 %1975
        %v1977 = vrsqrt.pop %v1976
        %v1978 = vmul.f32 %v1976, %v1977
        %vm1979 = vcmp.eq.f32.partialorder %v1976, inf
        %v1980 = vsel %vm1979, %v1976, %v1978
        %vm1981 = vcmp.eq.f32.partialorder %v1976, 0.0
        %v1982 = vand.u32 %v1976, 2147483648
        %v1983 = vsel %vm1981, %v1982, %v1980
        %v1984 = vmax.f32 %v1983, 1e-12
        %v1985 = vrcp.pop %v1984
        %v1986 = vmul.f32 %v1972, %v1985
        %v1987 = vpack.c.bf16 %v1752, %v1752
        %v1988 = vld [vmem:[%s33] sm:$0xff]
        %v1989 = vld [vmem:[%s33 + $0x8] sm:$0xff]
        %v1990 = vld [vmem:[%s33 + $0x10] sm:$0xf]
        %v1991 = vld [vmem:[%s33 + $0x14] sm:$0xff]
        %v1992 = vld [vmem:[%s33 + $0x1c] sm:$0xff]
        %v1993 = vld [vmem:[%s33 + $0x24] sm:$0xf]
        %v1994 = vld [vmem:[%s33 + $0x28] sm:$0xff]
        %v1995 = vld [vmem:[%s33 + $0x30] sm:$0xff]
        %v1996 = vld [vmem:[%s33 + $0x38] sm:$0xf]
        %v1997 = vld [vmem:[%s33 + $0x3c] sm:$0xff]
        %v1998 = vld [vmem:[%s33 + $0x44] sm:$0xff]
        %v1999 = vld [vmem:[%s33 + $0x4c] sm:$0xf]
        %v2012 = vunpack.c.l.b16 %v1988
        %v2013 = vunpack.c.h.b16 %v1988
        %v2014 = vunpack.c.l.b16 %v1989
        %v2015 = vunpack.c.h.b16 %v1989
        %v2016 = vunpack.c.l.b16 %v1990
        %v2017 = vunpack.c.l.b16 %v1991
        %v2018 = vunpack.c.h.b16 %v1991
        %v2019 = vunpack.c.l.b16 %v1992
        %v2020 = vunpack.c.h.b16 %v1992
        %v2021 = vunpack.c.l.b16 %v1993
        %v2022 = vunpack.c.l.b16 %v1994
        %v2023 = vunpack.c.h.b16 %v1994
        %v2024 = vunpack.c.l.b16 %v1995
        %v2025 = vunpack.c.h.b16 %v1995
        %v2026 = vunpack.c.l.b16 %v1996
        %v2027 = vunpack.c.l.b16 %v1997
        %v2028 = vunpack.c.h.b16 %v1997
        %v2029 = vunpack.c.l.b16 %v1998
        %v2030 = vunpack.c.h.b16 %v1998
        %v2031 = vunpack.c.l.b16 %v1999
        %v2032 = vpack.c.b16 %v2017, %v2012
        %v2033 = vpack.c.b16 %v2018, %v2013
        %v2034 = vpack.c.b16 %v2019, %v2014
        %v2035 = vpack.c.b16 %v2020, %v2015
        %v2036 = vpack.c.b16 %v2021, %v2016
        %v2037 = vpack.c.b16 %v2027, %v2022
        %v2038 = vpack.c.b16 %v2028, %v2023
        %v2039 = vpack.c.b16 %v2029, %v2024
        %v2040 = vpack.c.b16 %v2030, %v2025
        %v2041 = vpack.c.b16 %v2031, %v2026
        %v2053 = vsel %vm1218, %v1987, 0
        %2055 = vmatprep.subr.bf16.mxu0 0
        %2056 = vmatpush1.bf16.msra.mxu0 0
        %2057 = vmatprep.subr.bf16.mxu0 0
        %2058 = vmatpush1.bf16.msra.mxu0 0
        %2059 = vmatprep.subr.bf16.mxu0 0
        %2060 = vmatpush1.bf16.msra.mxu0 0
        %2061 = vmatprep.subr.bf16.mxu0 0
        %2062 = vmatpush1.bf16.msra.mxu0 0
        %2063 = vmatprep.subr.bf16.mxu0 0
        %2064 = vmatpush1.bf16.msra.mxu0 0
        %2065 = vmatprep.subr.bf16.mxu0 0
        %2066 = vmatpush1.bf16.msra.mxu0 0
        %2067 = vmatprep.subr.bf16.mxu0 %v2038
        %2068 = vmatpush1.bf16.msra.mxu0 %v2037
        %2069 = vmatprep.subr.bf16.mxu0 %v2033
        %2070 = vmatpush1.bf16.msra.mxu0 %v2032
        %2071 = vmatprep.subr.bf16.mxu0 0
        %2072 = vmatpush2.bf16.msra.mxu0 0
        %2073 = vmatprep.subr.bf16.mxu0 0
        %2074 = vmatpush2.bf16.msra.mxu0 0
        %2075 = vmatprep.subr.bf16.mxu0 0
        %2076 = vmatpush2.bf16.msra.mxu0 0
        %2077 = vmatprep.subr.bf16.mxu0 0
        %2078 = vmatpush2.bf16.msra.mxu0 0
        %2079 = vmatprep.subr.bf16.mxu0 0
        %2080 = vmatpush2.bf16.msra.mxu0 0
        %2081 = vmatprep.subr.bf16.mxu0 0
        %2082 = vmatpush2.bf16.msra.mxu0 0
        %2083 = vmatprep.subr.bf16.mxu0 0
        %2084 = vmatpush2.bf16.msra.mxu0 0
        %2085 = vmatprep.subr.bf16.mxu0 0
        %2086 = vmatpush2.bf16.msra.mxu0 0
        %2087 = vmatprep.mubr.bf16.mxu0 0
        %2088 = vmatmul.mubr.bf16.gmra.mxu0 %v2053
        %v2089 = vpop.f32.mrf.mxu0
        %v2090 = vadd.f32 0.0, %v2089
        %v2091 = vpop.f32.mrf.mxu0
        %v2092 = vadd.f32 0.0, %v2091
        %v2093 = vpop.f32.mrf.mxu0
        %v2094 = vpop.f32.mrf.mxu0
        %2095 = vdwg.mxu0
        %2096 = vmatprep.subr.bf16.mxu0 0
        %2097 = vmatpush1.bf16.msra.mxu0 0
        %2098 = vmatprep.subr.bf16.mxu0 0
        %2099 = vmatpush1.bf16.msra.mxu0 0
        %2100 = vmatprep.subr.bf16.mxu0 0
        %2101 = vmatpush1.bf16.msra.mxu0 0
        %2102 = vmatprep.subr.bf16.mxu0 0
        %2103 = vmatpush1.bf16.msra.mxu0 0
        %2104 = vmatprep.subr.bf16.mxu0 0
        %2105 = vmatpush1.bf16.msra.mxu0 0
        %2106 = vmatprep.subr.bf16.mxu0 0
        %2107 = vmatpush1.bf16.msra.mxu0 0
        %2108 = vmatprep.subr.bf16.mxu0 %v2040
        %2109 = vmatpush1.bf16.msra.mxu0 %v2039
        %2110 = vmatprep.subr.bf16.mxu0 %v2035
        %2111 = vmatpush1.bf16.msra.mxu0 %v2034
        %2112 = vmatprep.subr.bf16.mxu0 0
        %2113 = vmatpush2.bf16.msra.mxu0 0
        %2114 = vmatprep.subr.bf16.mxu0 0
        %2115 = vmatpush2.bf16.msra.mxu0 0
        %2116 = vmatprep.subr.bf16.mxu0 0
        %2117 = vmatpush2.bf16.msra.mxu0 0
        %2118 = vmatprep.subr.bf16.mxu0 0
        %2119 = vmatpush2.bf16.msra.mxu0 0
        %2120 = vmatprep.subr.bf16.mxu0 0
        %2121 = vmatpush2.bf16.msra.mxu0 0
        %2122 = vmatprep.subr.bf16.mxu0 0
        %2123 = vmatpush2.bf16.msra.mxu0 0
        %2124 = vmatprep.subr.bf16.mxu0 0
        %2125 = vmatpush2.bf16.msra.mxu0 0
        %2126 = vmatprep.subr.bf16.mxu0 0
        %2127 = vmatpush2.bf16.msra.mxu0 0
        %2128 = vmatprep.mubr.bf16.mxu0 0
        %2129 = vmatmul.mubr.bf16.gmra.mxu0 %v2053
        %v2130 = vpop.f32.mrf.mxu0
        %v2131 = vadd.f32 0.0, %v2130
        %v2132 = vpop.f32.mrf.mxu0
        %v2133 = vadd.f32 0.0, %v2132
        %v2134 = vpop.f32.mrf.mxu0
        %v2135 = vpop.f32.mrf.mxu0
        %2136 = vdwg.mxu0
        %2137 = vmatprep.subr.bf16.mxu0 0
        %2138 = vmatpush1.bf16.msra.mxu0 0
        %2139 = vmatprep.subr.bf16.mxu0 0
        %2140 = vmatpush1.bf16.msra.mxu0 0
        %2141 = vmatprep.subr.bf16.mxu0 0
        %2142 = vmatpush1.bf16.msra.mxu0 0
        %2143 = vmatprep.subr.bf16.mxu0 0
        %2144 = vmatpush1.bf16.msra.mxu0 0
        %2145 = vmatprep.subr.bf16.mxu0 0
        %2146 = vmatpush1.bf16.msra.mxu0 0
        %2147 = vmatprep.subr.bf16.mxu0 0
        %2148 = vmatpush1.bf16.msra.mxu0 0
        %2149 = vmatprep.subr.bf16.mxu0 0
        %2150 = vmatpush1.bf16.msra.mxu0 %v2041
        %2151 = vmatprep.subr.bf16.mxu0 0
        %2152 = vmatpush1.bf16.msra.mxu0 %v2036
        %2153 = vmatprep.subr.bf16.mxu0 0
        %2154 = vmatpush2.bf16.msra.mxu0 0
        %2155 = vmatprep.subr.bf16.mxu0 0
        %2156 = vmatpush2.bf16.msra.mxu0 0
        %2157 = vmatprep.subr.bf16.mxu0 0
        %2158 = vmatpush2.bf16.msra.mxu0 0
        %2159 = vmatprep.subr.bf16.mxu0 0
        %2160 = vmatpush2.bf16.msra.mxu0 0
        %2161 = vmatprep.subr.bf16.mxu0 0
        %2162 = vmatpush2.bf16.msra.mxu0 0
        %2163 = vmatprep.subr.bf16.mxu0 0
        %2164 = vmatpush2.bf16.msra.mxu0 0
        %2165 = vmatprep.subr.bf16.mxu0 0
        %2166 = vmatpush2.bf16.msra.mxu0 0
        %2167 = vmatprep.subr.bf16.mxu0 0
        %2168 = vmatpush2.bf16.msra.mxu0 0
        %2169 = vmatprep.mubr.bf16.mxu0 0
        %2170 = vmatmul.mubr.bf16.gmra.mxu0 %v2053
        %v2171 = vpop.f32.mrf.mxu0
        %v2172 = vadd.f32 0.0, %v2171
        %v2173 = vpop.f32.mrf.mxu0
        %v2174 = vpop.f32.mrf.mxu0
        %v2175 = vpop.f32.mrf.mxu0
        %2176 = vdwg.mxu0
        %v2177 = vpack.c.bf16 %v1986, %v1986
        %v2178 = vld [vmem:[%s35] sm:$0xff]
        %v2179 = vld [vmem:[%s35 + $0x8] sm:$0xff]
        %v2180 = vld [vmem:[%s35 + $0x10] sm:$0xf]
        %v2181 = vld [vmem:[%s35 + $0x14] sm:$0xff]
        %v2182 = vld [vmem:[%s35 + $0x1c] sm:$0xff]
        %v2183 = vld [vmem:[%s35 + $0x24] sm:$0xf]
        %v2184 = vld [vmem:[%s35 + $0x28] sm:$0xff]
        %v2185 = vld [vmem:[%s35 + $0x30] sm:$0xff]
        %v2186 = vld [vmem:[%s35 + $0x38] sm:$0xf]
        %v2187 = vld [vmem:[%s35 + $0x3c] sm:$0xff]
        %v2188 = vld [vmem:[%s35 + $0x44] sm:$0xff]
        %v2189 = vld [vmem:[%s35 + $0x4c] sm:$0xf]
        %v2190 = vpack.c.bf16 %v1971, %v1971
        %v2191 = vld [vmem:[%s35 + $0x50] sm:$0xff]
        %v2192 = vld [vmem:[%s35 + $0x58] sm:$0xff]
        %v2193 = vld [vmem:[%s35 + $0x60] sm:$0xf]
        %v2194 = vld [vmem:[%s35 + $0x64] sm:$0xff]
        %v2195 = vld [vmem:[%s35 + $0x6c] sm:$0xff]
        %v2196 = vld [vmem:[%s35 + $0x74] sm:$0xf]
        %v2197 = vld [vmem:[%s35 + $0x78] sm:$0xff]
        %v2198 = vld [vmem:[%s35 + $0x80] sm:$0xff]
        %v2199 = vld [vmem:[%s35 + $0x88] sm:$0xf]
        %v2200 = vld [vmem:[%s35 + $0x8c] sm:$0xff]
        %v2201 = vld [vmem:[%s35 + $0x94] sm:$0xff]
        %v2202 = vld [vmem:[%s35 + $0x9c] sm:$0xf]
        %v2215 = vunpack.c.l.b16 %v2191
        %v2216 = vunpack.c.h.b16 %v2191
        %v2217 = vunpack.c.l.b16 %v2192
        %v2218 = vunpack.c.h.b16 %v2192
        %v2219 = vunpack.c.l.b16 %v2193
        %v2220 = vunpack.c.l.b16 %v2194
        %v2221 = vunpack.c.h.b16 %v2194
        %v2222 = vunpack.c.l.b16 %v2195
        %v2223 = vunpack.c.h.b16 %v2195
        %v2224 = vunpack.c.l.b16 %v2196
        %v2225 = vunpack.c.l.b16 %v2197
        %v2226 = vunpack.c.h.b16 %v2197
        %v2227 = vunpack.c.l.b16 %v2198
        %v2228 = vunpack.c.h.b16 %v2198
        %v2229 = vunpack.c.l.b16 %v2199
        %v2230 = vunpack.c.l.b16 %v2200
        %v2231 = vunpack.c.h.b16 %v2200
        %v2232 = vunpack.c.l.b16 %v2201
        %v2233 = vunpack.c.h.b16 %v2201
        %v2234 = vunpack.c.l.b16 %v2202
        %v2235 = vpack.c.b16 %v2220, %v2215
        %v2236 = vpack.c.b16 %v2221, %v2216
        %v2237 = vpack.c.b16 %v2222, %v2217
        %v2238 = vpack.c.b16 %v2223, %v2218
        %v2239 = vpack.c.b16 %v2224, %v2219
        %v2240 = vpack.c.b16 %v2230, %v2225
        %v2241 = vpack.c.b16 %v2231, %v2226
        %v2242 = vpack.c.b16 %v2232, %v2227
        %v2243 = vpack.c.b16 %v2233, %v2228
        %v2244 = vpack.c.b16 %v2234, %v2229
        %v2256 = vsel %vm1218, %v2190, 0
        %2258 = vmatprep.subr.bf16.mxu0 0
        %2259 = vmatpush1.bf16.msra.mxu0 0
        %2260 = vmatprep.subr.bf16.mxu0 0
        %2261 = vmatpush1.bf16.msra.mxu0 0
        %2262 = vmatprep.subr.bf16.mxu0 0
        %2263 = vmatpush1.bf16.msra.mxu0 0
        %2264 = vmatprep.subr.bf16.mxu0 0
        %2265 = vmatpush1.bf16.msra.mxu0 0
        %2266 = vmatprep.subr.bf16.mxu0 0
        %2267 = vmatpush1.bf16.msra.mxu0 0
        %2268 = vmatprep.subr.bf16.mxu0 0
        %2269 = vmatpush1.bf16.msra.mxu0 0
        %2270 = vmatprep.subr.bf16.mxu0 %v2241
        %2271 = vmatpush1.bf16.msra.mxu0 %v2240
        %2272 = vmatprep.subr.bf16.mxu0 %v2236
        %2273 = vmatpush1.bf16.msra.mxu0 %v2235
        %2274 = vmatprep.subr.bf16.mxu0 0
        %2275 = vmatpush2.bf16.msra.mxu0 0
        %2276 = vmatprep.subr.bf16.mxu0 0
        %2277 = vmatpush2.bf16.msra.mxu0 0
        %2278 = vmatprep.subr.bf16.mxu0 0
        %2279 = vmatpush2.bf16.msra.mxu0 0
        %2280 = vmatprep.subr.bf16.mxu0 0
        %2281 = vmatpush2.bf16.msra.mxu0 0
        %2282 = vmatprep.subr.bf16.mxu0 0
        %2283 = vmatpush2.bf16.msra.mxu0 0
        %2284 = vmatprep.subr.bf16.mxu0 0
        %2285 = vmatpush2.bf16.msra.mxu0 0
        %2286 = vmatprep.subr.bf16.mxu0 0
        %2287 = vmatpush2.bf16.msra.mxu0 0
        %2288 = vmatprep.subr.bf16.mxu0 0
        %2289 = vmatpush2.bf16.msra.mxu0 0
        %2290 = vmatprep.mubr.bf16.mxu0 0
        %2291 = vmatmul.mubr.bf16.gmra.mxu0 %v2256
        %v2292 = vpop.f32.mrf.mxu0
        %v2293 = vadd.f32 0.0, %v2292
        %v2294 = vpop.f32.mrf.mxu0
        %v2295 = vadd.f32 0.0, %v2294
        %v2296 = vpop.f32.mrf.mxu0
        %v2297 = vpop.f32.mrf.mxu0
        %2298 = vdwg.mxu0
        %2299 = vmatprep.subr.bf16.mxu0 0
        %2300 = vmatpush1.bf16.msra.mxu0 0
        %2301 = vmatprep.subr.bf16.mxu0 0
        %2302 = vmatpush1.bf16.msra.mxu0 0
        %2303 = vmatprep.subr.bf16.mxu0 0
        %2304 = vmatpush1.bf16.msra.mxu0 0
        %2305 = vmatprep.subr.bf16.mxu0 0
        %2306 = vmatpush1.bf16.msra.mxu0 0
        %2307 = vmatprep.subr.bf16.mxu0 0
        %2308 = vmatpush1.bf16.msra.mxu0 0
        %2309 = vmatprep.subr.bf16.mxu0 0
        %2310 = vmatpush1.bf16.msra.mxu0 0
        %2311 = vmatprep.subr.bf16.mxu0 %v2243
        %2312 = vmatpush1.bf16.msra.mxu0 %v2242
        %2313 = vmatprep.subr.bf16.mxu0 %v2238
        %2314 = vmatpush1.bf16.msra.mxu0 %v2237
        %2315 = vmatprep.subr.bf16.mxu0 0
        %2316 = vmatpush2.bf16.msra.mxu0 0
        %2317 = vmatprep.subr.bf16.mxu0 0
        %2318 = vmatpush2.bf16.msra.mxu0 0
        %2319 = vmatprep.subr.bf16.mxu0 0
        %2320 = vmatpush2.bf16.msra.mxu0 0
        %2321 = vmatprep.subr.bf16.mxu0 0
        %2322 = vmatpush2.bf16.msra.mxu0 0
        %2323 = vmatprep.subr.bf16.mxu0 0
        %2324 = vmatpush2.bf16.msra.mxu0 0
        %2325 = vmatprep.subr.bf16.mxu0 0
        %2326 = vmatpush2.bf16.msra.mxu0 0
        %2327 = vmatprep.subr.bf16.mxu0 0
        %2328 = vmatpush2.bf16.msra.mxu0 0
        %2329 = vmatprep.subr.bf16.mxu0 0
        %2330 = vmatpush2.bf16.msra.mxu0 0
        %2331 = vmatprep.mubr.bf16.mxu0 0
        %2332 = vmatmul.mubr.bf16.gmra.mxu0 %v2256
        %v2333 = vpop.f32.mrf.mxu0
        %v2334 = vadd.f32 0.0, %v2333
        %v2335 = vpop.f32.mrf.mxu0
        %v2336 = vadd.f32 0.0, %v2335
        %v2337 = vpop.f32.mrf.mxu0
        %v2338 = vpop.f32.mrf.mxu0
        %2339 = vdwg.mxu0
        %2340 = vmatprep.subr.bf16.mxu0 0
        %2341 = vmatpush1.bf16.msra.mxu0 0
        %2342 = vmatprep.subr.bf16.mxu0 0
        %2343 = vmatpush1.bf16.msra.mxu0 0
        %2344 = vmatprep.subr.bf16.mxu0 0
        %2345 = vmatpush1.bf16.msra.mxu0 0
        %2346 = vmatprep.subr.bf16.mxu0 0
        %2347 = vmatpush1.bf16.msra.mxu0 0
        %2348 = vmatprep.subr.bf16.mxu0 0
        %2349 = vmatpush1.bf16.msra.mxu0 0
        %2350 = vmatprep.subr.bf16.mxu0 0
        %2351 = vmatpush1.bf16.msra.mxu0 0
        %2352 = vmatprep.subr.bf16.mxu0 0
        %2353 = vmatpush1.bf16.msra.mxu0 %v2244
        %2354 = vmatprep.subr.bf16.mxu0 0
        %2355 = vmatpush1.bf16.msra.mxu0 %v2239
        %2356 = vmatprep.subr.bf16.mxu0 0
        %2357 = vmatpush2.bf16.msra.mxu0 0
        %2358 = vmatprep.subr.bf16.mxu0 0
        %2359 = vmatpush2.bf16.msra.mxu0 0
        %2360 = vmatprep.subr.bf16.mxu0 0
        %2361 = vmatpush2.bf16.msra.mxu0 0
        %2362 = vmatprep.subr.bf16.mxu0 0
        %2363 = vmatpush2.bf16.msra.mxu0 0
        %2364 = vmatprep.subr.bf16.mxu0 0
        %2365 = vmatpush2.bf16.msra.mxu0 0
        %2366 = vmatprep.subr.bf16.mxu0 0
        %2367 = vmatpush2.bf16.msra.mxu0 0
        %2368 = vmatprep.subr.bf16.mxu0 0
        %2369 = vmatpush2.bf16.msra.mxu0 0
        %2370 = vmatprep.subr.bf16.mxu0 0
        %2371 = vmatpush2.bf16.msra.mxu0 0
        %2372 = vmatprep.mubr.bf16.mxu0 0
        %2373 = vmatmul.mubr.bf16.gmra.mxu0 %v2256
        %v2374 = vpop.f32.mrf.mxu0
        %v2375 = vadd.f32 0.0, %v2374
        %v2376 = vpop.f32.mrf.mxu0
        %v2377 = vpop.f32.mrf.mxu0
        %v2378 = vpop.f32.mrf.mxu0
        %2379 = vdwg.mxu0
        %v2392 = vunpack.c.l.b16 %v2178
        %v2393 = vunpack.c.h.b16 %v2178
        %v2394 = vunpack.c.l.b16 %v2179
        %v2395 = vunpack.c.h.b16 %v2179
        %v2396 = vunpack.c.l.b16 %v2180
        %v2397 = vunpack.c.l.b16 %v2181
        %v2398 = vunpack.c.h.b16 %v2181
        %v2399 = vunpack.c.l.b16 %v2182
        %v2400 = vunpack.c.h.b16 %v2182
        %v2401 = vunpack.c.l.b16 %v2183
        %v2402 = vunpack.c.l.b16 %v2184
        %v2403 = vunpack.c.h.b16 %v2184
        %v2404 = vunpack.c.l.b16 %v2185
        %v2405 = vunpack.c.h.b16 %v2185
        %v2406 = vunpack.c.l.b16 %v2186
        %v2407 = vunpack.c.l.b16 %v2187
        %v2408 = vunpack.c.h.b16 %v2187
        %v2409 = vunpack.c.l.b16 %v2188
        %v2410 = vunpack.c.h.b16 %v2188
        %v2411 = vunpack.c.l.b16 %v2189
        %v2412 = vpack.c.b16 %v2397, %v2392
        %v2413 = vpack.c.b16 %v2398, %v2393
        %v2414 = vpack.c.b16 %v2399, %v2394
        %v2415 = vpack.c.b16 %v2400, %v2395
        %v2416 = vpack.c.b16 %v2401, %v2396
        %v2417 = vpack.c.b16 %v2407, %v2402
        %v2418 = vpack.c.b16 %v2408, %v2403
        %v2419 = vpack.c.b16 %v2409, %v2404
        %v2420 = vpack.c.b16 %v2410, %v2405
        %v2421 = vpack.c.b16 %v2411, %v2406
        %v2433 = vsel %vm1218, %v2177, 0
        %2435 = vmatprep.subr.bf16.mxu0 0
        %2436 = vmatpush1.bf16.msra.mxu0 0
        %2437 = vmatprep.subr.bf16.mxu0 0
        %2438 = vmatpush1.bf16.msra.mxu0 0
        %2439 = vmatprep.subr.bf16.mxu0 0
        %2440 = vmatpush1.bf16.msra.mxu0 0
        %2441 = vmatprep.subr.bf16.mxu0 0
        %2442 = vmatpush1.bf16.msra.mxu0 0
        %2443 = vmatprep.subr.bf16.mxu0 0
        %2444 = vmatpush1.bf16.msra.mxu0 0
        %2445 = vmatprep.subr.bf16.mxu0 0
        %2446 = vmatpush1.bf16.msra.mxu0 0
        %2447 = vmatprep.subr.bf16.mxu0 %v2418
        %2448 = vmatpush1.bf16.msra.mxu0 %v2417
        %2449 = vmatprep.subr.bf16.mxu0 %v2413
        %2450 = vmatpush1.bf16.msra.mxu0 %v2412
        %2451 = vmatprep.subr.bf16.mxu0 0
        %2452 = vmatpush2.bf16.msra.mxu0 0
        %2453 = vmatprep.subr.bf16.mxu0 0
        %2454 = vmatpush2.bf16.msra.mxu0 0
        %2455 = vmatprep.subr.bf16.mxu0 0
        %2456 = vmatpush2.bf16.msra.mxu0 0
        %2457 = vmatprep.subr.bf16.mxu0 0
        %2458 = vmatpush2.bf16.msra.mxu0 0
        %2459 = vmatprep.subr.bf16.mxu0 0
        %2460 = vmatpush2.bf16.msra.mxu0 0
        %2461 = vmatprep.subr.bf16.mxu0 0
        %2462 = vmatpush2.bf16.msra.mxu0 0
        %2463 = vmatprep.subr.bf16.mxu0 0
        %2464 = vmatpush2.bf16.msra.mxu0 0
        %2465 = vmatprep.subr.bf16.mxu0 0
        %2466 = vmatpush2.bf16.msra.mxu0 0
        %2467 = vmatprep.mubr.bf16.mxu0 0
        %2468 = vmatmul.mubr.bf16.gmra.mxu0 %v2433
        %v2469 = vpop.f32.mrf.mxu0
        %v2470 = vadd.f32 %v2293, %v2469
        %v2471 = vpop.f32.mrf.mxu0
        %v2472 = vadd.f32 %v2295, %v2471
        %v2473 = vpop.f32.mrf.mxu0
        %v2474 = vpop.f32.mrf.mxu0
        %2475 = vdwg.mxu0
        %2476 = vmatprep.subr.bf16.mxu0 0
        %2477 = vmatpush1.bf16.msra.mxu0 0
        %2478 = vmatprep.subr.bf16.mxu0 0
        %2479 = vmatpush1.bf16.msra.mxu0 0
        %2480 = vmatprep.subr.bf16.mxu0 0
        %2481 = vmatpush1.bf16.msra.mxu0 0
        %2482 = vmatprep.subr.bf16.mxu0 0
        %2483 = vmatpush1.bf16.msra.mxu0 0
        %2484 = vmatprep.subr.bf16.mxu0 0
        %2485 = vmatpush1.bf16.msra.mxu0 0
        %2486 = vmatprep.subr.bf16.mxu0 0
        %2487 = vmatpush1.bf16.msra.mxu0 0
        %2488 = vmatprep.subr.bf16.mxu0 %v2420
        %2489 = vmatpush1.bf16.msra.mxu0 %v2419
        %2490 = vmatprep.subr.bf16.mxu0 %v2415
        %2491 = vmatpush1.bf16.msra.mxu0 %v2414
        %2492 = vmatprep.subr.bf16.mxu0 0
        %2493 = vmatpush2.bf16.msra.mxu0 0
        %2494 = vmatprep.subr.bf16.mxu0 0
        %2495 = vmatpush2.bf16.msra.mxu0 0
        %2496 = vmatprep.subr.bf16.mxu0 0
        %2497 = vmatpush2.bf16.msra.mxu0 0
        %2498 = vmatprep.subr.bf16.mxu0 0
        %2499 = vmatpush2.bf16.msra.mxu0 0
        %2500 = vmatprep.subr.bf16.mxu0 0
        %2501 = vmatpush2.bf16.msra.mxu0 0
        %2502 = vmatprep.subr.bf16.mxu0 0
        %2503 = vmatpush2.bf16.msra.mxu0 0
        %2504 = vmatprep.subr.bf16.mxu0 0
        %2505 = vmatpush2.bf16.msra.mxu0 0
        %2506 = vmatprep.subr.bf16.mxu0 0
        %2507 = vmatpush2.bf16.msra.mxu0 0
        %2508 = vmatprep.mubr.bf16.mxu0 0
        %2509 = vmatmul.mubr.bf16.gmra.mxu0 %v2433
        %v2510 = vpop.f32.mrf.mxu0
        %v2511 = vadd.f32 %v2334, %v2510
        %v2512 = vpop.f32.mrf.mxu0
        %v2513 = vadd.f32 %v2336, %v2512
        %v2514 = vpop.f32.mrf.mxu0
        %v2515 = vpop.f32.mrf.mxu0
        %2516 = vdwg.mxu0
        %2517 = vmatprep.subr.bf16.mxu0 0
        %2518 = vmatpush1.bf16.msra.mxu0 0
        %2519 = vmatprep.subr.bf16.mxu0 0
        %2520 = vmatpush1.bf16.msra.mxu0 0
        %2521 = vmatprep.subr.bf16.mxu0 0
        %2522 = vmatpush1.bf16.msra.mxu0 0
        %2523 = vmatprep.subr.bf16.mxu0 0
        %2524 = vmatpush1.bf16.msra.mxu0 0
        %2525 = vmatprep.subr.bf16.mxu0 0
        %2526 = vmatpush1.bf16.msra.mxu0 0
        %2527 = vmatprep.subr.bf16.mxu0 0
        %2528 = vmatpush1.bf16.msra.mxu0 0
        %2529 = vmatprep.subr.bf16.mxu0 0
        %2530 = vmatpush1.bf16.msra.mxu0 %v2421
        %2531 = vmatprep.subr.bf16.mxu0 0
        %2532 = vmatpush1.bf16.msra.mxu0 %v2416
        %2533 = vmatprep.subr.bf16.mxu0 0
        %2534 = vmatpush2.bf16.msra.mxu0 0
        %2535 = vmatprep.subr.bf16.mxu0 0
        %2536 = vmatpush2.bf16.msra.mxu0 0
        %2537 = vmatprep.subr.bf16.mxu0 0
        %2538 = vmatpush2.bf16.msra.mxu0 0
        %2539 = vmatprep.subr.bf16.mxu0 0
        %2540 = vmatpush2.bf16.msra.mxu0 0
        %2541 = vmatprep.subr.bf16.mxu0 0
        %2542 = vmatpush2.bf16.msra.mxu0 0
        %2543 = vmatprep.subr.bf16.mxu0 0
        %2544 = vmatpush2.bf16.msra.mxu0 0
        %2545 = vmatprep.subr.bf16.mxu0 0
        %2546 = vmatpush2.bf16.msra.mxu0 0
        %2547 = vmatprep.subr.bf16.mxu0 0
        %2548 = vmatpush2.bf16.msra.mxu0 0
        %2549 = vmatprep.mubr.bf16.mxu0 0
        %2550 = vmatmul.mubr.bf16.gmra.mxu0 %v2433
        %v2551 = vpop.f32.mrf.mxu0
        %v2552 = vadd.f32 %v2375, %v2551
        %v2553 = vpop.f32.mrf.mxu0
        %v2554 = vpop.f32.mrf.mxu0
        %v2555 = vpop.f32.mrf.mxu0
        %2556 = vdwg.mxu0
        %v2557 = vrot.slane %v2090, 6
        %v2558 = vlaneseq
        %v2559 = vshrl.u32 %v2558, 7
        %v2560 = vsub.s32 0, %v2559
        %v2561 = vrot.slane %v2470, %v2560
        %v2562 = vadd.f32 %v2557, %v2561
        %v2563 = vmul.f32 %v1177, %v2562
        %v2564 = vadd.f32 %v2563, 0.0
        %v2565 = vrot.slane %v2092, 7
        %v2566 = vlaneseq
        %v2567 = vshrl.u32 %v2566, 7
        %v2568 = vsub.s32 0, %v2567
        %v2569 = vrot.slane %v2472, %v2568
        %v2570 = vadd.f32 %v2565, %v2569
        %v2571 = vmul.f32 %v1181, %v2570
        %v2572 = vadd.f32 %v2564, %v2571
        %v2573 = vadd.f32 %v2572, %v2131
        %v2574 = vlaneseq
        %v2575 = vshrl.u32 %v2574, 7
        %v2576 = vsub.s32 0, %v2575
        %v2577 = vrot.slane %v2511, %v2576
        %v2578 = vadd.f32 %v2573, %v2577
        %v2579 = vrot.slane %v2133, 1
        %v2580 = vlaneseq
        %v2581 = vshrl.u32 %v2580, 7
        %v2582 = vsub.s32 0, %v2581
        %v2583 = vrot.slane %v2513, %v2582
        %v2584 = vadd.f32 %v2579, %v2583
        %v2585 = vmul.f32 %v1185, %v2584
        %v2586 = vadd.f32 %v2578, %v2585
        %v2587 = vrot.slane %v2172, 2
        %v2588 = vlaneseq
        %v2589 = vshrl.u32 %v2588, 7
        %v2590 = vsub.s32 0, %v2589
        %v2591 = vrot.slane %v2552, %v2590
        %v2592 = vadd.f32 %v2587, %v2591
        %v2593 = vmul.f32 %v1189, %v2592
        %v2594 = vadd.f32 %v2586, %v2593
        %v2595 = vld [vmem:[%s37] sm:$0x1]
        %v2597 = vlaneseq
        %v2598 = vshrl.u32 %v2597, 7
        %v2599 = vsub.s32 0, %v2598
        %v2600 = vrot.slane %v2595, %v2599
        %v2602 = vadd.f32 %v2594, %v2600
        %v2603 = vmax.f32 %v2602, 0.0
        %v2604 = vpack.c.bf16 %v2603, %v2603
        %v2605 = vld [vmem:[%s41] sm:$0x1]
        %v2606 = vld [vmem:[%s39] sm:$0xff]
        %v2607 = vld [vmem:[%s39 + $0x8] sm:$0xf]
        %v2608 = vld [vmem:[%s39 + $0xc] sm:$0xff]
        %v2609 = vld [vmem:[%s39 + $0x14] sm:$0xf]
        %v2610 = vld [vmem:[%s39 + $0x18] sm:$0xff]
        %v2611 = vld [vmem:[%s39 + $0x20] sm:$0xf]
        %v2612 = vld [vmem:[%s39 + $0x24] sm:$0xff]
        %v2613 = vld [vmem:[%s39 + $0x2c] sm:$0xf]
        %v2614 = vld [vmem:[%s39 + $0x30] sm:$0xff]
        %v2615 = vld [vmem:[%s39 + $0x38] sm:$0xf]
        %v2616 = vld [vmem:[%s39 + $0x3c] sm:$0xff]
        %v2617 = vld [vmem:[%s39 + $0x44] sm:$0xf]
        %v2618 = vld [vmem:[%s39 + $0x48] sm:$0xff]
        %v2619 = vld [vmem:[%s39 + $0x50] sm:$0xf]
        %v2620 = vld [vmem:[%s39 + $0x54] sm:$0xff]
        %v2621 = vld [vmem:[%s39 + $0x5c] sm:$0xf]
        %v2622 = vld [vmem:[%s39 + $0x60] sm:$0xff]
        %v2623 = vld [vmem:[%s39 + $0x68] sm:$0xf]
        %v2624 = vld [vmem:[%s39 + $0x6c] sm:$0xff]
        %v2625 = vld [vmem:[%s39 + $0x74] sm:$0xf]
        %v2626 = vld [vmem:[%s39 + $0x78] sm:$0xff]
        %v2627 = vld [vmem:[%s39 + $0x80] sm:$0xf]
        %v2628 = vld [vmem:[%s39 + $0x84] sm:$0xff]
        %v2629 = vld [vmem:[%s39 + $0x8c] sm:$0xf]
        %v2630 = vld [vmem:[%s39 + $0x90] sm:$0xff]
        %v2631 = vld [vmem:[%s39 + $0x98] sm:$0xf]
        %v2632 = vld [vmem:[%s39 + $0x9c] sm:$0xff]
        %v2633 = vld [vmem:[%s39 + $0xa4] sm:$0xf]
        %v2634 = vld [vmem:[%s39 + $0xa8] sm:$0xff]
        %v2635 = vld [vmem:[%s39 + $0xb0] sm:$0xf]
        %v2636 = vld [vmem:[%s39 + $0xb4] sm:$0xff]
        %v2637 = vld [vmem:[%s39 + $0xbc] sm:$0xf]
        %v2670 = vunpack.c.l.b16 %v2606
        %v2671 = vunpack.c.h.b16 %v2606
        %v2672 = vunpack.c.l.b16 %v2607
        %v2673 = vunpack.c.l.b16 %v2608
        %v2674 = vunpack.c.h.b16 %v2608
        %v2675 = vunpack.c.l.b16 %v2609
        %v2676 = vunpack.c.l.b16 %v2610
        %v2677 = vunpack.c.h.b16 %v2610
        %v2678 = vunpack.c.l.b16 %v2611
        %v2679 = vunpack.c.l.b16 %v2612
        %v2680 = vunpack.c.h.b16 %v2612
        %v2681 = vunpack.c.l.b16 %v2613
        %v2682 = vunpack.c.l.b16 %v2614
        %v2683 = vunpack.c.h.b16 %v2614
        %v2684 = vunpack.c.l.b16 %v2615
        %v2685 = vunpack.c.l.b16 %v2616
        %v2686 = vunpack.c.h.b16 %v2616
        %v2687 = vunpack.c.l.b16 %v2617
        %v2688 = vunpack.c.l.b16 %v2618
        %v2689 = vunpack.c.h.b16 %v2618
        %v2690 = vunpack.c.l.b16 %v2619
        %v2691 = vunpack.c.l.b16 %v2620
        %v2692 = vunpack.c.h.b16 %v2620
        %v2693 = vunpack.c.l.b16 %v2621
        %v2694 = vunpack.c.l.b16 %v2622
        %v2695 = vunpack.c.h.b16 %v2622
        %v2696 = vunpack.c.l.b16 %v2623
        %v2697 = vunpack.c.l.b16 %v2624
        %v2698 = vunpack.c.h.b16 %v2624
        %v2699 = vunpack.c.l.b16 %v2625
        %v2700 = vunpack.c.l.b16 %v2626
        %v2701 = vunpack.c.h.b16 %v2626
        %v2702 = vunpack.c.l.b16 %v2627
        %v2703 = vunpack.c.l.b16 %v2628
        %v2704 = vunpack.c.h.b16 %v2628
        %v2705 = vunpack.c.l.b16 %v2629
        %v2706 = vunpack.c.l.b16 %v2630
        %v2707 = vunpack.c.h.b16 %v2630
        %v2708 = vunpack.c.l.b16 %v2631
        %v2709 = vunpack.c.l.b16 %v2632
        %v2710 = vunpack.c.h.b16 %v2632
        %v2711 = vunpack.c.l.b16 %v2633
        %v2712 = vunpack.c.l.b16 %v2634
        %v2713 = vunpack.c.h.b16 %v2634
        %v2714 = vunpack.c.l.b16 %v2635
        %v2715 = vunpack.c.l.b16 %v2636
        %v2716 = vunpack.c.h.b16 %v2636
        %v2717 = vunpack.c.l.b16 %v2637
        %v2718 = vpack.c.b16 %v2673, %v2670
        %v2719 = vpack.c.b16 %v2674, %v2671
        %v2720 = vpack.c.b16 %v2675, %v2672
        %v2721 = vpack.c.b16 %v2679, %v2676
        %v2722 = vpack.c.b16 %v2680, %v2677
        %v2723 = vpack.c.b16 %v2681, %v2678
        %v2724 = vpack.c.b16 %v2685, %v2682
        %v2725 = vpack.c.b16 %v2686, %v2683
        %v2726 = vpack.c.b16 %v2687, %v2684
        %v2727 = vpack.c.b16 %v2691, %v2688
        %v2728 = vpack.c.b16 %v2692, %v2689
        %v2729 = vpack.c.b16 %v2693, %v2690
        %v2730 = vpack.c.b16 %v2697, %v2694
        %v2731 = vpack.c.b16 %v2698, %v2695
        %v2732 = vpack.c.b16 %v2699, %v2696
        %v2733 = vpack.c.b16 %v2703, %v2700
        %v2734 = vpack.c.b16 %v2704, %v2701
        %v2735 = vpack.c.b16 %v2705, %v2702
        %v2736 = vpack.c.b16 %v2709, %v2706
        %v2737 = vpack.c.b16 %v2710, %v2707
        %v2738 = vpack.c.b16 %v2711, %v2708
        %v2739 = vpack.c.b16 %v2715, %v2712
        %v2740 = vpack.c.b16 %v2716, %v2713
        %v2741 = vpack.c.b16 %v2717, %v2714
        %2766 = vmatprep.subr.bf16.mxu0 %v2740
        %2767 = vmatpush1.bf16.msra.mxu0 %v2739
        %2768 = vmatprep.subr.bf16.mxu0 %v2737
        %2769 = vmatpush1.bf16.msra.mxu0 %v2736
        %2770 = vmatprep.subr.bf16.mxu0 %v2734
        %2771 = vmatpush1.bf16.msra.mxu0 %v2733
        %2772 = vmatprep.subr.bf16.mxu0 %v2731
        %2773 = vmatpush1.bf16.msra.mxu0 %v2730
        %2774 = vmatprep.subr.bf16.mxu0 %v2728
        %2775 = vmatpush1.bf16.msra.mxu0 %v2727
        %2776 = vmatprep.subr.bf16.mxu0 %v2725
        %2777 = vmatpush1.bf16.msra.mxu0 %v2724
        %2778 = vmatprep.subr.bf16.mxu0 %v2722
        %2779 = vmatpush1.bf16.msra.mxu0 %v2721
        %2780 = vmatprep.subr.bf16.mxu0 %v2719
        %2781 = vmatpush1.bf16.msra.mxu0 %v2718
        %2782 = vmatprep.subr.bf16.mxu0 0
        %2783 = vmatpush2.bf16.msra.mxu0 0
        %2784 = vmatprep.subr.bf16.mxu0 0
        %2785 = vmatpush2.bf16.msra.mxu0 0
        %2786 = vmatprep.subr.bf16.mxu0 0
        %2787 = vmatpush2.bf16.msra.mxu0 0
        %2788 = vmatprep.subr.bf16.mxu0 0
        %2789 = vmatpush2.bf16.msra.mxu0 0
        %2790 = vmatprep.subr.bf16.mxu0 0
        %2791 = vmatpush2.bf16.msra.mxu0 0
        %2792 = vmatprep.subr.bf16.mxu0 0
        %2793 = vmatpush2.bf16.msra.mxu0 0
        %2794 = vmatprep.subr.bf16.mxu0 0
        %2795 = vmatpush2.bf16.msra.mxu0 0
        %2796 = vmatprep.subr.bf16.mxu0 0
        %2797 = vmatpush2.bf16.msra.mxu0 0
        %2798 = vmatprep.mubr.bf16.mxu0 0
        %2799 = vmatmul.mubr.bf16.gmra.mxu0 %v2604
        %v2800 = vpop.f32.mrf.mxu0
        %v2801 = vadd.f32 0.0, %v2800
        %v2802 = vpop.f32.mrf.mxu0
        %v2803 = vadd.f32 0.0, %v2802
        %v2804 = vpop.f32.mrf.mxu0
        %v2805 = vpop.f32.mrf.mxu0
        %2806 = vdwg.mxu0
        %2807 = vmatprep.subr.bf16.mxu0 0
        %2808 = vmatpush1.bf16.msra.mxu0 %v2741
        %2809 = vmatprep.subr.bf16.mxu0 0
        %2810 = vmatpush1.bf16.msra.mxu0 %v2738
        %2811 = vmatprep.subr.bf16.mxu0 0
        %2812 = vmatpush1.bf16.msra.mxu0 %v2735
        %2813 = vmatprep.subr.bf16.mxu0 0
        %2814 = vmatpush1.bf16.msra.mxu0 %v2732
        %2815 = vmatprep.subr.bf16.mxu0 0
        %2816 = vmatpush1.bf16.msra.mxu0 %v2729
        %2817 = vmatprep.subr.bf16.mxu0 0
        %2818 = vmatpush1.bf16.msra.mxu0 %v2726
        %2819 = vmatprep.subr.bf16.mxu0 0
        %2820 = vmatpush1.bf16.msra.mxu0 %v2723
        %2821 = vmatprep.subr.bf16.mxu0 0
        %2822 = vmatpush1.bf16.msra.mxu0 %v2720
        %2823 = vmatprep.subr.bf16.mxu0 0
        %2824 = vmatpush2.bf16.msra.mxu0 0
        %2825 = vmatprep.subr.bf16.mxu0 0
        %2826 = vmatpush2.bf16.msra.mxu0 0
        %2827 = vmatprep.subr.bf16.mxu0 0
        %2828 = vmatpush2.bf16.msra.mxu0 0
        %2829 = vmatprep.subr.bf16.mxu0 0
        %2830 = vmatpush2.bf16.msra.mxu0 0
        %2831 = vmatprep.subr.bf16.mxu0 0
        %2832 = vmatpush2.bf16.msra.mxu0 0
        %2833 = vmatprep.subr.bf16.mxu0 0
        %2834 = vmatpush2.bf16.msra.mxu0 0
        %2835 = vmatprep.subr.bf16.mxu0 0
        %2836 = vmatpush2.bf16.msra.mxu0 0
        %2837 = vmatprep.subr.bf16.mxu0 0
        %2838 = vmatpush2.bf16.msra.mxu0 0
        %2839 = vmatprep.mubr.bf16.mxu0 0
        %2840 = vmatmul.mubr.bf16.gmra.mxu0 %v2604
        %v2841 = vpop.f32.mrf.mxu0
        %v2842 = vadd.f32 0.0, %v2841
        %v2843 = vpop.f32.mrf.mxu0
        %v2844 = vpop.f32.mrf.mxu0
        %v2845 = vpop.f32.mrf.mxu0
        %2846 = vdwg.mxu0
        %v2847 = vrot.slane %v2801, 6
        %v2848 = vmul.f32 %v1177, %v2847
        %v2849 = vadd.f32 %v2848, 0.0
        %2851 = vrot.lane.b32.xlu0 %v2801, 64
        %v2852 = vpop.permute.xlu0 %2851
        %v2854 = vrot.slane %v2852, 7
        %v2855 = vmul.f32 %v1181, %v2854
        %v2856 = vadd.f32 %v2849, %v2855
        %v2857 = vadd.f32 %v2856, %v2803
        %2859 = vrot.lane.b32.xlu0 %v2803, 64
        %v2860 = vpop.permute.xlu0 %2859
        %v2862 = vrot.slane %v2860, 1
        %v2863 = vmul.f32 %v1185, %v2862
        %v2864 = vadd.f32 %v2857, %v2863
        %v2865 = vrot.slane %v2842, 2
        %v2866 = vmul.f32 %v1189, %v2865
        %v2867 = vadd.f32 %v2864, %v2866
        %v2869 = vlaneseq
        %v2870 = vshrl.u32 %v2869, 7
        %v2871 = vsub.s32 0, %v2870
        %v2872 = vrot.slane %v2605, %v2871
        %v2874 = vadd.f32 %v2867, %v2872
        %v2875 = vpack.c.bf16 %v2874, %v2874
        %v2876 = vld [vmem:[%s43] sm:$0xf]
        %v2877 = vld [vmem:[%s43 + $0x4] sm:$0xf]
        %v2878 = vld [vmem:[%s43 + $0x8] sm:$0xf]
        %v2879 = vld [vmem:[%s43 + $0xc] sm:$0xf]
        %v2880 = vld [vmem:[%s43 + $0x10] sm:$0xf]
        %v2881 = vld [vmem:[%s43 + $0x14] sm:$0xf]
        %v2882 = vld [vmem:[%s43 + $0x18] sm:$0xf]
        %v2883 = vld [vmem:[%s43 + $0x1c] sm:$0xf]
        %v2884 = vld [vmem:[%s45] sm:$0x1]
        %v2886 = vlaneseq
        %v2887 = vshrl.u32 %v2886, 7
        %v2888 = vsub.s32 0, %v2887
        %v2889 = vrot.slane %v2884, %v2888
        %v2899 = vunpack.c.l.b16 %v2876
        %v2900 = vunpack.c.l.b16 %v2877
        %v2901 = vunpack.c.l.b16 %v2878
        %v2902 = vunpack.c.l.b16 %v2879
        %v2903 = vunpack.c.l.b16 %v2880
        %v2904 = vunpack.c.l.b16 %v2881
        %v2905 = vunpack.c.l.b16 %v2882
        %v2906 = vunpack.c.l.b16 %v2883
        %v2907 = vpack.c.b16 %v2900, %v2899
        %v2908 = vpack.c.b16 %v2902, %v2901
        %v2909 = vpack.c.b16 %v2904, %v2903
        %v2910 = vpack.c.b16 %v2906, %v2905
        %v2916 = vsel %vm1412, %v2875, 0
        %2918 = vmatprep.subr.bf16.mxu0 0
        %2919 = vmatpush1.bf16.msra.mxu0 0
        %2920 = vmatprep.subr.bf16.mxu0 0
        %2921 = vmatpush1.bf16.msra.mxu0 0
        %2922 = vmatprep.subr.bf16.mxu0 0
        %2923 = vmatpush1.bf16.msra.mxu0 0
        %2924 = vmatprep.subr.bf16.mxu0 0
        %2925 = vmatpush1.bf16.msra.mxu0 0
        %2926 = vmatprep.subr.bf16.mxu0 0
        %2927 = vmatpush1.bf16.msra.mxu0 %v2910
        %2928 = vmatprep.subr.bf16.mxu0 0
        %2929 = vmatpush1.bf16.msra.mxu0 %v2909
        %2930 = vmatprep.subr.bf16.mxu0 0
        %2931 = vmatpush1.bf16.msra.mxu0 %v2908
        %2932 = vmatprep.subr.bf16.mxu0 0
        %2933 = vmatpush1.bf16.msra.mxu0 %v2907
        %2934 = vmatprep.subr.bf16.mxu0 0
        %2935 = vmatpush2.bf16.msra.mxu0 0
        %2936 = vmatprep.subr.bf16.mxu0 0
        %2937 = vmatpush2.bf16.msra.mxu0 0
        %2938 = vmatprep.subr.bf16.mxu0 0
        %2939 = vmatpush2.bf16.msra.mxu0 0
        %2940 = vmatprep.subr.bf16.mxu0 0
        %2941 = vmatpush2.bf16.msra.mxu0 0
        %2942 = vmatprep.subr.bf16.mxu0 0
        %2943 = vmatpush2.bf16.msra.mxu0 0
        %2944 = vmatprep.subr.bf16.mxu0 0
        %2945 = vmatpush2.bf16.msra.mxu0 0
        %2946 = vmatprep.subr.bf16.mxu0 0
        %2947 = vmatpush2.bf16.msra.mxu0 0
        %2948 = vmatprep.subr.bf16.mxu0 0
        %2949 = vmatpush2.bf16.msra.mxu0 0
        %2950 = vmatprep.mubr.bf16.mxu0 0
        %2951 = vmatmul.mubr.bf16.gmra.mxu0 %v2916
        %v2952 = vpop.f32.mrf.mxu0
        %v2953 = vadd.f32 %v2889, %v2952
        %v2954 = vpop.f32.mrf.mxu0
        %v2955 = vpop.f32.mrf.mxu0
        %v2956 = vpop.f32.mrf.mxu0
        %2957 = vdwg.mxu0
        %2958 = vst.msk [vmem:[%s1097] sm:$0xff] %vm1218, %v2953
        %v2959 = vpack.c.bf16 %v2953, %v2953
        %v2960 = vld [vmem:[%s49] sm:$0x1]
        %v2961 = vld [vmem:[%s47] sm:$0xff]
        %v2962 = vld [vmem:[%s47 + $0x8] sm:$0xf]
        %v2963 = vld [vmem:[%s47 + $0xc] sm:$0xff]
        %v2964 = vld [vmem:[%s47 + $0x14] sm:$0xf]
        %v2965 = vld [vmem:[%s47 + $0x18] sm:$0xff]
        %v2966 = vld [vmem:[%s47 + $0x20] sm:$0xf]
        %v2967 = vld [vmem:[%s47 + $0x24] sm:$0xff]
        %v2968 = vld [vmem:[%s47 + $0x2c] sm:$0xf]
        %v2977 = vunpack.c.l.b16 %v2961
        %v2978 = vunpack.c.h.b16 %v2961
        %v2979 = vunpack.c.l.b16 %v2962
        %v2980 = vunpack.c.l.b16 %v2963
        %v2981 = vunpack.c.h.b16 %v2963
        %v2982 = vunpack.c.l.b16 %v2964
        %v2983 = vunpack.c.l.b16 %v2965
        %v2984 = vunpack.c.h.b16 %v2965
        %v2985 = vunpack.c.l.b16 %v2966
        %v2986 = vunpack.c.l.b16 %v2967
        %v2987 = vunpack.c.h.b16 %v2967
        %v2988 = vunpack.c.l.b16 %v2968
        %v2989 = vpack.c.b16 %v2980, %v2977
        %v2990 = vpack.c.b16 %v2981, %v2978
        %v2991 = vpack.c.b16 %v2982, %v2979
        %v2992 = vpack.c.b16 %v2986, %v2983
        %v2993 = vpack.c.b16 %v2987, %v2984
        %v2994 = vpack.c.b16 %v2988, %v2985
        %v3002 = vsel %vm1218, %v2959, 0
        %3004 = vmatprep.subr.bf16.mxu0 0
        %3005 = vmatpush1.bf16.msra.mxu0 0
        %3006 = vmatprep.subr.bf16.mxu0 0
        %3007 = vmatpush1.bf16.msra.mxu0 0
        %3008 = vmatprep.subr.bf16.mxu0 0
        %3009 = vmatpush1.bf16.msra.mxu0 0
        %3010 = vmatprep.subr.bf16.mxu0 0
        %3011 = vmatpush1.bf16.msra.mxu0 0
        %3012 = vmatprep.subr.bf16.mxu0 0
        %3013 = vmatpush1.bf16.msra.mxu0 0
        %3014 = vmatprep.subr.bf16.mxu0 0
        %3015 = vmatpush1.bf16.msra.mxu0 0
        %3016 = vmatprep.subr.bf16.mxu0 %v2993
        %3017 = vmatpush1.bf16.msra.mxu0 %v2992
        %3018 = vmatprep.subr.bf16.mxu0 %v2990
        %3019 = vmatpush1.bf16.msra.mxu0 %v2989
        %3020 = vmatprep.subr.bf16.mxu0 0
        %3021 = vmatpush2.bf16.msra.mxu0 0
        %3022 = vmatprep.subr.bf16.mxu0 0
        %3023 = vmatpush2.bf16.msra.mxu0 0
        %3024 = vmatprep.subr.bf16.mxu0 0
        %3025 = vmatpush2.bf16.msra.mxu0 0
        %3026 = vmatprep.subr.bf16.mxu0 0
        %3027 = vmatpush2.bf16.msra.mxu0 0
        %3028 = vmatprep.subr.bf16.mxu0 0
        %3029 = vmatpush2.bf16.msra.mxu0 0
        %3030 = vmatprep.subr.bf16.mxu0 0
        %3031 = vmatpush2.bf16.msra.mxu0 0
        %3032 = vmatprep.subr.bf16.mxu0 0
        %3033 = vmatpush2.bf16.msra.mxu0 0
        %3034 = vmatprep.subr.bf16.mxu0 0
        %3035 = vmatpush2.bf16.msra.mxu0 0
        %3036 = vmatprep.mubr.bf16.mxu0 0
        %3037 = vmatmul.mubr.bf16.gmra.mxu0 %v3002
        %v3038 = vpop.f32.mrf.mxu0
        %v3039 = vadd.f32 0.0, %v3038
        %v3040 = vpop.f32.mrf.mxu0
        %v3041 = vadd.f32 0.0, %v3040
        %v3042 = vpop.f32.mrf.mxu0
        %v3043 = vpop.f32.mrf.mxu0
        %3044 = vdwg.mxu0
        %3045 = vmatprep.subr.bf16.mxu0 0
        %3046 = vmatpush1.bf16.msra.mxu0 0
        %3047 = vmatprep.subr.bf16.mxu0 0
        %3048 = vmatpush1.bf16.msra.mxu0 0
        %3049 = vmatprep.subr.bf16.mxu0 0
        %3050 = vmatpush1.bf16.msra.mxu0 0
        %3051 = vmatprep.subr.bf16.mxu0 0
        %3052 = vmatpush1.bf16.msra.mxu0 0
        %3053 = vmatprep.subr.bf16.mxu0 0
        %3054 = vmatpush1.bf16.msra.mxu0 0
        %3055 = vmatprep.subr.bf16.mxu0 0
        %3056 = vmatpush1.bf16.msra.mxu0 0
        %3057 = vmatprep.subr.bf16.mxu0 0
        %3058 = vmatpush1.bf16.msra.mxu0 %v2994
        %3059 = vmatprep.subr.bf16.mxu0 0
        %3060 = vmatpush1.bf16.msra.mxu0 %v2991
        %3061 = vmatprep.subr.bf16.mxu0 0
        %3062 = vmatpush2.bf16.msra.mxu0 0
        %3063 = vmatprep.subr.bf16.mxu0 0
        %3064 = vmatpush2.bf16.msra.mxu0 0
        %3065 = vmatprep.subr.bf16.mxu0 0
        %3066 = vmatpush2.bf16.msra.mxu0 0
        %3067 = vmatprep.subr.bf16.mxu0 0
        %3068 = vmatpush2.bf16.msra.mxu0 0
        %3069 = vmatprep.subr.bf16.mxu0 0
        %3070 = vmatpush2.bf16.msra.mxu0 0
        %3071 = vmatprep.subr.bf16.mxu0 0
        %3072 = vmatpush2.bf16.msra.mxu0 0
        %3073 = vmatprep.subr.bf16.mxu0 0
        %3074 = vmatpush2.bf16.msra.mxu0 0
        %3075 = vmatprep.subr.bf16.mxu0 0
        %3076 = vmatpush2.bf16.msra.mxu0 0
        %3077 = vmatprep.mubr.bf16.mxu0 0
        %3078 = vmatmul.mubr.bf16.gmra.mxu0 %v3002
        %v3079 = vpop.f32.mrf.mxu0
        %v3080 = vadd.f32 0.0, %v3079
        %v3081 = vpop.f32.mrf.mxu0
        %v3082 = vpop.f32.mrf.mxu0
        %v3083 = vpop.f32.mrf.mxu0
        %3084 = vdwg.mxu0
        %v3085 = vrot.slane %v3039, 6
        %v3086 = vmul.f32 %v1177, %v3085
        %v3087 = vadd.f32 %v3086, 0.0
        %3089 = vrot.lane.b32.xlu0 %v3039, 64
        %v3090 = vpop.permute.xlu0 %3089
        %v3092 = vrot.slane %v3090, 7
        %v3093 = vmul.f32 %v1181, %v3092
        %v3094 = vadd.f32 %v3087, %v3093
        %v3095 = vadd.f32 %v3094, %v3041
        %3097 = vrot.lane.b32.xlu0 %v3041, 64
        %v3098 = vpop.permute.xlu0 %3097
        %v3100 = vrot.slane %v3098, 1
        %v3101 = vmul.f32 %v1185, %v3100
        %v3102 = vadd.f32 %v3095, %v3101
        %v3103 = vrot.slane %v3080, 2
        %v3104 = vmul.f32 %v1189, %v3103
        %v3105 = vadd.f32 %v3102, %v3104
        %v3107 = vlaneseq
        %v3108 = vshrl.u32 %v3107, 7
        %v3109 = vsub.s32 0, %v3108
        %v3110 = vrot.slane %v2960, %v3109
        %v3112 = vadd.f32 %v3105, %v3110
        %v3113 = vtanh.pop %v3112
        %v3114 = vpack.c.bf16 %v3113, %v3113
        %v3115 = vld [vmem:[%s53] sm:$0x1]
        %v3116 = vld [vmem:[%s51] sm:$0xff]
        %v3117 = vld [vmem:[%s51 + $0x8] sm:$0xf]
        %v3118 = vld [vmem:[%s51 + $0xc] sm:$0xff]
        %v3119 = vld [vmem:[%s51 + $0x14] sm:$0xf]
        %v3120 = vld [vmem:[%s51 + $0x18] sm:$0xff]
        %v3121 = vld [vmem:[%s51 + $0x20] sm:$0xf]
        %v3122 = vld [vmem:[%s51 + $0x24] sm:$0xff]
        %v3123 = vld [vmem:[%s51 + $0x2c] sm:$0xf]
        %v3124 = vld [vmem:[%s51 + $0x30] sm:$0xff]
        %v3125 = vld [vmem:[%s51 + $0x38] sm:$0xf]
        %v3126 = vld [vmem:[%s51 + $0x3c] sm:$0xff]
        %v3127 = vld [vmem:[%s51 + $0x44] sm:$0xf]
        %v3128 = vld [vmem:[%s51 + $0x48] sm:$0xff]
        %v3129 = vld [vmem:[%s51 + $0x50] sm:$0xf]
        %v3130 = vld [vmem:[%s51 + $0x54] sm:$0xff]
        %v3131 = vld [vmem:[%s51 + $0x5c] sm:$0xf]
        %v3148 = vunpack.c.l.b16 %v3116
        %v3149 = vunpack.c.h.b16 %v3116
        %v3150 = vunpack.c.l.b16 %v3117
        %v3151 = vunpack.c.l.b16 %v3118
        %v3152 = vunpack.c.h.b16 %v3118
        %v3153 = vunpack.c.l.b16 %v3119
        %v3154 = vunpack.c.l.b16 %v3120
        %v3155 = vunpack.c.h.b16 %v3120
        %v3156 = vunpack.c.l.b16 %v3121
        %v3157 = vunpack.c.l.b16 %v3122
        %v3158 = vunpack.c.h.b16 %v3122
        %v3159 = vunpack.c.l.b16 %v3123
        %v3160 = vunpack.c.l.b16 %v3124
        %v3161 = vunpack.c.h.b16 %v3124
        %v3162 = vunpack.c.l.b16 %v3125
        %v3163 = vunpack.c.l.b16 %v3126
        %v3164 = vunpack.c.h.b16 %v3126
        %v3165 = vunpack.c.l.b16 %v3127
        %v3166 = vunpack.c.l.b16 %v3128
        %v3167 = vunpack.c.h.b16 %v3128
        %v3168 = vunpack.c.l.b16 %v3129
        %v3169 = vunpack.c.l.b16 %v3130
        %v3170 = vunpack.c.h.b16 %v3130
        %v3171 = vunpack.c.l.b16 %v3131
        %v3172 = vpack.c.b16 %v3151, %v3148
        %v3173 = vpack.c.b16 %v3152, %v3149
        %v3174 = vpack.c.b16 %v3153, %v3150
        %v3175 = vpack.c.b16 %v3157, %v3154
        %v3176 = vpack.c.b16 %v3158, %v3155
        %v3177 = vpack.c.b16 %v3159, %v3156
        %v3178 = vpack.c.b16 %v3163, %v3160
        %v3179 = vpack.c.b16 %v3164, %v3161
        %v3180 = vpack.c.b16 %v3165, %v3162
        %v3181 = vpack.c.b16 %v3169, %v3166
        %v3182 = vpack.c.b16 %v3170, %v3167
        %v3183 = vpack.c.b16 %v3171, %v3168
        %v3197 = vsel %vm1412, %v3114, 0
        %3199 = vmatprep.subr.bf16.mxu0 0
        %3200 = vmatpush1.bf16.msra.mxu0 0
        %3201 = vmatprep.subr.bf16.mxu0 0
        %3202 = vmatpush1.bf16.msra.mxu0 0
        %3203 = vmatprep.subr.bf16.mxu0 0
        %3204 = vmatpush1.bf16.msra.mxu0 0
        %3205 = vmatprep.subr.bf16.mxu0 0
        %3206 = vmatpush1.bf16.msra.mxu0 0
        %3207 = vmatprep.subr.bf16.mxu0 %v3182
        %3208 = vmatpush1.bf16.msra.mxu0 %v3181
        %3209 = vmatprep.subr.bf16.mxu0 %v3179
        %3210 = vmatpush1.bf16.msra.mxu0 %v3178
        %3211 = vmatprep.subr.bf16.mxu0 %v3176
        %3212 = vmatpush1.bf16.msra.mxu0 %v3175
        %3213 = vmatprep.subr.bf16.mxu0 %v3173
        %3214 = vmatpush1.bf16.msra.mxu0 %v3172
        %3215 = vmatprep.subr.bf16.mxu0 0
        %3216 = vmatpush2.bf16.msra.mxu0 0
        %3217 = vmatprep.subr.bf16.mxu0 0
        %3218 = vmatpush2.bf16.msra.mxu0 0
        %3219 = vmatprep.subr.bf16.mxu0 0
        %3220 = vmatpush2.bf16.msra.mxu0 0
        %3221 = vmatprep.subr.bf16.mxu0 0
        %3222 = vmatpush2.bf16.msra.mxu0 0
        %3223 = vmatprep.subr.bf16.mxu0 0
        %3224 = vmatpush2.bf16.msra.mxu0 0
        %3225 = vmatprep.subr.bf16.mxu0 0
        %3226 = vmatpush2.bf16.msra.mxu0 0
        %3227 = vmatprep.subr.bf16.mxu0 0
        %3228 = vmatpush2.bf16.msra.mxu0 0
        %3229 = vmatprep.subr.bf16.mxu0 0
        %3230 = vmatpush2.bf16.msra.mxu0 0
        %3231 = vmatprep.mubr.bf16.mxu0 0
        %3232 = vmatmul.mubr.bf16.gmra.mxu0 %v3197
        %v3233 = vpop.f32.mrf.mxu0
        %v3234 = vadd.f32 0.0, %v3233
        %v3235 = vpop.f32.mrf.mxu0
        %v3236 = vadd.f32 0.0, %v3235
        %v3237 = vpop.f32.mrf.mxu0
        %v3238 = vpop.f32.mrf.mxu0
        %3239 = vdwg.mxu0
        %3240 = vmatprep.subr.bf16.mxu0 0
        %3241 = vmatpush1.bf16.msra.mxu0 0
        %3242 = vmatprep.subr.bf16.mxu0 0
        %3243 = vmatpush1.bf16.msra.mxu0 0
        %3244 = vmatprep.subr.bf16.mxu0 0
        %3245 = vmatpush1.bf16.msra.mxu0 0
        %3246 = vmatprep.subr.bf16.mxu0 0
        %3247 = vmatpush1.bf16.msra.mxu0 0
        %3248 = vmatprep.subr.bf16.mxu0 0
        %3249 = vmatpush1.bf16.msra.mxu0 %v3183
        %3250 = vmatprep.subr.bf16.mxu0 0
        %3251 = vmatpush1.bf16.msra.mxu0 %v3180
        %3252 = vmatprep.subr.bf16.mxu0 0
        %3253 = vmatpush1.bf16.msra.mxu0 %v3177
        %3254 = vmatprep.subr.bf16.mxu0 0
        %3255 = vmatpush1.bf16.msra.mxu0 %v3174
        %3256 = vmatprep.subr.bf16.mxu0 0
        %3257 = vmatpush2.bf16.msra.mxu0 0
        %3258 = vmatprep.subr.bf16.mxu0 0
        %3259 = vmatpush2.bf16.msra.mxu0 0
        %3260 = vmatprep.subr.bf16.mxu0 0
        %3261 = vmatpush2.bf16.msra.mxu0 0
        %3262 = vmatprep.subr.bf16.mxu0 0
        %3263 = vmatpush2.bf16.msra.mxu0 0
        %3264 = vmatprep.subr.bf16.mxu0 0
        %3265 = vmatpush2.bf16.msra.mxu0 0
        %3266 = vmatprep.subr.bf16.mxu0 0
        %3267 = vmatpush2.bf16.msra.mxu0 0
        %3268 = vmatprep.subr.bf16.mxu0 0
        %3269 = vmatpush2.bf16.msra.mxu0 0
        %3270 = vmatprep.subr.bf16.mxu0 0
        %3271 = vmatpush2.bf16.msra.mxu0 0
        %3272 = vmatprep.mubr.bf16.mxu0 0
        %3273 = vmatmul.mubr.bf16.gmra.mxu0 %v3197
        %v3274 = vpop.f32.mrf.mxu0
        %v3275 = vadd.f32 0.0, %v3274
        %v3276 = vpop.f32.mrf.mxu0
        %v3277 = vpop.f32.mrf.mxu0
        %v3278 = vpop.f32.mrf.mxu0
        %3279 = vdwg.mxu0
        %v3280 = vrot.slane %v3234, 6
        %v3281 = vmul.f32 %v1177, %v3280
        %v3282 = vadd.f32 %v3281, 0.0
        %3284 = vrot.lane.b32.xlu0 %v3234, 64
        %v3285 = vpop.permute.xlu0 %3284
        %v3287 = vrot.slane %v3285, 7
        %v3288 = vmul.f32 %v1181, %v3287
        %v3289 = vadd.f32 %v3282, %v3288
        %v3290 = vadd.f32 %v3289, %v3236
        %3292 = vrot.lane.b32.xlu0 %v3236, 64
        %v3293 = vpop.permute.xlu0 %3292
        %v3295 = vrot.slane %v3293, 1
        %v3296 = vmul.f32 %v1185, %v3295
        %v3297 = vadd.f32 %v3290, %v3296
        %v3298 = vrot.slane %v3275, 2
        %v3299 = vmul.f32 %v1189, %v3298
        %v3300 = vadd.f32 %v3297, %v3299
        %v3302 = vlaneseq
        %v3303 = vshrl.u32 %v3302, 7
        %v3304 = vsub.s32 0, %v3303
        %v3305 = vrot.slane %v3115, %v3304
        %v3307 = vadd.f32 %v3300, %v3305
        %v3308 = vtanh.pop %v3307
        %v3309 = vpack.c.bf16 %v3308, %v3308
        %v3310 = vld [vmem:[%s57] sm:$0x1]
        %v3311 = vld [vmem:[%s55] sm:$0xff]
        %v3312 = vld [vmem:[%s55 + $0x8] sm:$0xf]
        %v3313 = vld [vmem:[%s55 + $0xc] sm:$0xff]
        %v3314 = vld [vmem:[%s55 + $0x14] sm:$0xf]
        %v3315 = vld [vmem:[%s55 + $0x18] sm:$0xff]
        %v3316 = vld [vmem:[%s55 + $0x20] sm:$0xf]
        %v3317 = vld [vmem:[%s55 + $0x24] sm:$0xff]
        %v3318 = vld [vmem:[%s55 + $0x2c] sm:$0xf]
        %v3319 = vld [vmem:[%s55 + $0x30] sm:$0xff]
        %v3320 = vld [vmem:[%s55 + $0x38] sm:$0xf]
        %v3321 = vld [vmem:[%s55 + $0x3c] sm:$0xff]
        %v3322 = vld [vmem:[%s55 + $0x44] sm:$0xf]
        %v3323 = vld [vmem:[%s55 + $0x48] sm:$0xff]
        %v3324 = vld [vmem:[%s55 + $0x50] sm:$0xf]
        %v3325 = vld [vmem:[%s55 + $0x54] sm:$0xff]
        %v3326 = vld [vmem:[%s55 + $0x5c] sm:$0xf]
        %v3343 = vunpack.c.l.b16 %v3311
        %v3344 = vunpack.c.h.b16 %v3311
        %v3345 = vunpack.c.l.b16 %v3312
        %v3346 = vunpack.c.l.b16 %v3313
        %v3347 = vunpack.c.h.b16 %v3313
        %v3348 = vunpack.c.l.b16 %v3314
        %v3349 = vunpack.c.l.b16 %v3315
        %v3350 = vunpack.c.h.b16 %v3315
        %v3351 = vunpack.c.l.b16 %v3316
        %v3352 = vunpack.c.l.b16 %v3317
        %v3353 = vunpack.c.h.b16 %v3317
        %v3354 = vunpack.c.l.b16 %v3318
        %v3355 = vunpack.c.l.b16 %v3319
        %v3356 = vunpack.c.h.b16 %v3319
        %v3357 = vunpack.c.l.b16 %v3320
        %v3358 = vunpack.c.l.b16 %v3321
        %v3359 = vunpack.c.h.b16 %v3321
        %v3360 = vunpack.c.l.b16 %v3322
        %v3361 = vunpack.c.l.b16 %v3323
        %v3362 = vunpack.c.h.b16 %v3323
        %v3363 = vunpack.c.l.b16 %v3324
        %v3364 = vunpack.c.l.b16 %v3325
        %v3365 = vunpack.c.h.b16 %v3325
        %v3366 = vunpack.c.l.b16 %v3326
        %v3367 = vpack.c.b16 %v3346, %v3343
        %v3368 = vpack.c.b16 %v3347, %v3344
        %v3369 = vpack.c.b16 %v3348, %v3345
        %v3370 = vpack.c.b16 %v3352, %v3349
        %v3371 = vpack.c.b16 %v3353, %v3350
        %v3372 = vpack.c.b16 %v3354, %v3351
        %v3373 = vpack.c.b16 %v3358, %v3355
        %v3374 = vpack.c.b16 %v3359, %v3356
        %v3375 = vpack.c.b16 %v3360, %v3357
        %v3376 = vpack.c.b16 %v3364, %v3361
        %v3377 = vpack.c.b16 %v3365, %v3362
        %v3378 = vpack.c.b16 %v3366, %v3363
        %v3392 = vsel %vm1412, %v3309, 0
        %3394 = vmatprep.subr.bf16.mxu0 0
        %3395 = vmatpush1.bf16.msra.mxu0 0
        %3396 = vmatprep.subr.bf16.mxu0 0
        %3397 = vmatpush1.bf16.msra.mxu0 0
        %3398 = vmatprep.subr.bf16.mxu0 0
        %3399 = vmatpush1.bf16.msra.mxu0 0
        %3400 = vmatprep.subr.bf16.mxu0 0
        %3401 = vmatpush1.bf16.msra.mxu0 0
        %3402 = vmatprep.subr.bf16.mxu0 %v3377
        %3403 = vmatpush1.bf16.msra.mxu0 %v3376
        %3404 = vmatprep.subr.bf16.mxu0 %v3374
        %3405 = vmatpush1.bf16.msra.mxu0 %v3373
        %3406 = vmatprep.subr.bf16.mxu0 %v3371
        %3407 = vmatpush1.bf16.msra.mxu0 %v3370
        %3408 = vmatprep.subr.bf16.mxu0 %v3368
        %3409 = vmatpush1.bf16.msra.mxu0 %v3367
        %3410 = vmatprep.subr.bf16.mxu0 0
        %3411 = vmatpush2.bf16.msra.mxu0 0
        %3412 = vmatprep.subr.bf16.mxu0 0
        %3413 = vmatpush2.bf16.msra.mxu0 0
        %3414 = vmatprep.subr.bf16.mxu0 0
        %3415 = vmatpush2.bf16.msra.mxu0 0
        %3416 = vmatprep.subr.bf16.mxu0 0
        %3417 = vmatpush2.bf16.msra.mxu0 0
        %3418 = vmatprep.subr.bf16.mxu0 0
        %3419 = vmatpush2.bf16.msra.mxu0 0
        %3420 = vmatprep.subr.bf16.mxu0 0
        %3421 = vmatpush2.bf16.msra.mxu0 0
        %3422 = vmatprep.subr.bf16.mxu0 0
        %3423 = vmatpush2.bf16.msra.mxu0 0
        %3424 = vmatprep.subr.bf16.mxu0 0
        %3425 = vmatpush2.bf16.msra.mxu0 0
        %3426 = vmatprep.mubr.bf16.mxu0 0
        %3427 = vmatmul.mubr.bf16.gmra.mxu0 %v3392
        %v3428 = vpop.f32.mrf.mxu0
        %v3429 = vadd.f32 0.0, %v3428
        %v3430 = vpop.f32.mrf.mxu0
        %v3431 = vadd.f32 0.0, %v3430
        %v3432 = vpop.f32.mrf.mxu0
        %v3433 = vpop.f32.mrf.mxu0
        %3434 = vdwg.mxu0
        %3435 = vmatprep.subr.bf16.mxu0 0
        %3436 = vmatpush1.bf16.msra.mxu0 0
        %3437 = vmatprep.subr.bf16.mxu0 0
        %3438 = vmatpush1.bf16.msra.mxu0 0
        %3439 = vmatprep.subr.bf16.mxu0 0
        %3440 = vmatpush1.bf16.msra.mxu0 0
        %3441 = vmatprep.subr.bf16.mxu0 0
        %3442 = vmatpush1.bf16.msra.mxu0 0
        %3443 = vmatprep.subr.bf16.mxu0 0
        %3444 = vmatpush1.bf16.msra.mxu0 %v3378
        %3445 = vmatprep.subr.bf16.mxu0 0
        %3446 = vmatpush1.bf16.msra.mxu0 %v3375
        %3447 = vmatprep.subr.bf16.mxu0 0
        %3448 = vmatpush1.bf16.msra.mxu0 %v3372
        %3449 = vmatprep.subr.bf16.mxu0 0
        %3450 = vmatpush1.bf16.msra.mxu0 %v3369
        %3451 = vmatprep.subr.bf16.mxu0 0
        %3452 = vmatpush2.bf16.msra.mxu0 0
        %3453 = vmatprep.subr.bf16.mxu0 0
        %3454 = vmatpush2.bf16.msra.mxu0 0
        %3455 = vmatprep.subr.bf16.mxu0 0
        %3456 = vmatpush2.bf16.msra.mxu0 0
        %3457 = vmatprep.subr.bf16.mxu0 0
        %3458 = vmatpush2.bf16.msra.mxu0 0
        %3459 = vmatprep.subr.bf16.mxu0 0
        %3460 = vmatpush2.bf16.msra.mxu0 0
        %3461 = vmatprep.subr.bf16.mxu0 0
        %3462 = vmatpush2.bf16.msra.mxu0 0
        %3463 = vmatprep.subr.bf16.mxu0 0
        %3464 = vmatpush2.bf16.msra.mxu0 0
        %3465 = vmatprep.subr.bf16.mxu0 0
        %3466 = vmatpush2.bf16.msra.mxu0 0
        %3467 = vmatprep.mubr.bf16.mxu0 0
        %3468 = vmatmul.mubr.bf16.gmra.mxu0 %v3392
        %v3469 = vpop.f32.mrf.mxu0
        %v3470 = vadd.f32 0.0, %v3469
        %v3471 = vpop.f32.mrf.mxu0
        %v3472 = vpop.f32.mrf.mxu0
        %v3473 = vpop.f32.mrf.mxu0
        %3474 = vdwg.mxu0
        %v3475 = vrot.slane %v3429, 6
        %v3476 = vmul.f32 %v1177, %v3475
        %v3477 = vadd.f32 %v3476, 0.0
        %3479 = vrot.lane.b32.xlu0 %v3429, 64
        %v3480 = vpop.permute.xlu0 %3479
        %v3482 = vrot.slane %v3480, 7
        %v3483 = vmul.f32 %v1181, %v3482
        %v3484 = vadd.f32 %v3477, %v3483
        %v3485 = vadd.f32 %v3484, %v3431
        %3487 = vrot.lane.b32.xlu0 %v3431, 64
        %v3488 = vpop.permute.xlu0 %3487
        %v3490 = vrot.slane %v3488, 1
        %v3491 = vmul.f32 %v1185, %v3490
        %v3492 = vadd.f32 %v3485, %v3491
        %v3493 = vrot.slane %v3470, 2
        %v3494 = vmul.f32 %v1189, %v3493
        %v3495 = vadd.f32 %v3492, %v3494
        %v3497 = vlaneseq
        %v3498 = vshrl.u32 %v3497, 7
        %v3499 = vsub.s32 0, %v3498
        %v3500 = vrot.slane %v3310, %v3499
        %v3502 = vadd.f32 %v3495, %v3500
        %v3503 = vtanh.pop %v3502
        %v3504 = vpack.c.bf16 %v3503, %v3503
        %v3505 = vld [vmem:[%s61] sm:$0x1]
        %v3506 = vld [vmem:[%s59] sm:$0xff]
        %v3507 = vld [vmem:[%s59 + $0x8] sm:$0xf]
        %v3508 = vld [vmem:[%s59 + $0xc] sm:$0xff]
        %v3509 = vld [vmem:[%s59 + $0x14] sm:$0xf]
        %v3510 = vld [vmem:[%s59 + $0x18] sm:$0xff]
        %v3511 = vld [vmem:[%s59 + $0x20] sm:$0xf]
        %v3512 = vld [vmem:[%s59 + $0x24] sm:$0xff]
        %v3513 = vld [vmem:[%s59 + $0x2c] sm:$0xf]
        %v3514 = vld [vmem:[%s59 + $0x30] sm:$0xff]
        %v3515 = vld [vmem:[%s59 + $0x38] sm:$0xf]
        %v3516 = vld [vmem:[%s59 + $0x3c] sm:$0xff]
        %v3517 = vld [vmem:[%s59 + $0x44] sm:$0xf]
        %v3518 = vld [vmem:[%s59 + $0x48] sm:$0xff]
        %v3519 = vld [vmem:[%s59 + $0x50] sm:$0xf]
        %v3520 = vld [vmem:[%s59 + $0x54] sm:$0xff]
        %v3521 = vld [vmem:[%s59 + $0x5c] sm:$0xf]
        %v3538 = vunpack.c.l.b16 %v3506
        %v3539 = vunpack.c.h.b16 %v3506
        %v3540 = vunpack.c.l.b16 %v3507
        %v3541 = vunpack.c.l.b16 %v3508
        %v3542 = vunpack.c.h.b16 %v3508
        %v3543 = vunpack.c.l.b16 %v3509
        %v3544 = vunpack.c.l.b16 %v3510
        %v3545 = vunpack.c.h.b16 %v3510
        %v3546 = vunpack.c.l.b16 %v3511
        %v3547 = vunpack.c.l.b16 %v3512
        %v3548 = vunpack.c.h.b16 %v3512
        %v3549 = vunpack.c.l.b16 %v3513
        %v3550 = vunpack.c.l.b16 %v3514
        %v3551 = vunpack.c.h.b16 %v3514
        %v3552 = vunpack.c.l.b16 %v3515
        %v3553 = vunpack.c.l.b16 %v3516
        %v3554 = vunpack.c.h.b16 %v3516
        %v3555 = vunpack.c.l.b16 %v3517
        %v3556 = vunpack.c.l.b16 %v3518
        %v3557 = vunpack.c.h.b16 %v3518
        %v3558 = vunpack.c.l.b16 %v3519
        %v3559 = vunpack.c.l.b16 %v3520
        %v3560 = vunpack.c.h.b16 %v3520
        %v3561 = vunpack.c.l.b16 %v3521
        %v3562 = vpack.c.b16 %v3541, %v3538
        %v3563 = vpack.c.b16 %v3542, %v3539
        %v3564 = vpack.c.b16 %v3543, %v3540
        %v3565 = vpack.c.b16 %v3547, %v3544
        %v3566 = vpack.c.b16 %v3548, %v3545
        %v3567 = vpack.c.b16 %v3549, %v3546
        %v3568 = vpack.c.b16 %v3553, %v3550
        %v3569 = vpack.c.b16 %v3554, %v3551
        %v3570 = vpack.c.b16 %v3555, %v3552
        %v3571 = vpack.c.b16 %v3559, %v3556
        %v3572 = vpack.c.b16 %v3560, %v3557
        %v3573 = vpack.c.b16 %v3561, %v3558
        %v3587 = vsel %vm1412, %v3504, 0
        %3589 = vmatprep.subr.bf16.mxu0 0
        %3590 = vmatpush1.bf16.msra.mxu0 0
        %3591 = vmatprep.subr.bf16.mxu0 0
        %3592 = vmatpush1.bf16.msra.mxu0 0
        %3593 = vmatprep.subr.bf16.mxu0 0
        %3594 = vmatpush1.bf16.msra.mxu0 0
        %3595 = vmatprep.subr.bf16.mxu0 0
        %3596 = vmatpush1.bf16.msra.mxu0 0
        %3597 = vmatprep.subr.bf16.mxu0 %v3572
        %3598 = vmatpush1.bf16.msra.mxu0 %v3571
        %3599 = vmatprep.subr.bf16.mxu0 %v3569
        %3600 = vmatpush1.bf16.msra.mxu0 %v3568
        %3601 = vmatprep.subr.bf16.mxu0 %v3566
        %3602 = vmatpush1.bf16.msra.mxu0 %v3565
        %3603 = vmatprep.subr.bf16.mxu0 %v3563
        %3604 = vmatpush1.bf16.msra.mxu0 %v3562
        %3605 = vmatprep.subr.bf16.mxu0 0
        %3606 = vmatpush2.bf16.msra.mxu0 0
        %3607 = vmatprep.subr.bf16.mxu0 0
        %3608 = vmatpush2.bf16.msra.mxu0 0
        %3609 = vmatprep.subr.bf16.mxu0 0
        %3610 = vmatpush2.bf16.msra.mxu0 0
        %3611 = vmatprep.subr.bf16.mxu0 0
        %3612 = vmatpush2.bf16.msra.mxu0 0
        %3613 = vmatprep.subr.bf16.mxu0 0
        %3614 = vmatpush2.bf16.msra.mxu0 0
        %3615 = vmatprep.subr.bf16.mxu0 0
        %3616 = vmatpush2.bf16.msra.mxu0 0
        %3617 = vmatprep.subr.bf16.mxu0 0
        %3618 = vmatpush2.bf16.msra.mxu0 0
        %3619 = vmatprep.subr.bf16.mxu0 0
        %3620 = vmatpush2.bf16.msra.mxu0 0
        %3621 = vmatprep.mubr.bf16.mxu0 0
        %3622 = vmatmul.mubr.bf16.gmra.mxu0 %v3587
        %v3623 = vpop.f32.mrf.mxu0
        %v3624 = vadd.f32 0.0, %v3623
        %v3625 = vpop.f32.mrf.mxu0
        %v3626 = vadd.f32 0.0, %v3625
        %v3627 = vpop.f32.mrf.mxu0
        %v3628 = vpop.f32.mrf.mxu0
        %3629 = vdwg.mxu0
        %3630 = vmatprep.subr.bf16.mxu0 0
        %3631 = vmatpush1.bf16.msra.mxu0 0
        %3632 = vmatprep.subr.bf16.mxu0 0
        %3633 = vmatpush1.bf16.msra.mxu0 0
        %3634 = vmatprep.subr.bf16.mxu0 0
        %3635 = vmatpush1.bf16.msra.mxu0 0
        %3636 = vmatprep.subr.bf16.mxu0 0
        %3637 = vmatpush1.bf16.msra.mxu0 0
        %3638 = vmatprep.subr.bf16.mxu0 0
        %3639 = vmatpush1.bf16.msra.mxu0 %v3573
        %3640 = vmatprep.subr.bf16.mxu0 0
        %3641 = vmatpush1.bf16.msra.mxu0 %v3570
        %3642 = vmatprep.subr.bf16.mxu0 0
        %3643 = vmatpush1.bf16.msra.mxu0 %v3567
        %3644 = vmatprep.subr.bf16.mxu0 0
        %3645 = vmatpush1.bf16.msra.mxu0 %v3564
        %3646 = vmatprep.subr.bf16.mxu0 0
        %3647 = vmatpush2.bf16.msra.mxu0 0
        %3648 = vmatprep.subr.bf16.mxu0 0
        %3649 = vmatpush2.bf16.msra.mxu0 0
        %3650 = vmatprep.subr.bf16.mxu0 0
        %3651 = vmatpush2.bf16.msra.mxu0 0
        %3652 = vmatprep.subr.bf16.mxu0 0
        %3653 = vmatpush2.bf16.msra.mxu0 0
        %3654 = vmatprep.subr.bf16.mxu0 0
        %3655 = vmatpush2.bf16.msra.mxu0 0
        %3656 = vmatprep.subr.bf16.mxu0 0
        %3657 = vmatpush2.bf16.msra.mxu0 0
        %3658 = vmatprep.subr.bf16.mxu0 0
        %3659 = vmatpush2.bf16.msra.mxu0 0
        %3660 = vmatprep.subr.bf16.mxu0 0
        %3661 = vmatpush2.bf16.msra.mxu0 0
        %3662 = vmatprep.mubr.bf16.mxu0 0
        %3663 = vmatmul.mubr.bf16.gmra.mxu0 %v3587
        %v3664 = vpop.f32.mrf.mxu0
        %v3665 = vadd.f32 0.0, %v3664
        %v3666 = vpop.f32.mrf.mxu0
        %v3667 = vpop.f32.mrf.mxu0
        %v3668 = vpop.f32.mrf.mxu0
        %3669 = vdwg.mxu0
        %v3670 = vrot.slane %v3624, 6
        %v3671 = vmul.f32 %v1177, %v3670
        %v3672 = vadd.f32 %v3671, 0.0
        %3674 = vrot.lane.b32.xlu0 %v3624, 64
        %v3675 = vpop.permute.xlu0 %3674
        %v3677 = vrot.slane %v3675, 7
        %v3678 = vmul.f32 %v1181, %v3677
        %v3679 = vadd.f32 %v3672, %v3678
        %v3680 = vadd.f32 %v3679, %v3626
        %3682 = vrot.lane.b32.xlu0 %v3626, 64
        %v3683 = vpop.permute.xlu0 %3682
        %v3685 = vrot.slane %v3683, 1
        %v3686 = vmul.f32 %v1185, %v3685
        %v3687 = vadd.f32 %v3680, %v3686
        %v3688 = vrot.slane %v3665, 2
        %v3689 = vmul.f32 %v1189, %v3688
        %v3690 = vadd.f32 %v3687, %v3689
        %v3692 = vlaneseq
        %v3693 = vshrl.u32 %v3692, 7
        %v3694 = vsub.s32 0, %v3693
        %v3695 = vrot.slane %v3505, %v3694
        %v3697 = vadd.f32 %v3690, %v3695
        %v3698 = vtanh.pop %v3697
        %v3699 = vpack.c.bf16 %v3698, %v3698
        %v3700 = vld [vmem:[%s65] sm:$0x1]
        %v3701 = vld [vmem:[%s63] sm:$0xff]
        %v3702 = vld [vmem:[%s63 + $0x8] sm:$0xff]
        %v3703 = vld [vmem:[%s63 + $0x10] sm:$0xff]
        %v3704 = vld [vmem:[%s63 + $0x18] sm:$0xff]
        %v3705 = vld [vmem:[%s63 + $0x20] sm:$0xff]
        %v3706 = vld [vmem:[%s63 + $0x28] sm:$0xff]
        %v3707 = vld [vmem:[%s63 + $0x30] sm:$0xff]
        %v3708 = vld [vmem:[%s63 + $0x38] sm:$0xff]
        %v3717 = vunpack.c.l.b16 %v3701
        %v3718 = vunpack.c.h.b16 %v3701
        %v3719 = vunpack.c.l.b16 %v3702
        %v3720 = vunpack.c.h.b16 %v3702
        %v3721 = vunpack.c.l.b16 %v3703
        %v3722 = vunpack.c.h.b16 %v3703
        %v3723 = vunpack.c.l.b16 %v3704
        %v3724 = vunpack.c.h.b16 %v3704
        %v3725 = vunpack.c.l.b16 %v3705
        %v3726 = vunpack.c.h.b16 %v3705
        %v3727 = vunpack.c.l.b16 %v3706
        %v3728 = vunpack.c.h.b16 %v3706
        %v3729 = vunpack.c.l.b16 %v3707
        %v3730 = vunpack.c.h.b16 %v3707
        %v3731 = vunpack.c.l.b16 %v3708
        %v3732 = vunpack.c.h.b16 %v3708
        %v3733 = vpack.c.b16 %v3719, %v3717
        %v3734 = vpack.c.b16 %v3720, %v3718
        %v3735 = vpack.c.b16 %v3723, %v3721
        %v3736 = vpack.c.b16 %v3724, %v3722
        %v3737 = vpack.c.b16 %v3727, %v3725
        %v3738 = vpack.c.b16 %v3728, %v3726
        %v3739 = vpack.c.b16 %v3731, %v3729
        %v3740 = vpack.c.b16 %v3732, %v3730
        %v3750 = vsel %vm1412, %v3699, 0
        %3752 = vmatprep.subr.bf16.mxu0 0
        %3753 = vmatpush1.bf16.msra.mxu0 0
        %3754 = vmatprep.subr.bf16.mxu0 0
        %3755 = vmatpush1.bf16.msra.mxu0 0
        %3756 = vmatprep.subr.bf16.mxu0 0
        %3757 = vmatpush1.bf16.msra.mxu0 0
        %3758 = vmatprep.subr.bf16.mxu0 0
        %3759 = vmatpush1.bf16.msra.mxu0 0
        %3760 = vmatprep.subr.bf16.mxu0 %v3740
        %3761 = vmatpush1.bf16.msra.mxu0 %v3739
        %3762 = vmatprep.subr.bf16.mxu0 %v3738
        %3763 = vmatpush1.bf16.msra.mxu0 %v3737
        %3764 = vmatprep.subr.bf16.mxu0 %v3736
        %3765 = vmatpush1.bf16.msra.mxu0 %v3735
        %3766 = vmatprep.subr.bf16.mxu0 %v3734
        %3767 = vmatpush1.bf16.msra.mxu0 %v3733
        %3768 = vmatprep.subr.bf16.mxu0 0
        %3769 = vmatpush2.bf16.msra.mxu0 0
        %3770 = vmatprep.subr.bf16.mxu0 0
        %3771 = vmatpush2.bf16.msra.mxu0 0
        %3772 = vmatprep.subr.bf16.mxu0 0
        %3773 = vmatpush2.bf16.msra.mxu0 0
        %3774 = vmatprep.subr.bf16.mxu0 0
        %3775 = vmatpush2.bf16.msra.mxu0 0
        %3776 = vmatprep.subr.bf16.mxu0 0
        %3777 = vmatpush2.bf16.msra.mxu0 0
        %3778 = vmatprep.subr.bf16.mxu0 0
        %3779 = vmatpush2.bf16.msra.mxu0 0
        %3780 = vmatprep.subr.bf16.mxu0 0
        %3781 = vmatpush2.bf16.msra.mxu0 0
        %3782 = vmatprep.subr.bf16.mxu0 0
        %3783 = vmatpush2.bf16.msra.mxu0 0
        %3784 = vmatprep.mubr.bf16.mxu0 0
        %3785 = vmatmul.mubr.bf16.gmra.mxu0 %v3750
        %v3786 = vpop.f32.mrf.mxu0
        %v3787 = vadd.f32 0.0, %v3786
        %v3788 = vpop.f32.mrf.mxu0
        %v3789 = vadd.f32 0.0, %v3788
        %v3790 = vpop.f32.mrf.mxu0
        %v3791 = vpop.f32.mrf.mxu0
        %3792 = vdwg.mxu0
        %v3793 = vrot.slane %v3787, 6
        %v3794 = vmul.f32 %v1177, %v3793
        %v3795 = vadd.f32 %v3794, 0.0
        %3797 = vrot.lane.b32.xlu0 %v3787, 96
        %v3798 = vpop.permute.xlu0 %3797
        %v3800 = vrot.slane %v3798, 7
        %v3801 = vmul.f32 %v1181, %v3800
        %v3802 = vadd.f32 %v3795, %v3801
        %3803 = vrot.lane.b32.xlu0 %v3787, 64
        %v3804 = vpop.permute.xlu0 %3803
        %v3806 = vadd.f32 %v3802, %v3804
        %3807 = vrot.lane.b32.xlu0 %v3787, 32
        %v3808 = vpop.permute.xlu0 %3807
        %v3810 = vrot.slane %v3808, 1
        %v3811 = vmul.f32 %v1185, %v3810
        %v3812 = vadd.f32 %v3806, %v3811
        %v3813 = vrot.slane %v3789, 2
        %v3814 = vmul.f32 %v1189, %v3813
        %v3815 = vadd.f32 %v3812, %v3814
        %v3817 = vlaneseq
        %v3818 = vshrl.u32 %v3817, 7
        %v3819 = vsub.s32 0, %v3818
        %v3820 = vrot.slane %v3700, %v3819
        %v3822 = vadd.f32 %v3815, %v3820
        %v3823 = vadd.f32 %v3822, %v2953
        %3824 = vst.msk [vmem:[%s1104] sm:$0xff] %vm1218, %v3823
        %s3825 = sand.u32 %s792, 1
        %s3826 = scalar_lea.sflag [#allocation5], %s3825
        %s3827 = sand.u32 %s792, 1
        %s3828 = smul.addr %s3827, 8
        %s3829 = scalar_lea.vmem [#allocation4], %s3828
        %s3830 = sand.u32 %s818, 1
        %s3831 = scalar_lea.sflag [#allocation7], %s3830
        %s3832 = sand.u32 %s818, 1
        %s3833 = smul.addr %s3832, 8
        %s3834 = scalar_lea.vmem [#allocation6], %s3833
        %p3835 = scmp.lt.s32.totalorder %s97, 1
        %s3836 = scalar_select %p3835, %s97, 1
        %s3837 = scalar_lea.vmem %s71, %s3836
        %p3838 = scmp.lt.s32.totalorder %s97, 1
        %s3839 = scalar_select %p3838, %s97, 1
        %s3840 = scalar_lea.vmem %s73, %s3839
        // Predicated region
        $region149: #{speech_decompose_forward.1} parent=147 // pred_check
          %p3841 = pneg %p802
        $region150: #{speech_decompose_forward.1} parent=147 // pred_check_branch
          %3843 = sbr.rel (%p3841) target = $region152
        $region151: #{speech_decompose_forward.1} parent=147 // pred_region
          %s3845 = ssub.s32 128, 128
          %3846 = vsyncadd %s3826, %s3845
          %s3847 = smul.addr %s97, 128
          %s3848 = scalar_lea.hbm %s67, %s3847
          %s3850 = sshll.u32 %s3829, 4
          %s3851 = int_to_ptr.vmem [resolvable:$true] %s3850
          %3853 = dma.vmem_to_hbm [thread:$0]  %s3851, 128, %s3848, %s3826
        $region152: #{speech_decompose_forward.1} parent=147 // pred_fallthru
          _
        // Predicated region
        $region153: #{speech_decompose_forward.1} parent=147 // pred_check
          %p3854 = pneg %p828
        $region154: #{speech_decompose_forward.1} parent=147 // pred_check_branch
          %3856 = sbr.rel (%p3854) target = $region156
        $region155: #{speech_decompose_forward.1} parent=147 // pred_region
          %s3858 = ssub.s32 128, 128
          %3859 = vsyncadd %s3831, %s3858
          %s3860 = smul.addr %s97, 128
          %s3861 = scalar_lea.hbm %s69, %s3860
          %s3863 = sshll.u32 %s3834, 4
          %s3864 = int_to_ptr.vmem [resolvable:$true] %s3863
          %3866 = dma.vmem_to_hbm [thread:$0]  %s3864, 128, %s3861, %s3831
        $region156: #{speech_decompose_forward.1} parent=147 // pred_fallthru
          _
        // Predicated region
        $region157: #{speech_decompose_forward.1} parent=147 // pred_check
          %p3867 = pneg %p854
        $region158: #{speech_decompose_forward.1} parent=147 // pred_check_branch
          %3869 = sbr.rel (%p3867) target = $region160
        $region159: #{speech_decompose_forward.1} parent=147 // pred_region
          _
        $region160: #{speech_decompose_forward.1} parent=147 // pred_fallthru
          _
        // Predicated region
        $region161: #{speech_decompose_forward.1} parent=147 // pred_check
          %p3870 = pneg %p880
        $region162: #{speech_decompose_forward.1} parent=147 // pred_check_branch
          %3872 = sbr.rel (%p3870) target = $region164
        $region163: #{speech_decompose_forward.1} parent=147 // pred_region
          _
        $region164: #{speech_decompose_forward.1} parent=147 // pred_fallthru
          _
      $region148: #{speech_decompose_forward.1} parent=5 // pred_fallthru
        _
      %p3873 = scmp.le.s32.totalorder 2, %s92
      // Predicated region
      $region165: #{speech_decompose_forward.1} parent=5 // pred_check
        %p3874 = pneg %p3873
      $region166: #{speech_decompose_forward.1} parent=5 // pred_check_branch
        %3876 = sbr.rel (%p3874) target = $region168
      $region167: #{speech_decompose_forward.1} parent=5 // pred_region
        %s3877 = ssub.s32 %s92, 2
        // Predicated region
        $region169: #{speech_decompose_forward.1} parent=167 // pred_check
          %p3878 = pneg %p808
        $region170: #{speech_decompose_forward.1} parent=167 // pred_check_branch
          %3880 = sbr.rel (%p3878) target = $region172
        $region171: #{speech_decompose_forward.1} parent=167 // pred_region
          %s3881 = sand.u32 %s793, 1
          %s3882 = scalar_lea.sflag [#allocation5], %s3881
          %s3883 = sand.u32 %s793, 1
          %s3884 = smul.addr %s3883, 8
          %s3885 = scalar_lea.vmem [#allocation4], %s3884
          %3886 = dma.done %s3882, 128
        $region172: #{speech_decompose_forward.1} parent=167 // pred_fallthru
          _
        // Predicated region
        $region173: #{speech_decompose_forward.1} parent=167 // pred_check
          %p3887 = pneg %p834
        $region174: #{speech_decompose_forward.1} parent=167 // pred_check_branch
          %3889 = sbr.rel (%p3887) target = $region176
        $region175: #{speech_decompose_forward.1} parent=167 // pred_region
          %s3890 = sand.u32 %s819, 1
          %s3891 = scalar_lea.sflag [#allocation7], %s3890
          %s3892 = sand.u32 %s819, 1
          %s3893 = smul.addr %s3892, 8
          %s3894 = scalar_lea.vmem [#allocation6], %s3893
          %3895 = dma.done %s3891, 128
        $region176: #{speech_decompose_forward.1} parent=167 // pred_fallthru
          _
        // Predicated region
        $region177: #{speech_decompose_forward.1} parent=167 // pred_check
          %p3896 = pneg %p860
        $region178: #{speech_decompose_forward.1} parent=167 // pred_check_branch
          %3898 = sbr.rel (%p3896) target = $region180
        $region179: #{speech_decompose_forward.1} parent=167 // pred_region
          %p3899 = scmp.lt.s32.totalorder %s98, 1
          %s3900 = scalar_select %p3899, %s98, 1
          %s3901 = scalar_lea.vmem %s71, %s3900
        $region180: #{speech_decompose_forward.1} parent=167 // pred_fallthru
          _
        // Predicated region
        $region181: #{speech_decompose_forward.1} parent=167 // pred_check
          %p3902 = pneg %p886
        $region182: #{speech_decompose_forward.1} parent=167 // pred_check_branch
          %3904 = sbr.rel (%p3902) target = $region184
        $region183: #{speech_decompose_forward.1} parent=167 // pred_region
          %p3905 = scmp.lt.s32.totalorder %s98, 1
          %s3906 = scalar_select %p3905, %s98, 1
          %s3907 = scalar_lea.vmem %s73, %s3906
        $region184: #{speech_decompose_forward.1} parent=167 // pred_fallthru
          _
      $region168: #{speech_decompose_forward.1} parent=5 // pred_fallthru
        _
    $region6: #{speech_decompose_forward.1} parent=1 // loop_footer
      %s96 = sadd.s32 1, %s92
    $region7: #{speech_decompose_forward.1} parent=1 // loop_footer_branch
      %91 = sbr.rel target = $region3
    $region8: #{speech_decompose_forward.1} parent=1 // loop_exit
      _
    %3908 = vsyncpa [#allocation5], 1
    %s3909 = scalar_lea.sflag [#allocation5], 1
    %3910 = vsyncpa %s3909, 1
    %3911 = vsyncpa [#allocation7], 1
    %s3912 = scalar_lea.sflag [#allocation7], 1
    %3913 = vsyncpa %s3912, 1

</llo_original>
